<compile_context>
chip_gen: v7x
topology: tpu7x:2x2x1
jax: 0.10.0
libtpu: 0.0.40
codegen_flags: <defaults>
</compile_context>

<pallas_src>
import functools

import numpy as np
import jax
import jax.numpy as jnp
from jax import lax
from jax.experimental import pallas as pl
from jax.experimental.pallas import tpu as pltpu

BT = 8   # batch elements per grid step (keeps output blocks (8, 128)-aligned)


def _pad128(n):
    return ((int(n) + 127) // 128) * 128


# ----------------------------- in-kernel helpers -----------------------------

def _avg_pool_rows(acc, Bt, M):
    """Per-batch mean over the M pixel rows of each batch element, computed as
    one MXU dot with an iota-generated [Bt, Bt*M] averaging matrix (the MXU is
    idle after the conv dot; avoids XLU reductions / sublane concatenations)."""
    BtM = Bt * M
    rows = lax.broadcasted_iota(jnp.int32, (Bt, BtM), 0)
    cols = lax.broadcasted_iota(jnp.int32, (Bt, BtM), 1)
    sel = jnp.logical_and(cols >= rows * M, cols < (rows + 1) * M)
    pool_mat = jnp.where(sel, 1.0 / M, 0.0).astype(jnp.float32)
    return jnp.dot(pool_mat, acc, preferred_element_type=jnp.float32)   # [Bt, OCP]


# ----------------------------- fused kernels -----------------------------

def _calib_kernel(p_ref, cw_ref, cb_ref, fw_ref, fb_ref,
                  out_ref, pmin_ref, pmax_ref, *, Bt, M, B_actual):
    """Float path: conv (single stacked-K MXU dot) -> bias + ReLU
       -> pool-observer per-channel min/max (padded batch rows masked out)
       -> per-batch avg pool (MXU) -> fc."""
    acc = jnp.dot(p_ref[...], cw_ref[...], preferred_element_type=jnp.float32)
    acc = jnp.maximum(acc + cb_ref[...], 0.0)                 # conv bias + ReLU

    # Pool-observer stats: mask rows belonging to zero-padded batch elements.
    # Padded output channels are handled on the host side by slicing [:OC].
    BtM = Bt * M
    OCP = acc.shape[1]
    ridx = lax.broadcasted_iota(jnp.int32, (BtM, OCP), 0)
    valid_row = (pl.program_id(0) * BtM + ridx) < (B_actual * M)
    lo = jnp.where(valid_row, acc, jnp.inf)
    hi = jnp.where(valid_row, acc, -jnp.inf)
    pmin_ref[0] = jnp.broadcast_to(jnp.min(lo, axis=0, keepdims=True), (8, OCP))
    pmax_ref[0] = jnp.broadcast_to(jnp.max(hi, axis=0, keepdims=True), (8, OCP))

    pooled = _avg_pool_rows(acc, Bt, M)                        # [Bt, OCP]
    out_ref[...] = jnp.dot(pooled, fw_ref[...],
                           preferred_element_type=jnp.float32) + fb_ref[...]


def _quant_kernel(p_ref, cw_ref, cb_ref, fw_ref, fb_ref, out_ref, *, Bt, M,
                  p_s, p_inv_s, p_zp, p_qmin, p_qmax, out_s, out_zp):
    """Quantized path (input already quantized + im2col'd in the same jit):
       conv with bf16 quantized weights (exact for int8-range integers)
       -> bias + ReLU on quantized-domain values (as in the original module)
       -> TempDequantizer: dequant fused into the pooled mean -> requant (int16)
       -> fc with quantized weights (f32 operands: lhs is int16-range)
       -> dequantize with output stats."""
    acc = jnp.dot(p_ref[...], cw_ref[...], preferred_element_type=jnp.float32)
    acc = jnp.maximum(acc + cb_ref[...], 0.0)
    pooled_q = _avg_pool_rows(acc, Bt, M)                      # [Bt, OCP]
    # TODO(synk): TempDequantizer source not provided; modeled as
    # dequant(pool_stats) -> AdaptiveAvgPool2d((1,1)) -> requantize to int16 range.
    pooled_d = (pooled_q - p_zp) * p_s                         # dequant fused into mean
    pq = jnp.clip(jnp.round(pooled_d * p_inv_s) + p_zp, p_qmin, p_qmax)
    logits_q = jnp.dot(pq, fw_ref[...],
                       preferred_element_type=jnp.float32) + fb_ref[...]
    out_ref[...] = (logits_q - out_zp) * out_s


# ----------------------------- pallas_call wrappers -----------------------------

def _calibration_call(patches, cw, cb, fw, fb, *, Bt, M, OCP, NCP, B_actual):
    BPM, KP = patches.shape
    n_steps = BPM // (Bt * M)
    kern = functools.partial(_calib_kernel, Bt=Bt, M=M, B_actual=B_actual)
    return pl.pallas_call(
        kern,
        grid=(n_steps,),
        in_specs=[
            pl.BlockSpec((Bt * M, KP), lambda b: (b, 0)),
            pl.BlockSpec((KP, OCP), lambda b: (0, 0)),
            pl.BlockSpec((1, OCP), lambda b: (0, 0)),
            pl.BlockSpec((OCP, NCP), lambda b: (0, 0)),
            pl.BlockSpec((1, NCP), lambda b: (0, 0)),
        ],
        out_specs=(
            pl.BlockSpec((Bt, NCP), lambda b: (b, 0)),
            pl.BlockSpec((1, 8, OCP), lambda b: (b, 0, 0)),
            pl.BlockSpec((1, 8, OCP), lambda b: (b, 0, 0)),
        ),
        out_shape=(
            jax.ShapeDtypeStruct((n_steps * Bt, NCP), jnp.float32),
            jax.ShapeDtypeStruct((n_steps, 8, OCP), jnp.float32),
            jax.ShapeDtypeStruct((n_steps, 8, OCP), jnp.float32),
        ),
        compiler_params=pltpu.CompilerParams(dimension_semantics=("parallel",)),
    )(patches, cw, cb, fw, fb)


def _quantized_call(patches, cw, cb, fw, fb, *, Bt, M, OCP, NCP,
                    p_s, p_zp, p_qmin, p_qmax, out_s, out_zp):
    BPM, KP = patches.shape
    n_steps = BPM // (Bt * M)
    kern = functools.partial(
        _quant_kernel, Bt=Bt, M=M,
        p_s=float(p_s), p_inv_s=float(1.0 / p_s), p_zp=float(p_zp),
        p_qmin=float(p_qmin), p_qmax=float(p_qmax),
        out_s=float(out_s), out_zp=float(out_zp))
    return pl.pallas_call(
        kern,
        grid=(n_steps,),
        in_specs=[
            pl.BlockSpec((Bt * M, KP), lambda b: (b, 0)),
            pl.BlockSpec((KP, OCP), lambda b: (0, 0)),
            pl.BlockSpec((1, OCP), lambda b: (0, 0)),
            pl.BlockSpec((OCP, NCP), lambda b: (0, 0)),
            pl.BlockSpec((1, NCP), lambda b: (0, 0)),
        ],
        out_specs=pl.BlockSpec((Bt, NCP), lambda b: (b, 0)),
        out_shape=jax.ShapeDtypeStruct((n_steps * Bt, NCP), jnp.float32),
        compiler_params=pltpu.CompilerParams(dimension_semantics=("parallel",)),
    )(patches, cw, cb, fw, fb)


# ----------------------------- host-side (jit-fused) plumbing -----------------------------

def _im2col_patches(x_nchw, Bt, KP):
    """NCHW -> zero-padded 3x3 'same' patch matrix [B_pad*H*W, KP] (lane-dense).
    Runs inside the same jit as the pallas_call, so no extra HBM round trips."""
    B, C, H, W = x_nchw.shape
    B_pad = ((B + Bt - 1) // Bt) * Bt
    xn = jnp.transpose(x_nchw, (0, 2, 3, 1))                  # NHWC
    xp = jnp.pad(xn, ((0, 0), (1, 1), (1, 1), (0, 0)))        # spatial zero padding
    cols = [xp[:, dh:dh + H, dw:dw + W, :] for dh in range(3) for dw in range(3)]
    p = jnp.concatenate(cols, axis=-1).reshape(B, H * W, 9 * C)
    p = jnp.pad(p, ((0, B_pad - B), (0, 0), (0, KP - 9 * C)))
    return p.reshape(B_pad * H * W, KP)


def _stack_conv_weight(conv_w, KP, OCP, dtype):
    """[OC, C, 3, 3] -> stacked [KP, OCP]; row = (dh*3+dw)*C + c (matches im2col)."""
    OC, C, K, _ = conv_w.shape
    w = jnp.transpose(conv_w, (2, 3, 1, 0)).reshape(K * K * C, OC)
    return jnp.pad(w, ((0, KP - K * K * C), (0, OCP - OC))).astype(dtype)


def _pad_row(v, P):
    n = v.shape[0]
    return jnp.pad(v.reshape(1, n), ((0, 0), (0, P - n))).astype(jnp.float32)


def _pad_fc_weight(fc_w, OCP, NCP):
    NC, OC = fc_w.shape
    return jnp.pad(fc_w.T, ((0, OCP - OC), (0, NCP - NC))).astype(jnp.float32)


def _qparams(min_val, max_val, qmin, qmax):
    """MinMax-observer-style per-tensor affine qparams."""
    min_val = min(float(min_val), 0.0)
    max_val = max(float(max_val), 0.0)
    scale = max((max_val - min_val) / float(qmax - qmin), 1e-8)
    zp = int(round(qmin - min_val / scale))
    zp = max(qmin, min(qmax, zp))
    return scale, float(zp)


class MinMaxObserver:
    """Per-tensor MinMax observer. min/max are device scalars, updated inside
    the jitted forward — no host sync until calculate_qparams()."""

    def __init__(self, quant_min=-128, quant_max=127):
        self.quant_min, self.quant_max = quant_min, quant_max
        self.min_val = jnp.array(jnp.inf, jnp.float32)
        self.max_val = jnp.array(-jnp.inf, jnp.float32)

    def calculate_qparams(self):
        return _qparams(self.min_val, self.max_val, self.quant_min, self.quant_max)


class PallasModelQuantizer:
    """JAX/Pallas port of ModelQuantizer.forward (calibration + quantized modes)."""

    def __init__(self, conv_w, conv_b, fc_w, fc_b, num_bits=8, batch_tile=BT):
        self.fp = {"conv_w": conv_w, "conv_b": conv_b, "fc_w": fc_w, "fc_b": fc_b}
        self.num_bits = num_bits
        self.calibration = True
        self.calibration_dict = {}
        self.Bt = batch_tile
        self.OC, self.C = int(conv_w.shape[0]), int(conv_w.shape[1])
        self.NC = int(fc_w.shape[0])
        self.KP = _pad128(9 * self.C)
        self.OCP = _pad128(self.OC)
        self.NCP = _pad128(self.NC)

        self.input_observer = MinMaxObserver(-128, 127)
        self.output_observer = MinMaxObserver(-128, 127)
        # TempDequantizer(observer, AdaptiveAvgPool2d((1,1)), dtype=int16)
        self.pool_observer = MinMaxObserver(-32768, 32767)

        # float weights, matmul-ready (zero padding never contributes)
        self.cw_f = _stack_conv_weight(conv_w, self.KP, self.OCP, jnp.float32)
        self.cb_f = _pad_row(conv_b, self.OCP)
        self.fw_f = _pad_fc_weight(fc_w, self.OCP, self.NCP)
        self.fb_f = _pad_row(fc_b, self.NCP)

        self._calib_fwd = jax.jit(self._make_calib_fwd())
        self._quant_fwd = None

    # ------------------------------ calibration forward ------------------------------
    def _make_calib_fwd(self):
        Bt, OC, NC, OCP, NCP, KP = self.Bt, self.OC, self.NC, self.OCP, self.NCP, self.KP

        def fwd(x, cw, cb, fw, fb, in_mn, in_mx, out_mn, out_mx, pl_mn, pl_mx):
            B, C, H, W = x.shape
            patches = _im2col_patches(x, Bt, KP)
            out, pmin, pmax = _calibration_call(
                patches, cw, cb, fw, fb,
                Bt=Bt, M=H * W, OCP=OCP, NCP=NCP, B_actual=B)
            logits = out[:B, :NC]
            # observer updates stay on device (no host sync per forward)
            in_mn = jnp.minimum(in_mn, jnp.min(x))
            in_mx = jnp.maximum(in_mx, jnp.max(x))
            pl_mn = jnp.minimum(pl_mn, jnp.min(pmin[:, 0, :OC]))   # mask padded OC lanes
            pl_mx = jnp.maximum(pl_mx, jnp.max(pmax[:, 0, :OC]))
            out_mn = jnp.minimum(out_mn, jnp.min(logits))
            out_mx = jnp.maximum(out_mx, jnp.max(logits))
            return logits, (in_mn, in_mx, out_mn, out_mx, pl_mn, pl_mx)

        return fwd

    # ------------------------------ calibration / quantize ------------------------------
    def calibrate(self):
        qmin = -(2 ** (self.num_bits - 1))
        qmax = 2 ** (self.num_bits - 1) - 1
        for name, p in self.fp.items():
            s, z = _qparams(jnp.min(p), jnp.max(p), qmin, qmax)
            self.calibration_dict[name] = (s, z, qmin, qmax)

    def quantize(self):
        def qz(p, stats):
            s, z, qmn, qmx = stats
            return jnp.clip(jnp.round(p * (1.0 / s)) + z, qmn, qmx).astype(jnp.float32)

        qw = {n: qz(p, self.calibration_dict[n]) for n, p in self.fp.items()}
        # quantized values are int8-range integers -> exact in bf16 (MXU-native)
        self.cw_q = _stack_conv_weight(qw["conv_w"], self.KP, self.OCP, jnp.bfloat16)
        self.cb_q = _pad_row(qw["conv_b"], self.OCP)
        self.fw_q = _pad_fc_weight(qw["fc_w"], self.OCP, self.NCP)
        self.fb_q = _pad_row(qw["fc_b"], self.NCP)
        self.calibration = False

        in_s, in_z = self.input_observer.calculate_qparams()
        out_s, out_z = self.output_observer.calculate_qparams()
        p_s, p_z = self.pool_observer.calculate_qparams()
        in_qmn, in_qmx = self.input_observer.quant_min, self.input_observer.quant_max
        p_qmn, p_qmx = self.pool_observer.quant_min, self.pool_observer.quant_max

        Bt, NC, OCP, NCP, KP = self.Bt, self.NC, self.OCP, self.NCP, self.KP
        in_inv_s = 1.0 / in_s

        def fwd(x, cw, cb, fw, fb):
            B, C, H, W = x.shape
            # quantize the input with input_stats, then zero-pad/im2col so conv
            # padding stays exactly 0 in the quantized domain (as in the original)
            q = jnp.clip(jnp.round(x * in_inv_s) + in_z, float(in_qmn), float(in_qmx))
            patches = _im2col_patches(q, Bt, KP).astype(jnp.bfloat16)
            out = _quantized_call(
                patches, cw, cb, fw, fb,
                Bt=Bt, M=H * W, OCP=OCP, NCP=NCP,
                p_s=p_s, p_zp=p_z, p_qmin=p_qmn, p_qmax=p_qmx,
                out_s=out_s, out_zp=out_z)
            return out[:B, :NC]

        self._quant_fwd = jax.jit(fwd)

    # --------------------------------- forward ---------------------------------
    def __call__(self, x):
        if self.calibration:
            logits, stats = self._calib_fwd(
                x, self.cw_f, self.cb_f, self.fw_f, self.fb_f,
                self.input_observer.min_val, self.input_observer.max_val,
                self.output_observer.min_val, self.output_observer.max_val,
                self.pool_observer.min_val, self.pool_observer.max_val)
            (self.input_observer.min_val, self.input_observer.max_val,
             self.output_observer.min_val, self.output_observer.max_val,
             self.pool_observer.min_val, self.pool_observer.max_val) = stats
            return logits
        return self._quant_fwd(x, self.cw_q, self.cb_q, self.fw_q, self.fb_q)


# ----------------------------------- main ------------------------------------

if __name__ == "__main__":
    key = jax.random.PRNGKey(0)
    k1, k2, k3, k4, k5 = jax.random.split(key, 5)

    B, C_in, H, W = 2, 4, 16, 16
    C_out, K, NUM_CLASSES = 8, 3, 10

    conv_w = jax.random.normal(k1, (C_out, C_in, K, K), jnp.float32) * 0.1
    conv_b = jax.random.normal(k2, (C_out,), jnp.float32) * 0.1
    fc_w = jax.random.normal(k3, (NUM_CLASSES, C_out), jnp.float32) * 0.1
    fc_b = jax.random.normal(k4, (NUM_CLASSES,), jnp.float32) * 0.1
    x = jax.random.normal(k5, (B, C_in, H, W), jnp.float32)

    mq = PallasModelQuantizer(conv_w, conv_b, fc_w, fc_b, num_bits=8)

    # Calibration (float) pass.
    y_cal = mq(x)
    jax.block_until_ready(y_cal)
    assert y_cal.shape == (B, NUM_CLASSES)

    # Cross-check the float path against a NumPy reference (conv/relu/pool/fc).
    xn = np.asarray(x, np.float64)
    wn = np.asarray(conv_w, np.float64)
    bn = np.asarray(conv_b, np.float64)
    fwn = np.asarray(fc_w, np.float64)
    fbn = np.asarray(fc_b, np.float64)
    xp = np.pad(xn, ((0, 0), (0, 0), (1, 1), (1, 1)))
    conv_ref = np.zeros((B, C_out, H, W))
    for dh in range(K):
        for dw in range(K):
            conv_ref += np.einsum("bchw,oc->bohw",
                                  xp[:, :, dh:dh + H, dw:dw + W], wn[:, :, dh, dw])
    conv_ref = np.maximum(conv_ref + bn[None, :, None, None], 0.0)
    y_ref = conv_ref.mean(axis=(2, 3)) @ fwn.T + fbn
    assert np.allclose(np.asarray(y_cal, np.float64), y_ref, atol=5e-3, rtol=5e-3), \
        float(np.abs(np.asarray(y_cal, np.float64) - y_ref).max())

    # Calibrate + quantize, then run the quantized (dequantized_forward) path.
    mq.calibrate()
    mq.quantize()
    y_q = mq(x)
    jax.block_until_ready(y_q)

    assert y_q.shape == (B, NUM_CLASSES)
    assert bool(jnp.all(jnp.isfinite(y_q)))
    print("KERNEL_OK")
</pallas_src>

<mosaic_0001>
module attributes {stable_mosaic.version = 11 : i64} {
  func.func @_calib_kernel(%arg0: i32, %arg1: memref<2048x128xf32, #tpu.memory_space<vmem>>, %arg2: memref<128x128xf32, #tpu.memory_space<vmem>>, %arg3: memref<1x128xf32, #tpu.memory_space<vmem>>, %arg4: memref<128x128xf32, #tpu.memory_space<vmem>>, %arg5: memref<1x128xf32, #tpu.memory_space<vmem>>, %arg6: memref<8x128xf32, #tpu.memory_space<vmem>>, %arg7: memref<1x8x128xf32, #tpu.memory_space<vmem>>, %arg8: memref<1x8x128xf32, #tpu.memory_space<vmem>>) attributes {dimension_semantics = [#tpu.dimension_semantics<parallel>], iteration_bounds = array<i64: 1>, scalar_prefetch = 0 : i64, scratch_operands = 0 : i64, tpu.core_type = #tpu.core_type<tc>, window_params = [{transform_indices = @transform_0, window_bounds = array<i64: 2048, 128>}, {pipeline_mode = #tpu.pipeline_mode<synchronous>, transform_indices = @transform_1, window_bounds = array<i64: 128, 128>}, {pipeline_mode = #tpu.pipeline_mode<synchronous>, transform_indices = @transform_2, window_bounds = array<i64: 1, 128>}, {pipeline_mode = #tpu.pipeline_mode<synchronous>, transform_indices = @transform_3, window_bounds = array<i64: 128, 128>}, {pipeline_mode = #tpu.pipeline_mode<synchronous>, transform_indices = @transform_4, window_bounds = array<i64: 1, 128>}, {transform_indices = @transform_5, window_bounds = array<i64: 8, 128>}, {transform_indices = @transform_6, window_bounds = array<i64: 1, 8, 128>}, {transform_indices = @transform_7, window_bounds = array<i64: 1, 8, 128>}]} {
    %c0 = arith.constant 0 : index
    %c0_0 = arith.constant 0 : index
    %0 = vector.load %arg1[%c0, %c0_0] : memref<2048x128xf32, #tpu.memory_space<vmem>>, vector<2048x128xf32>
    %c0_1 = arith.constant 0 : index
    %c0_2 = arith.constant 0 : index
    %1 = vector.load %arg2[%c0_1, %c0_2] : memref<128x128xf32, #tpu.memory_space<vmem>>, vector<128x128xf32>
    %cst = arith.constant dense<0.000000e+00> : vector<2048x128xf32>
    %2 = tpu.matmul %0, %1, %cst {dimension_numbers = #tpu.dot_dimension_numbers<[1], [0], [0], [1], [0, 0, 1, 1], [], []>} : vector<2048x128xf32>, vector<128x128xf32>, vector<2048x128xf32> -> vector<2048x128xf32>
    %c0_3 = arith.constant 0 : index
    %c0_4 = arith.constant 0 : index
    %3 = vector.load %arg3[%c0_3, %c0_4] : memref<1x128xf32, #tpu.memory_space<vmem>>, vector<1x128xf32>
    %4 = vector.broadcast %3 : vector<1x128xf32> to vector<2048x128xf32>
    %5 = arith.addf %2, %4 : vector<2048x128xf32>
    %cst_5 = arith.constant 0.000000e+00 : f32
    %6 = vector.broadcast %cst_5 : f32 to vector<2048x128xf32>
    %7 = arith.maximumf %5, %6 : vector<2048x128xf32>
    %8 = tpu.iota {dimensions = array<i32: 0>} : vector<2048x128xi32>
    %c2048_i32 = arith.constant 2048 : i32
    %9 = arith.muli %arg0, %c2048_i32 : i32
    %10 = vector.broadcast %9 : i32 to vector<2048x128xi32>
    %11 = arith.addi %10, %8 : vector<2048x128xi32>
    %c512_i32 = arith.constant 512 : i32
    %12 = vector.broadcast %c512_i32 : i32 to vector<2048x128xi32>
    %13 = arith.cmpi slt, %11, %12 : vector<2048x128xi32>
    %cst_6 = arith.constant 0x7F800000 : f32
    %14 = vector.broadcast %cst_6 : f32 to vector<2048x128xf32>
    %15 = arith.select %13, %7, %14 : vector<2048x128xi1>, vector<2048x128xf32>
    %cst_7 = arith.constant 0xFF800000 : f32
    %16 = vector.broadcast %cst_7 : f32 to vector<2048x128xf32>
    %17 = arith.select %13, %7, %16 : vector<2048x128xi1>, vector<2048x128xf32>
    %cst_8 = arith.constant dense<0x7F800000> : vector<128xf32>
    %18 = vector.multi_reduction <minimumf>, %15, %cst_8 [0] : vector<2048x128xf32> to vector<128xf32>
    %19 = vector.shape_cast %18 : vector<128xf32> to vector<1x128xf32>
    %20 = vector.shape_cast %19 : vector<1x128xf32> to vector<1x128xf32>
    %21 = vector.broadcast %20 : vector<1x128xf32> to vector<8x128xf32>
    %c0_9 = arith.constant 0 : index
    %c0_10 = arith.constant 0 : index
    %c0_11 = arith.constant 0 : index
    %22 = vector.load %arg7[%c0_9, %c0_10, %c0_11] : memref<1x8x128xf32, #tpu.memory_space<vmem>>, vector<1x8x128xf32>
    %23 = vector.shape_cast %22 : vector<1x8x128xf32> to vector<8x128xf32>
    %24 = vector.shape_cast %21 : vector<8x128xf32> to vector<1x8x128xf32>
    tpu.vector_store %arg7[%c0_9, %c0_10, %c0_11], %24 {strides = array<i32>} : memref<1x8x128xf32, #tpu.memory_space<vmem>>, vector<1x8x128xf32>,
    %cst_12 = arith.constant dense<0xFF800000> : vector<128xf32>
    %25 = vector.multi_reduction <maximumf>, %17, %cst_12 [0] : vector<2048x128xf32> to vector<128xf32>
    %26 = vector.shape_cast %25 : vector<128xf32> to vector<1x128xf32>
    %27 = vector.shape_cast %26 : vector<1x128xf32> to vector<1x128xf32>
    %28 = vector.broadcast %27 : vector<1x128xf32> to vector<8x128xf32>
    %c0_13 = arith.constant 0 : index
    %c0_14 = arith.constant 0 : index
    %c0_15 = arith.constant 0 : index
    %29 = vector.load %arg8[%c0_13, %c0_14, %c0_15] : memref<1x8x128xf32, #tpu.memory_space<vmem>>, vector<1x8x128xf32>
    %30 = vector.shape_cast %29 : vector<1x8x128xf32> to vector<8x128xf32>
    %31 = vector.shape_cast %28 : vector<8x128xf32> to vector<1x8x128xf32>
    tpu.vector_store %arg8[%c0_13, %c0_14, %c0_15], %31 {strides = array<i32>} : memref<1x8x128xf32, #tpu.memory_space<vmem>>, vector<1x8x128xf32>,
    %32 = tpu.iota {dimensions = array<i32: 0>} : vector<8x2048xi32>
    %33 = tpu.iota {dimensions = array<i32: 1>} : vector<8x2048xi32>
    %c256_i32 = arith.constant 256 : i32
    %34 = vector.broadcast %c256_i32 : i32 to vector<8x2048xi32>
    %35 = arith.muli %32, %34 : vector<8x2048xi32>
    %36 = arith.cmpi sge, %33, %35 : vector<8x2048xi32>
    %c1_i32 = arith.constant 1 : i32
    %37 = vector.broadcast %c1_i32 : i32 to vector<8x2048xi32>
    %38 = arith.addi %32, %37 : vector<8x2048xi32>
    %c256_i32_16 = arith.constant 256 : i32
    %39 = vector.broadcast %c256_i32_16 : i32 to vector<8x2048xi32>
    %40 = arith.muli %38, %39 : vector<8x2048xi32>
    %41 = arith.cmpi slt, %33, %40 : vector<8x2048xi32>
    %42 = arith.andi %36, %41 : vector<8x2048xi1>
    %cst_17 = arith.constant 3.906250e-03 : f32
    %cst_18 = arith.constant 0.000000e+00 : f32
    %43 = vector.broadcast %cst_17 : f32 to vector<8x2048xf32>
    %44 = vector.broadcast %cst_18 : f32 to vector<8x2048xf32>
    %45 = arith.select %42, %43, %44 : vector<8x2048xi1>, vector<8x2048xf32>
    %cst_19 = arith.constant dense<0.000000e+00> : vector<8x128xf32>
    %46 = tpu.matmul %45, %7, %cst_19 {dimension_numbers = #tpu.dot_dimension_numbers<[1], [0], [0], [1], [0, 0, 1, 1], [], []>} : vector<8x2048xf32>, vector<2048x128xf32>, vector<8x128xf32> -> vector<8x128xf32>
    %c0_20 = arith.constant 0 : index
    %c0_21 = arith.constant 0 : index
    %47 = vector.load %arg4[%c0_20, %c0_21] : memref<128x128xf32, #tpu.memory_space<vmem>>, vector<128x128xf32>
    %cst_22 = arith.constant dense<0.000000e+00> : vector<8x128xf32>
    %48 = tpu.matmul %46, %47, %cst_22 {dimension_numbers = #tpu.dot_dimension_numbers<[1], [0], [0], [1], [0, 0, 1, 1], [], []>} : vector<8x128xf32>, vector<128x128xf32>, vector<8x128xf32> -> vector<8x128xf32>
    %c0_23 = arith.constant 0 : index
    %c0_24 = arith.constant 0 : index
    %49 = vector.load %arg5[%c0_23, %c0_24] : memref<1x128xf32, #tpu.memory_space<vmem>>, vector<1x128xf32>
    %50 = vector.broadcast %49 : vector<1x128xf32> to vector<8x128xf32>
    %51 = arith.addf %48, %50 : vector<8x128xf32>
    %c0_25 = arith.constant 0 : index
    %c0_26 = arith.constant 0 : index
    %52 = vector.load %arg6[%c0_25, %c0_26] : memref<8x128xf32, #tpu.memory_space<vmem>>, vector<8x128xf32>
    tpu.vector_store %arg6[%c0_25, %c0_26], %51 {strides = array<i32>} : memref<8x128xf32, #tpu.memory_space<vmem>>, vector<8x128xf32>,
    return
  }
  func.func @transform_0(%arg0: i32) -> (i32, i32) {
    %c0_i32 = arith.constant 0 : i32
    %c0_i32_0 = arith.constant 0 : i32
    return %arg0, %c0_i32 : i32, i32
  }
  func.func @transform_1(%arg0: i32) -> (i32, i32) {
    %c0_i32 = arith.constant 0 : i32
    %c0_i32_0 = arith.constant 0 : i32
    %c0_i32_1 = arith.constant 0 : i32
    return %c0_i32, %c0_i32_0 : i32, i32
  }
  func.func @transform_2(%arg0: i32) -> (i32, i32) {
    %c0_i32 = arith.constant 0 : i32
    %c0_i32_0 = arith.constant 0 : i32
    %c0_i32_1 = arith.constant 0 : i32
    return %c0_i32, %c0_i32_0 : i32, i32
  }
  func.func @transform_3(%arg0: i32) -> (i32, i32) {
    %c0_i32 = arith.constant 0 : i32
    %c0_i32_0 = arith.constant 0 : i32
    %c0_i32_1 = arith.constant 0 : i32
    return %c0_i32, %c0_i32_0 : i32, i32
  }
  func.func @transform_4(%arg0: i32) -> (i32, i32) {
    %c0_i32 = arith.constant 0 : i32
    %c0_i32_0 = arith.constant 0 : i32
    %c0_i32_1 = arith.constant 0 : i32
    return %c0_i32, %c0_i32_0 : i32, i32
  }
  func.func @transform_5(%arg0: i32) -> (i32, i32) {
    %c0_i32 = arith.constant 0 : i32
    %c0_i32_0 = arith.constant 0 : i32
    return %arg0, %c0_i32 : i32, i32
  }
  func.func @transform_6(%arg0: i32) -> (i32, i32, i32) {
    %c0_i32 = arith.constant 0 : i32
    %c0_i32_0 = arith.constant 0 : i32
    %c0_i32_1 = arith.constant 0 : i32
    return %arg0, %c0_i32, %c0_i32_0 : i32, i32, i32
  }
  func.func @transform_7(%arg0: i32) -> (i32, i32, i32) {
    %c0_i32 = arith.constant 0 : i32
    %c0_i32_0 = arith.constant 0 : i32
    %c0_i32_1 = arith.constant 0 : i32
    return %arg0, %c0_i32, %c0_i32_0 : i32, i32, i32
  }
}

</mosaic_0001>

<llo_original>
// kernel: fwd.1
$region0: #{fwd.1}
  #allocation0 [shape = 'u32[]', space=smem, size = 0x4, offset = 0x4, fixed_abs, tag = 'smem constant byte address 0x4 - core index']
  #allocation1 [shape = 'u32[144,128]{1,0:T(1,128)}', space=vmem, size = 0x12000, scoped, tag = 'internal scratch']
  %s0 = inlined_call_operand.vmem [shape: f32[2048,128], index: 0, kind: input, shape index: {}]
  %s1 = inlined_call_operand.vmem [shape: f32[128,128], index: 1, kind: input, shape index: {}]
  %s2 = inlined_call_operand.vmem [shape: f32[1,128], index: 2, kind: input, shape index: {}]
  %s3 = inlined_call_operand.vmem [shape: f32[128,128], index: 3, kind: input, shape index: {}]
  %s4 = inlined_call_operand.vmem [shape: f32[1,128], index: 4, kind: input, shape index: {}]
  %s5 = inlined_call_operand.vmem [shape: f32[8,128], index: 5, kind: output, shape index: {0}]
  %s6 = inlined_call_operand.vmem [shape: f32[1,8,128], index: 6, kind: output, shape index: {1}]
  %s7 = inlined_call_operand.vmem [shape: f32[1,8,128], index: 7, kind: output, shape index: {2}]
  %8 = xla_tuple %s5, %s6, %s7
  %s9 = sld [smem:[#allocation0]]
  $region46: #{fwd.1} parent=0
    _
  %s11 = ssub.s32 1, %s9
  %s12 = scalar_select 0, %s11, %s9
  // Predicated region
  $region2: #{fwd.1} parent=0 // pred_check
    _
  $region3: #{fwd.1} parent=0 // pred_check_branch
    %14 = sbr.rel (0) target = $region5
  $region4: #{fwd.1} parent=0 // pred_region
    _
  $region5: #{fwd.1} parent=0 // pred_fallthru
    _
  // Predicated region
  $region6: #{fwd.1} parent=0 // pred_check
    _
  $region7: #{fwd.1} parent=0 // pred_check_branch
    %16 = sbr.rel (0) target = $region9
  $region8: #{fwd.1} parent=0 // pred_region
    _
  $region9: #{fwd.1} parent=0 // pred_fallthru
    _
  // Predicated region
  $region10: #{fwd.1} parent=0 // pred_check
    _
  $region11: #{fwd.1} parent=0 // pred_check_branch
    %18 = sbr.rel (0) target = $region13
  $region12: #{fwd.1} parent=0 // pred_region
    _
  $region13: #{fwd.1} parent=0 // pred_fallthru
    _
  // Predicated region
  $region14: #{fwd.1} parent=0 // pred_check
    _
  $region15: #{fwd.1} parent=0 // pred_check_branch
    %20 = sbr.rel (0) target = $region17
  $region16: #{fwd.1} parent=0 // pred_region
    _
  $region17: #{fwd.1} parent=0 // pred_fallthru
    _
  // Predicated region
  $region18: #{fwd.1} parent=0 // pred_check
    _
  $region19: #{fwd.1} parent=0 // pred_check_branch
    %22 = sbr.rel (0) target = $region21
  $region20: #{fwd.1} parent=0 // pred_region
    _
  $region21: #{fwd.1} parent=0 // pred_fallthru
    _
  %v23 = vld [vmem:[%s0] sm:$0xff]
  %v24 = vld [vmem:[%s0 + $0x8] sm:$0xff]
  %v25 = vld [vmem:[%s0 + $0x10] sm:$0xff]
  %v26 = vld [vmem:[%s0 + $0x18] sm:$0xff]
  %v27 = vld [vmem:[%s0 + $0x20] sm:$0xff]
  %v28 = vld [vmem:[%s0 + $0x28] sm:$0xff]
  %v29 = vld [vmem:[%s0 + $0x30] sm:$0xff]
  %v30 = vld [vmem:[%s0 + $0x38] sm:$0xff]
  %v31 = vld [vmem:[%s0 + $0x40] sm:$0xff]
  %v32 = vld [vmem:[%s0 + $0x48] sm:$0xff]
  %v33 = vld [vmem:[%s0 + $0x50] sm:$0xff]
  %v34 = vld [vmem:[%s0 + $0x58] sm:$0xff]
  %v35 = vld [vmem:[%s0 + $0x60] sm:$0xff]
  %v36 = vld [vmem:[%s0 + $0x68] sm:$0xff]
  %v37 = vld [vmem:[%s0 + $0x70] sm:$0xff]
  %v38 = vld [vmem:[%s0 + $0x78] sm:$0xff]
  %v39 = vld [vmem:[%s0 + $0x80] sm:$0xff]
  %v40 = vld [vmem:[%s0 + $0x88] sm:$0xff]
  %v41 = vld [vmem:[%s0 + $0x90] sm:$0xff]
  %v42 = vld [vmem:[%s0 + $0x98] sm:$0xff]
  %v43 = vld [vmem:[%s0 + $0xa0] sm:$0xff]
  %v44 = vld [vmem:[%s0 + $0xa8] sm:$0xff]
  %v45 = vld [vmem:[%s0 + $0xb0] sm:$0xff]
  %v46 = vld [vmem:[%s0 + $0xb8] sm:$0xff]
  %v47 = vld [vmem:[%s0 + $0xc0] sm:$0xff]
  %v48 = vld [vmem:[%s0 + $0xc8] sm:$0xff]
  %v49 = vld [vmem:[%s0 + $0xd0] sm:$0xff]
  %v50 = vld [vmem:[%s0 + $0xd8] sm:$0xff]
  %v51 = vld [vmem:[%s0 + $0xe0] sm:$0xff]
  %v52 = vld [vmem:[%s0 + $0xe8] sm:$0xff]
  %v53 = vld [vmem:[%s0 + $0xf0] sm:$0xff]
  %v54 = vld [vmem:[%s0 + $0xf8] sm:$0xff]
  %v55 = vld [vmem:[%s0 + $0x100] sm:$0xff]
  %v56 = vld [vmem:[%s0 + $0x108] sm:$0xff]
  %v57 = vld [vmem:[%s0 + $0x110] sm:$0xff]
  %v58 = vld [vmem:[%s0 + $0x118] sm:$0xff]
  %v59 = vld [vmem:[%s0 + $0x120] sm:$0xff]
  %v60 = vld [vmem:[%s0 + $0x128] sm:$0xff]
  %v61 = vld [vmem:[%s0 + $0x130] sm:$0xff]
  %v62 = vld [vmem:[%s0 + $0x138] sm:$0xff]
  %v63 = vld [vmem:[%s0 + $0x140] sm:$0xff]
  %v64 = vld [vmem:[%s0 + $0x148] sm:$0xff]
  %v65 = vld [vmem:[%s0 + $0x150] sm:$0xff]
  %v66 = vld [vmem:[%s0 + $0x158] sm:$0xff]
  %v67 = vld [vmem:[%s0 + $0x160] sm:$0xff]
  %v68 = vld [vmem:[%s0 + $0x168] sm:$0xff]
  %v69 = vld [vmem:[%s0 + $0x170] sm:$0xff]
  %v70 = vld [vmem:[%s0 + $0x178] sm:$0xff]
  %v71 = vld [vmem:[%s0 + $0x180] sm:$0xff]
  %v72 = vld [vmem:[%s0 + $0x188] sm:$0xff]
  %v73 = vld [vmem:[%s0 + $0x190] sm:$0xff]
  %v74 = vld [vmem:[%s0 + $0x198] sm:$0xff]
  %v75 = vld [vmem:[%s0 + $0x1a0] sm:$0xff]
  %v76 = vld [vmem:[%s0 + $0x1a8] sm:$0xff]
  %v77 = vld [vmem:[%s0 + $0x1b0] sm:$0xff]
  %v78 = vld [vmem:[%s0 + $0x1b8] sm:$0xff]
  %v79 = vld [vmem:[%s0 + $0x1c0] sm:$0xff]
  %v80 = vld [vmem:[%s0 + $0x1c8] sm:$0xff]
  %v81 = vld [vmem:[%s0 + $0x1d0] sm:$0xff]
  %v82 = vld [vmem:[%s0 + $0x1d8] sm:$0xff]
  %v83 = vld [vmem:[%s0 + $0x1e0] sm:$0xff]
  %v84 = vld [vmem:[%s0 + $0x1e8] sm:$0xff]
  %v85 = vld [vmem:[%s0 + $0x1f0] sm:$0xff]
  %v86 = vld [vmem:[%s0 + $0x1f8] sm:$0xff]
  %v87 = vld [vmem:[%s0 + $0x200] sm:$0xff]
  %v88 = vld [vmem:[%s0 + $0x208] sm:$0xff]
  %v89 = vld [vmem:[%s0 + $0x210] sm:$0xff]
  %v90 = vld [vmem:[%s0 + $0x218] sm:$0xff]
  %v91 = vld [vmem:[%s0 + $0x220] sm:$0xff]
  %v92 = vld [vmem:[%s0 + $0x228] sm:$0xff]
  %v93 = vld [vmem:[%s0 + $0x230] sm:$0xff]
  %v94 = vld [vmem:[%s0 + $0x238] sm:$0xff]
  %v95 = vld [vmem:[%s0 + $0x240] sm:$0xff]
  %v96 = vld [vmem:[%s0 + $0x248] sm:$0xff]
  %v97 = vld [vmem:[%s0 + $0x250] sm:$0xff]
  %v98 = vld [vmem:[%s0 + $0x258] sm:$0xff]
  %v99 = vld [vmem:[%s0 + $0x260] sm:$0xff]
  %v100 = vld [vmem:[%s0 + $0x268] sm:$0xff]
  %v101 = vld [vmem:[%s0 + $0x270] sm:$0xff]
  %v102 = vld [vmem:[%s0 + $0x278] sm:$0xff]
  %v103 = vld [vmem:[%s0 + $0x280] sm:$0xff]
  %v104 = vld [vmem:[%s0 + $0x288] sm:$0xff]
  %v105 = vld [vmem:[%s0 + $0x290] sm:$0xff]
  %v106 = vld [vmem:[%s0 + $0x298] sm:$0xff]
  %v107 = vld [vmem:[%s0 + $0x2a0] sm:$0xff]
  %v108 = vld [vmem:[%s0 + $0x2a8] sm:$0xff]
  %v109 = vld [vmem:[%s0 + $0x2b0] sm:$0xff]
  %v110 = vld [vmem:[%s0 + $0x2b8] sm:$0xff]
  %v111 = vld [vmem:[%s0 + $0x2c0] sm:$0xff]
  %v112 = vld [vmem:[%s0 + $0x2c8] sm:$0xff]
  %v113 = vld [vmem:[%s0 + $0x2d0] sm:$0xff]
  %v114 = vld [vmem:[%s0 + $0x2d8] sm:$0xff]
  %v115 = vld [vmem:[%s0 + $0x2e0] sm:$0xff]
  %v116 = vld [vmem:[%s0 + $0x2e8] sm:$0xff]
  %v117 = vld [vmem:[%s0 + $0x2f0] sm:$0xff]
  %v118 = vld [vmem:[%s0 + $0x2f8] sm:$0xff]
  %v119 = vld [vmem:[%s0 + $0x300] sm:$0xff]
  %v120 = vld [vmem:[%s0 + $0x308] sm:$0xff]
  %v121 = vld [vmem:[%s0 + $0x310] sm:$0xff]
  %v122 = vld [vmem:[%s0 + $0x318] sm:$0xff]
  %v123 = vld [vmem:[%s0 + $0x320] sm:$0xff]
  %v124 = vld [vmem:[%s0 + $0x328] sm:$0xff]
  %v125 = vld [vmem:[%s0 + $0x330] sm:$0xff]
  %v126 = vld [vmem:[%s0 + $0x338] sm:$0xff]
  %v127 = vld [vmem:[%s0 + $0x340] sm:$0xff]
  %v128 = vld [vmem:[%s0 + $0x348] sm:$0xff]
  %v129 = vld [vmem:[%s0 + $0x350] sm:$0xff]
  %v130 = vld [vmem:[%s0 + $0x358] sm:$0xff]
  %v131 = vld [vmem:[%s0 + $0x360] sm:$0xff]
  %v132 = vld [vmem:[%s0 + $0x368] sm:$0xff]
  %v133 = vld [vmem:[%s0 + $0x370] sm:$0xff]
  %v134 = vld [vmem:[%s0 + $0x378] sm:$0xff]
  %v135 = vld [vmem:[%s0 + $0x380] sm:$0xff]
  %v136 = vld [vmem:[%s0 + $0x388] sm:$0xff]
  %v137 = vld [vmem:[%s0 + $0x390] sm:$0xff]
  %v138 = vld [vmem:[%s0 + $0x398] sm:$0xff]
  %v139 = vld [vmem:[%s0 + $0x3a0] sm:$0xff]
  %v140 = vld [vmem:[%s0 + $0x3a8] sm:$0xff]
  %v141 = vld [vmem:[%s0 + $0x3b0] sm:$0xff]
  %v142 = vld [vmem:[%s0 + $0x3b8] sm:$0xff]
  %v143 = vld [vmem:[%s0 + $0x3c0] sm:$0xff]
  %v144 = vld [vmem:[%s0 + $0x3c8] sm:$0xff]
  %v145 = vld [vmem:[%s0 + $0x3d0] sm:$0xff]
  %v146 = vld [vmem:[%s0 + $0x3d8] sm:$0xff]
  %v147 = vld [vmem:[%s0 + $0x3e0] sm:$0xff]
  %v148 = vld [vmem:[%s0 + $0x3e8] sm:$0xff]
  %v149 = vld [vmem:[%s0 + $0x3f0] sm:$0xff]
  %v150 = vld [vmem:[%s0 + $0x3f8] sm:$0xff]
  %v151 = vld [vmem:[%s0 + $0x400] sm:$0xff]
  %v152 = vld [vmem:[%s0 + $0x408] sm:$0xff]
  %v153 = vld [vmem:[%s0 + $0x410] sm:$0xff]
  %v154 = vld [vmem:[%s0 + $0x418] sm:$0xff]
  %v155 = vld [vmem:[%s0 + $0x420] sm:$0xff]
  %v156 = vld [vmem:[%s0 + $0x428] sm:$0xff]
  %v157 = vld [vmem:[%s0 + $0x430] sm:$0xff]
  %v158 = vld [vmem:[%s0 + $0x438] sm:$0xff]
  %v159 = vld [vmem:[%s0 + $0x440] sm:$0xff]
  %v160 = vld [vmem:[%s0 + $0x448] sm:$0xff]
  %v161 = vld [vmem:[%s0 + $0x450] sm:$0xff]
  %v162 = vld [vmem:[%s0 + $0x458] sm:$0xff]
  %v163 = vld [vmem:[%s0 + $0x460] sm:$0xff]
  %v164 = vld [vmem:[%s0 + $0x468] sm:$0xff]
  %v165 = vld [vmem:[%s0 + $0x470] sm:$0xff]
  %v166 = vld [vmem:[%s0 + $0x478] sm:$0xff]
  %v167 = vld [vmem:[%s0 + $0x480] sm:$0xff]
  %v168 = vld [vmem:[%s0 + $0x488] sm:$0xff]
  %v169 = vld [vmem:[%s0 + $0x490] sm:$0xff]
  %v170 = vld [vmem:[%s0 + $0x498] sm:$0xff]
  %v171 = vld [vmem:[%s0 + $0x4a0] sm:$0xff]
  %v172 = vld [vmem:[%s0 + $0x4a8] sm:$0xff]
  %v173 = vld [vmem:[%s0 + $0x4b0] sm:$0xff]
  %v174 = vld [vmem:[%s0 + $0x4b8] sm:$0xff]
  %v175 = vld [vmem:[%s0 + $0x4c0] sm:$0xff]
  %v176 = vld [vmem:[%s0 + $0x4c8] sm:$0xff]
  %v177 = vld [vmem:[%s0 + $0x4d0] sm:$0xff]
  %v178 = vld [vmem:[%s0 + $0x4d8] sm:$0xff]
  %v179 = vld [vmem:[%s0 + $0x4e0] sm:$0xff]
  %v180 = vld [vmem:[%s0 + $0x4e8] sm:$0xff]
  %v181 = vld [vmem:[%s0 + $0x4f0] sm:$0xff]
  %v182 = vld [vmem:[%s0 + $0x4f8] sm:$0xff]
  %v183 = vld [vmem:[%s0 + $0x500] sm:$0xff]
  %v184 = vld [vmem:[%s0 + $0x508] sm:$0xff]
  %v185 = vld [vmem:[%s0 + $0x510] sm:$0xff]
  %v186 = vld [vmem:[%s0 + $0x518] sm:$0xff]
  %v187 = vld [vmem:[%s0 + $0x520] sm:$0xff]
  %v188 = vld [vmem:[%s0 + $0x528] sm:$0xff]
  %v189 = vld [vmem:[%s0 + $0x530] sm:$0xff]
  %v190 = vld [vmem:[%s0 + $0x538] sm:$0xff]
  %v191 = vld [vmem:[%s0 + $0x540] sm:$0xff]
  %v192 = vld [vmem:[%s0 + $0x548] sm:$0xff]
  %v193 = vld [vmem:[%s0 + $0x550] sm:$0xff]
  %v194 = vld [vmem:[%s0 + $0x558] sm:$0xff]
  %v195 = vld [vmem:[%s0 + $0x560] sm:$0xff]
  %v196 = vld [vmem:[%s0 + $0x568] sm:$0xff]
  %v197 = vld [vmem:[%s0 + $0x570] sm:$0xff]
  %v198 = vld [vmem:[%s0 + $0x578] sm:$0xff]
  %v199 = vld [vmem:[%s0 + $0x580] sm:$0xff]
  %v200 = vld [vmem:[%s0 + $0x588] sm:$0xff]
  %v201 = vld [vmem:[%s0 + $0x590] sm:$0xff]
  %v202 = vld [vmem:[%s0 + $0x598] sm:$0xff]
  %v203 = vld [vmem:[%s0 + $0x5a0] sm:$0xff]
  %v204 = vld [vmem:[%s0 + $0x5a8] sm:$0xff]
  %v205 = vld [vmem:[%s0 + $0x5b0] sm:$0xff]
  %v206 = vld [vmem:[%s0 + $0x5b8] sm:$0xff]
  %v207 = vld [vmem:[%s0 + $0x5c0] sm:$0xff]
  %v208 = vld [vmem:[%s0 + $0x5c8] sm:$0xff]
  %v209 = vld [vmem:[%s0 + $0x5d0] sm:$0xff]
  %v210 = vld [vmem:[%s0 + $0x5d8] sm:$0xff]
  %v211 = vld [vmem:[%s0 + $0x5e0] sm:$0xff]
  %v212 = vld [vmem:[%s0 + $0x5e8] sm:$0xff]
  %v213 = vld [vmem:[%s0 + $0x5f0] sm:$0xff]
  %v214 = vld [vmem:[%s0 + $0x5f8] sm:$0xff]
  %v215 = vld [vmem:[%s0 + $0x600] sm:$0xff]
  %v216 = vld [vmem:[%s0 + $0x608] sm:$0xff]
  %v217 = vld [vmem:[%s0 + $0x610] sm:$0xff]
  %v218 = vld [vmem:[%s0 + $0x618] sm:$0xff]
  %v219 = vld [vmem:[%s0 + $0x620] sm:$0xff]
  %v220 = vld [vmem:[%s0 + $0x628] sm:$0xff]
  %v221 = vld [vmem:[%s0 + $0x630] sm:$0xff]
  %v222 = vld [vmem:[%s0 + $0x638] sm:$0xff]
  %v223 = vld [vmem:[%s0 + $0x640] sm:$0xff]
  %v224 = vld [vmem:[%s0 + $0x648] sm:$0xff]
  %v225 = vld [vmem:[%s0 + $0x650] sm:$0xff]
  %v226 = vld [vmem:[%s0 + $0x658] sm:$0xff]
  %v227 = vld [vmem:[%s0 + $0x660] sm:$0xff]
  %v228 = vld [vmem:[%s0 + $0x668] sm:$0xff]
  %v229 = vld [vmem:[%s0 + $0x670] sm:$0xff]
  %v230 = vld [vmem:[%s0 + $0x678] sm:$0xff]
  %v231 = vld [vmem:[%s0 + $0x680] sm:$0xff]
  %v232 = vld [vmem:[%s0 + $0x688] sm:$0xff]
  %v233 = vld [vmem:[%s0 + $0x690] sm:$0xff]
  %v234 = vld [vmem:[%s0 + $0x698] sm:$0xff]
  %v235 = vld [vmem:[%s0 + $0x6a0] sm:$0xff]
  %v236 = vld [vmem:[%s0 + $0x6a8] sm:$0xff]
  %v237 = vld [vmem:[%s0 + $0x6b0] sm:$0xff]
  %v238 = vld [vmem:[%s0 + $0x6b8] sm:$0xff]
  %v239 = vld [vmem:[%s0 + $0x6c0] sm:$0xff]
  %v240 = vld [vmem:[%s0 + $0x6c8] sm:$0xff]
  %v241 = vld [vmem:[%s0 + $0x6d0] sm:$0xff]
  %v242 = vld [vmem:[%s0 + $0x6d8] sm:$0xff]
  %v243 = vld [vmem:[%s0 + $0x6e0] sm:$0xff]
  %v244 = vld [vmem:[%s0 + $0x6e8] sm:$0xff]
  %v245 = vld [vmem:[%s0 + $0x6f0] sm:$0xff]
  %v246 = vld [vmem:[%s0 + $0x6f8] sm:$0xff]
  %v247 = vld [vmem:[%s0 + $0x700] sm:$0xff]
  %v248 = vld [vmem:[%s0 + $0x708] sm:$0xff]
  %v249 = vld [vmem:[%s0 + $0x710] sm:$0xff]
  %v250 = vld [vmem:[%s0 + $0x718] sm:$0xff]
  %v251 = vld [vmem:[%s0 + $0x720] sm:$0xff]
  %v252 = vld [vmem:[%s0 + $0x728] sm:$0xff]
  %v253 = vld [vmem:[%s0 + $0x730] sm:$0xff]
  %v254 = vld [vmem:[%s0 + $0x738] sm:$0xff]
  %v255 = vld [vmem:[%s0 + $0x740] sm:$0xff]
  %v256 = vld [vmem:[%s0 + $0x748] sm:$0xff]
  %v257 = vld [vmem:[%s0 + $0x750] sm:$0xff]
  %v258 = vld [vmem:[%s0 + $0x758] sm:$0xff]
  %v259 = vld [vmem:[%s0 + $0x760] sm:$0xff]
  %v260 = vld [vmem:[%s0 + $0x768] sm:$0xff]
  %v261 = vld [vmem:[%s0 + $0x770] sm:$0xff]
  %v262 = vld [vmem:[%s0 + $0x778] sm:$0xff]
  %v263 = vld [vmem:[%s0 + $0x780] sm:$0xff]
  %v264 = vld [vmem:[%s0 + $0x788] sm:$0xff]
  %v265 = vld [vmem:[%s0 + $0x790] sm:$0xff]
  %v266 = vld [vmem:[%s0 + $0x798] sm:$0xff]
  %v267 = vld [vmem:[%s0 + $0x7a0] sm:$0xff]
  %v268 = vld [vmem:[%s0 + $0x7a8] sm:$0xff]
  %v269 = vld [vmem:[%s0 + $0x7b0] sm:$0xff]
  %v270 = vld [vmem:[%s0 + $0x7b8] sm:$0xff]
  %v271 = vld [vmem:[%s0 + $0x7c0] sm:$0xff]
  %v272 = vld [vmem:[%s0 + $0x7c8] sm:$0xff]
  %v273 = vld [vmem:[%s0 + $0x7d0] sm:$0xff]
  %v274 = vld [vmem:[%s0 + $0x7d8] sm:$0xff]
  %v275 = vld [vmem:[%s0 + $0x7e0] sm:$0xff]
  %v276 = vld [vmem:[%s0 + $0x7e8] sm:$0xff]
  %v277 = vld [vmem:[%s0 + $0x7f0] sm:$0xff]
  %v278 = vld [vmem:[%s0 + $0x7f8] sm:$0xff]
  %v279 = vld [vmem:[%s1] sm:$0xff]
  %v280 = vld [vmem:[%s1 + $0x8] sm:$0xff]
  %v281 = vld [vmem:[%s1 + $0x10] sm:$0xff]
  %v282 = vld [vmem:[%s1 + $0x18] sm:$0xff]
  %v283 = vld [vmem:[%s1 + $0x20] sm:$0xff]
  %v284 = vld [vmem:[%s1 + $0x28] sm:$0xff]
  %v285 = vld [vmem:[%s1 + $0x30] sm:$0xff]
  %v286 = vld [vmem:[%s1 + $0x38] sm:$0xff]
  %v287 = vld [vmem:[%s1 + $0x40] sm:$0xff]
  %v288 = vld [vmem:[%s1 + $0x48] sm:$0xff]
  %v289 = vld [vmem:[%s1 + $0x50] sm:$0xff]
  %v290 = vld [vmem:[%s1 + $0x58] sm:$0xff]
  %v291 = vld [vmem:[%s1 + $0x60] sm:$0xff]
  %v292 = vld [vmem:[%s1 + $0x68] sm:$0xff]
  %v293 = vld [vmem:[%s1 + $0x70] sm:$0xff]
  %v294 = vld [vmem:[%s1 + $0x78] sm:$0xff]
  %v295 = vld [vmem:[%s2] sm:$0x1]
  %v297 = vlaneseq
  %v298 = vshrl.u32 %v297, 7
  %v299 = vsub.s32 0, %v298
  %v300 = vrot.slane %v295, %v299
  %302 = vmatprep.subr.mxu0 0.0
  %303 = vmatpush1.msra.mxu0 %v279
  %304 = vmatprep.subr.mxu0 0.0
  %305 = vmatpush1.msra.mxu0 %v280
  %306 = vmatprep.subr.mxu0 0.0
  %307 = vmatpush1.msra.mxu0 %v281
  %308 = vmatprep.subr.mxu0 0.0
  %309 = vmatpush1.msra.mxu0 %v282
  %310 = vmatprep.subr.mxu0 0.0
  %311 = vmatpush1.msra.mxu0 %v283
  %312 = vmatprep.subr.mxu0 0.0
  %313 = vmatpush1.msra.mxu0 %v284
  %314 = vmatprep.subr.mxu0 0.0
  %315 = vmatpush1.msra.mxu0 %v285
  %316 = vmatprep.subr.mxu0 0.0
  %317 = vmatpush1.msra.mxu0 %v286
  %318 = vmatprep.subr.mxu0 0.0
  %319 = vmatpush1.msra.mxu0 %v287
  %320 = vmatprep.subr.mxu0 0.0
  %321 = vmatpush1.msra.mxu0 %v288
  %322 = vmatprep.subr.mxu0 0.0
  %323 = vmatpush1.msra.mxu0 %v289
  %324 = vmatprep.subr.mxu0 0.0
  %325 = vmatpush1.msra.mxu0 %v290
  %326 = vmatprep.subr.mxu0 0.0
  %327 = vmatpush1.msra.mxu0 %v291
  %328 = vmatprep.subr.mxu0 0.0
  %329 = vmatpush1.msra.mxu0 %v292
  %330 = vmatprep.subr.mxu0 0.0
  %331 = vmatpush1.msra.mxu0 %v293
  %332 = vmatprep.subr.mxu0 0.0
  %333 = vmatpush1.msra.mxu0 %v294
  %334 = vmatprep.subr.mxu0 0.0
  %335 = vmatpush1.msra.mxu0 0.0
  %336 = vmatprep.subr.mxu0 0.0
  %337 = vmatpush1.msra.mxu0 0.0
  %338 = vmatprep.subr.mxu0 0.0
  %339 = vmatpush1.msra.mxu0 0.0
  %340 = vmatprep.subr.mxu0 0.0
  %341 = vmatpush1.msra.mxu0 0.0
  %342 = vmatprep.subr.mxu0 0.0
  %343 = vmatpush1.msra.mxu0 0.0
  %344 = vmatprep.subr.mxu0 0.0
  %345 = vmatpush1.msra.mxu0 0.0
  %346 = vmatprep.subr.mxu0 0.0
  %347 = vmatpush1.msra.mxu0 0.0
  %348 = vmatprep.subr.mxu0 0.0
  %349 = vmatpush1.msra.mxu0 0.0
  %350 = vmatprep.subr.mxu0 0.0
  %351 = vmatpush1.msra.mxu0 0.0
  %352 = vmatprep.subr.mxu0 0.0
  %353 = vmatpush1.msra.mxu0 0.0
  %354 = vmatprep.subr.mxu0 0.0
  %355 = vmatpush1.msra.mxu0 0.0
  %356 = vmatprep.subr.mxu0 0.0
  %357 = vmatpush1.msra.mxu0 0.0
  %358 = vmatprep.subr.mxu0 0.0
  %359 = vmatpush1.msra.mxu0 0.0
  %360 = vmatprep.subr.mxu0 0.0
  %361 = vmatpush1.msra.mxu0 0.0
  %362 = vmatprep.subr.mxu0 0.0
  %363 = vmatpush1.msra.mxu0 0.0
  %364 = vmatprep.subr.mxu0 0.0
  %365 = vmatpush1.msra.mxu0 0.0
  %366 = vmatprep.mubr.f32.mxu0 0.0
  %367 = vmatmul.mubr.f32.gmra.mrb[0].mxu0 %v23
  %v368 = vpop.f32.mrb[0].mxu0
  %v369 = vadd.f32 %v300, %v368
  %v370 = vpop.f32.mrb[0].mxu0
  %371 = vmatprep.mubr.f32.mxu0 0.0
  %372 = vmatmul.mubr.f32.gmra.mrb[0].mxu0 %v24
  %v373 = vpop.f32.mrb[0].mxu0
  %v374 = vadd.f32 %v300, %v373
  %v375 = vpop.f32.mrb[0].mxu0
  %376 = vmatprep.mubr.f32.mxu0 0.0
  %377 = vmatmul.mubr.f32.gmra.mrb[0].mxu0 %v25
  %v378 = vpop.f32.mrb[0].mxu0
  %v379 = vadd.f32 %v300, %v378
  %v380 = vpop.f32.mrb[0].mxu0
  %381 = vmatprep.mubr.f32.mxu0 0.0
  %382 = vmatmul.mubr.f32.gmra.mrb[0].mxu0 %v26
  %v383 = vpop.f32.mrb[0].mxu0
  %v384 = vadd.f32 %v300, %v383
  %v385 = vpop.f32.mrb[0].mxu0
  %386 = vmatprep.mubr.f32.mxu0 0.0
  %387 = vmatmul.mubr.f32.gmra.mrb[0].mxu0 %v27
  %v388 = vpop.f32.mrb[0].mxu0
  %v389 = vadd.f32 %v300, %v388
  %v390 = vpop.f32.mrb[0].mxu0
  %391 = vmatprep.mubr.f32.mxu0 0.0
  %392 = vmatmul.mubr.f32.gmra.mrb[0].mxu0 %v28
  %v393 = vpop.f32.mrb[0].mxu0
  %v394 = vadd.f32 %v300, %v393
  %v395 = vpop.f32.mrb[0].mxu0
  %396 = vmatprep.mubr.f32.mxu0 0.0
  %397 = vmatmul.mubr.f32.gmra.mrb[0].mxu0 %v29
  %v398 = vpop.f32.mrb[0].mxu0
  %v399 = vadd.f32 %v300, %v398
  %v400 = vpop.f32.mrb[0].mxu0
  %401 = vmatprep.mubr.f32.mxu0 0.0
  %402 = vmatmul.mubr.f32.gmra.mrb[0].mxu0 %v30
  %v403 = vpop.f32.mrb[0].mxu0
  %v404 = vadd.f32 %v300, %v403
  %v405 = vpop.f32.mrb[0].mxu0
  %406 = vmatprep.mubr.f32.mxu0 0.0
  %407 = vmatmul.mubr.f32.gmra.mrb[0].mxu0 %v31
  %v408 = vpop.f32.mrb[0].mxu0
  %v409 = vadd.f32 %v300, %v408
  %v410 = vpop.f32.mrb[0].mxu0
  %411 = vmatprep.mubr.f32.mxu0 0.0
  %412 = vmatmul.mubr.f32.gmra.mrb[0].mxu0 %v32
  %v413 = vpop.f32.mrb[0].mxu0
  %v414 = vadd.f32 %v300, %v413
  %v415 = vpop.f32.mrb[0].mxu0
  %416 = vmatprep.mubr.f32.mxu0 0.0
  %417 = vmatmul.mubr.f32.gmra.mrb[0].mxu0 %v33
  %v418 = vpop.f32.mrb[0].mxu0
  %v419 = vadd.f32 %v300, %v418
  %v420 = vpop.f32.mrb[0].mxu0
  %421 = vmatprep.mubr.f32.mxu0 0.0
  %422 = vmatmul.mubr.f32.gmra.mrb[0].mxu0 %v34
  %v423 = vpop.f32.mrb[0].mxu0
  %v424 = vadd.f32 %v300, %v423
  %v425 = vpop.f32.mrb[0].mxu0
  %426 = vmatprep.mubr.f32.mxu0 0.0
  %427 = vmatmul.mubr.f32.gmra.mrb[0].mxu0 %v35
  %v428 = vpop.f32.mrb[0].mxu0
  %v429 = vadd.f32 %v300, %v428
  %v430 = vpop.f32.mrb[0].mxu0
  %431 = vmatprep.mubr.f32.mxu0 0.0
  %432 = vmatmul.mubr.f32.gmra.mrb[0].mxu0 %v36
  %v433 = vpop.f32.mrb[0].mxu0
  %v434 = vadd.f32 %v300, %v433
  %v435 = vpop.f32.mrb[0].mxu0
  %436 = vmatprep.mubr.f32.mxu0 0.0
  %437 = vmatmul.mubr.f32.gmra.mrb[0].mxu0 %v37
  %v438 = vpop.f32.mrb[0].mxu0
  %v439 = vadd.f32 %v300, %v438
  %v440 = vpop.f32.mrb[0].mxu0
  %441 = vmatprep.mubr.f32.mxu0 0.0
  %442 = vmatmul.mubr.f32.gmra.mrb[0].mxu0 %v38
  %v443 = vpop.f32.mrb[0].mxu0
  %v444 = vadd.f32 %v300, %v443
  %v445 = vpop.f32.mrb[0].mxu0
  %446 = vmatprep.mubr.f32.mxu0 0.0
  %447 = vmatmul.mubr.f32.gmra.mrb[0].mxu0 %v39
  %v448 = vpop.f32.mrb[0].mxu0
  %v449 = vadd.f32 %v300, %v448
  %v450 = vpop.f32.mrb[0].mxu0
  %451 = vmatprep.mubr.f32.mxu0 0.0
  %452 = vmatmul.mubr.f32.gmra.mrb[0].mxu0 %v40
  %v453 = vpop.f32.mrb[0].mxu0
  %v454 = vadd.f32 %v300, %v453
  %v455 = vpop.f32.mrb[0].mxu0
  %456 = vmatprep.mubr.f32.mxu0 0.0
  %457 = vmatmul.mubr.f32.gmra.mrb[0].mxu0 %v41
  %v458 = vpop.f32.mrb[0].mxu0
  %v459 = vadd.f32 %v300, %v458
  %v460 = vpop.f32.mrb[0].mxu0
  %461 = vmatprep.mubr.f32.mxu0 0.0
  %462 = vmatmul.mubr.f32.gmra.mrb[0].mxu0 %v42
  %v463 = vpop.f32.mrb[0].mxu0
  %v464 = vadd.f32 %v300, %v463
  %v465 = vpop.f32.mrb[0].mxu0
  %466 = vmatprep.mubr.f32.mxu0 0.0
  %467 = vmatmul.mubr.f32.gmra.mrb[0].mxu0 %v43
  %v468 = vpop.f32.mrb[0].mxu0
  %v469 = vadd.f32 %v300, %v468
  %v470 = vpop.f32.mrb[0].mxu0
  %471 = vmatprep.mubr.f32.mxu0 0.0
  %472 = vmatmul.mubr.f32.gmra.mrb[0].mxu0 %v44
  %v473 = vpop.f32.mrb[0].mxu0
  %v474 = vadd.f32 %v300, %v473
  %v475 = vpop.f32.mrb[0].mxu0
  %476 = vmatprep.mubr.f32.mxu0 0.0
  %477 = vmatmul.mubr.f32.gmra.mrb[0].mxu0 %v45
  %v478 = vpop.f32.mrb[0].mxu0
  %v479 = vadd.f32 %v300, %v478
  %v480 = vpop.f32.mrb[0].mxu0
  %481 = vmatprep.mubr.f32.mxu0 0.0
  %482 = vmatmul.mubr.f32.gmra.mrb[0].mxu0 %v46
  %v483 = vpop.f32.mrb[0].mxu0
  %v484 = vadd.f32 %v300, %v483
  %v485 = vpop.f32.mrb[0].mxu0
  %486 = vmatprep.mubr.f32.mxu0 0.0
  %487 = vmatmul.mubr.f32.gmra.mrb[0].mxu0 %v47
  %v488 = vpop.f32.mrb[0].mxu0
  %v489 = vadd.f32 %v300, %v488
  %v490 = vpop.f32.mrb[0].mxu0
  %491 = vmatprep.mubr.f32.mxu0 0.0
  %492 = vmatmul.mubr.f32.gmra.mrb[0].mxu0 %v48
  %v493 = vpop.f32.mrb[0].mxu0
  %v494 = vadd.f32 %v300, %v493
  %v495 = vpop.f32.mrb[0].mxu0
  %496 = vmatprep.mubr.f32.mxu0 0.0
  %497 = vmatmul.mubr.f32.gmra.mrb[0].mxu0 %v49
  %v498 = vpop.f32.mrb[0].mxu0
  %v499 = vadd.f32 %v300, %v498
  %v500 = vpop.f32.mrb[0].mxu0
  %501 = vmatprep.mubr.f32.mxu0 0.0
  %502 = vmatmul.mubr.f32.gmra.mrb[0].mxu0 %v50
  %v503 = vpop.f32.mrb[0].mxu0
  %v504 = vadd.f32 %v300, %v503
  %v505 = vpop.f32.mrb[0].mxu0
  %506 = vmatprep.mubr.f32.mxu0 0.0
  %507 = vmatmul.mubr.f32.gmra.mrb[0].mxu0 %v51
  %v508 = vpop.f32.mrb[0].mxu0
  %v509 = vadd.f32 %v300, %v508
  %v510 = vpop.f32.mrb[0].mxu0
  %511 = vmatprep.mubr.f32.mxu0 0.0
  %512 = vmatmul.mubr.f32.gmra.mrb[0].mxu0 %v52
  %v513 = vpop.f32.mrb[0].mxu0
  %v514 = vadd.f32 %v300, %v513
  %v515 = vpop.f32.mrb[0].mxu0
  %516 = vmatprep.mubr.f32.mxu0 0.0
  %517 = vmatmul.mubr.f32.gmra.mrb[0].mxu0 %v53
  %v518 = vpop.f32.mrb[0].mxu0
  %v519 = vadd.f32 %v300, %v518
  %v520 = vpop.f32.mrb[0].mxu0
  %521 = vmatprep.mubr.f32.mxu0 0.0
  %522 = vmatmul.mubr.f32.gmra.mrb[0].mxu0 %v54
  %v523 = vpop.f32.mrb[0].mxu0
  %v524 = vadd.f32 %v300, %v523
  %v525 = vpop.f32.mrb[0].mxu0
  %526 = vmatprep.mubr.f32.mxu0 0.0
  %527 = vmatmul.mubr.f32.gmra.mrb[0].mxu0 %v55
  %v528 = vpop.f32.mrb[0].mxu0
  %v529 = vadd.f32 %v300, %v528
  %v530 = vpop.f32.mrb[0].mxu0
  %531 = vmatprep.mubr.f32.mxu0 0.0
  %532 = vmatmul.mubr.f32.gmra.mrb[0].mxu0 %v56
  %v533 = vpop.f32.mrb[0].mxu0
  %v534 = vadd.f32 %v300, %v533
  %v535 = vpop.f32.mrb[0].mxu0
  %536 = vmatprep.mubr.f32.mxu0 0.0
  %537 = vmatmul.mubr.f32.gmra.mrb[0].mxu0 %v57
  %v538 = vpop.f32.mrb[0].mxu0
  %v539 = vadd.f32 %v300, %v538
  %v540 = vpop.f32.mrb[0].mxu0
  %541 = vmatprep.mubr.f32.mxu0 0.0
  %542 = vmatmul.mubr.f32.gmra.mrb[0].mxu0 %v58
  %v543 = vpop.f32.mrb[0].mxu0
  %v544 = vadd.f32 %v300, %v543
  %v545 = vpop.f32.mrb[0].mxu0
  %546 = vmatprep.mubr.f32.mxu0 0.0
  %547 = vmatmul.mubr.f32.gmra.mrb[0].mxu0 %v59
  %v548 = vpop.f32.mrb[0].mxu0
  %v549 = vadd.f32 %v300, %v548
  %v550 = vpop.f32.mrb[0].mxu0
  %551 = vmatprep.mubr.f32.mxu0 0.0
  %552 = vmatmul.mubr.f32.gmra.mrb[0].mxu0 %v60
  %v553 = vpop.f32.mrb[0].mxu0
  %v554 = vadd.f32 %v300, %v553
  %v555 = vpop.f32.mrb[0].mxu0
  %556 = vmatprep.mubr.f32.mxu0 0.0
  %557 = vmatmul.mubr.f32.gmra.mrb[0].mxu0 %v61
  %v558 = vpop.f32.mrb[0].mxu0
  %v559 = vadd.f32 %v300, %v558
  %v560 = vpop.f32.mrb[0].mxu0
  %561 = vmatprep.mubr.f32.mxu0 0.0
  %562 = vmatmul.mubr.f32.gmra.mrb[0].mxu0 %v62
  %v563 = vpop.f32.mrb[0].mxu0
  %v564 = vadd.f32 %v300, %v563
  %v565 = vpop.f32.mrb[0].mxu0
  %566 = vmatprep.mubr.f32.mxu0 0.0
  %567 = vmatmul.mubr.f32.gmra.mrb[0].mxu0 %v63
  %v568 = vpop.f32.mrb[0].mxu0
  %v569 = vadd.f32 %v300, %v568
  %v570 = vpop.f32.mrb[0].mxu0
  %571 = vmatprep.mubr.f32.mxu0 0.0
  %572 = vmatmul.mubr.f32.gmra.mrb[0].mxu0 %v64
  %v573 = vpop.f32.mrb[0].mxu0
  %v574 = vadd.f32 %v300, %v573
  %v575 = vpop.f32.mrb[0].mxu0
  %576 = vmatprep.mubr.f32.mxu0 0.0
  %577 = vmatmul.mubr.f32.gmra.mrb[0].mxu0 %v65
  %v578 = vpop.f32.mrb[0].mxu0
  %v579 = vadd.f32 %v300, %v578
  %v580 = vpop.f32.mrb[0].mxu0
  %581 = vmatprep.mubr.f32.mxu0 0.0
  %582 = vmatmul.mubr.f32.gmra.mrb[0].mxu0 %v66
  %v583 = vpop.f32.mrb[0].mxu0
  %v584 = vadd.f32 %v300, %v583
  %v585 = vpop.f32.mrb[0].mxu0
  %586 = vmatprep.mubr.f32.mxu0 0.0
  %587 = vmatmul.mubr.f32.gmra.mrb[0].mxu0 %v67
  %v588 = vpop.f32.mrb[0].mxu0
  %v589 = vadd.f32 %v300, %v588
  %v590 = vpop.f32.mrb[0].mxu0
  %591 = vmatprep.mubr.f32.mxu0 0.0
  %592 = vmatmul.mubr.f32.gmra.mrb[0].mxu0 %v68
  %v593 = vpop.f32.mrb[0].mxu0
  %v594 = vadd.f32 %v300, %v593
  %v595 = vpop.f32.mrb[0].mxu0
  %596 = vmatprep.mubr.f32.mxu0 0.0
  %597 = vmatmul.mubr.f32.gmra.mrb[0].mxu0 %v69
  %v598 = vpop.f32.mrb[0].mxu0
  %v599 = vadd.f32 %v300, %v598
  %v600 = vpop.f32.mrb[0].mxu0
  %601 = vmatprep.mubr.f32.mxu0 0.0
  %602 = vmatmul.mubr.f32.gmra.mrb[0].mxu0 %v70
  %v603 = vpop.f32.mrb[0].mxu0
  %v604 = vadd.f32 %v300, %v603
  %v605 = vpop.f32.mrb[0].mxu0
  %606 = vmatprep.mubr.f32.mxu0 0.0
  %607 = vmatmul.mubr.f32.gmra.mrb[0].mxu0 %v71
  %v608 = vpop.f32.mrb[0].mxu0
  %v609 = vadd.f32 %v300, %v608
  %v610 = vpop.f32.mrb[0].mxu0
  %611 = vmatprep.mubr.f32.mxu0 0.0
  %612 = vmatmul.mubr.f32.gmra.mrb[0].mxu0 %v72
  %v613 = vpop.f32.mrb[0].mxu0
  %v614 = vadd.f32 %v300, %v613
  %v615 = vpop.f32.mrb[0].mxu0
  %616 = vmatprep.mubr.f32.mxu0 0.0
  %617 = vmatmul.mubr.f32.gmra.mrb[0].mxu0 %v73
  %v618 = vpop.f32.mrb[0].mxu0
  %v619 = vadd.f32 %v300, %v618
  %v620 = vpop.f32.mrb[0].mxu0
  %621 = vmatprep.mubr.f32.mxu0 0.0
  %622 = vmatmul.mubr.f32.gmra.mrb[0].mxu0 %v74
  %v623 = vpop.f32.mrb[0].mxu0
  %v624 = vadd.f32 %v300, %v623
  %v625 = vpop.f32.mrb[0].mxu0
  %626 = vmatprep.mubr.f32.mxu0 0.0
  %627 = vmatmul.mubr.f32.gmra.mrb[0].mxu0 %v75
  %v628 = vpop.f32.mrb[0].mxu0
  %v629 = vadd.f32 %v300, %v628
  %v630 = vpop.f32.mrb[0].mxu0
  %631 = vmatprep.mubr.f32.mxu0 0.0
  %632 = vmatmul.mubr.f32.gmra.mrb[0].mxu0 %v76
  %v633 = vpop.f32.mrb[0].mxu0
  %v634 = vadd.f32 %v300, %v633
  %v635 = vpop.f32.mrb[0].mxu0
  %636 = vmatprep.mubr.f32.mxu0 0.0
  %637 = vmatmul.mubr.f32.gmra.mrb[0].mxu0 %v77
  %v638 = vpop.f32.mrb[0].mxu0
  %v639 = vadd.f32 %v300, %v638
  %v640 = vpop.f32.mrb[0].mxu0
  %641 = vmatprep.mubr.f32.mxu0 0.0
  %642 = vmatmul.mubr.f32.gmra.mrb[0].mxu0 %v78
  %v643 = vpop.f32.mrb[0].mxu0
  %v644 = vadd.f32 %v300, %v643
  %v645 = vpop.f32.mrb[0].mxu0
  %646 = vmatprep.mubr.f32.mxu0 0.0
  %647 = vmatmul.mubr.f32.gmra.mrb[0].mxu0 %v79
  %v648 = vpop.f32.mrb[0].mxu0
  %v649 = vadd.f32 %v300, %v648
  %v650 = vpop.f32.mrb[0].mxu0
  %651 = vmatprep.mubr.f32.mxu0 0.0
  %652 = vmatmul.mubr.f32.gmra.mrb[0].mxu0 %v80
  %v653 = vpop.f32.mrb[0].mxu0
  %v654 = vadd.f32 %v300, %v653
  %v655 = vpop.f32.mrb[0].mxu0
  %656 = vmatprep.mubr.f32.mxu0 0.0
  %657 = vmatmul.mubr.f32.gmra.mrb[0].mxu0 %v81
  %v658 = vpop.f32.mrb[0].mxu0
  %v659 = vadd.f32 %v300, %v658
  %v660 = vpop.f32.mrb[0].mxu0
  %661 = vmatprep.mubr.f32.mxu0 0.0
  %662 = vmatmul.mubr.f32.gmra.mrb[0].mxu0 %v82
  %v663 = vpop.f32.mrb[0].mxu0
  %v664 = vadd.f32 %v300, %v663
  %v665 = vpop.f32.mrb[0].mxu0
  %666 = vmatprep.mubr.f32.mxu0 0.0
  %667 = vmatmul.mubr.f32.gmra.mrb[0].mxu0 %v83
  %v668 = vpop.f32.mrb[0].mxu0
  %v669 = vadd.f32 %v300, %v668
  %v670 = vpop.f32.mrb[0].mxu0
  %671 = vmatprep.mubr.f32.mxu0 0.0
  %672 = vmatmul.mubr.f32.gmra.mrb[0].mxu0 %v84
  %v673 = vpop.f32.mrb[0].mxu0
  %v674 = vadd.f32 %v300, %v673
  %v675 = vpop.f32.mrb[0].mxu0
  %676 = vmatprep.mubr.f32.mxu0 0.0
  %677 = vmatmul.mubr.f32.gmra.mrb[0].mxu0 %v85
  %v678 = vpop.f32.mrb[0].mxu0
  %v679 = vadd.f32 %v300, %v678
  %v680 = vpop.f32.mrb[0].mxu0
  %681 = vmatprep.mubr.f32.mxu0 0.0
  %682 = vmatmul.mubr.f32.gmra.mrb[0].mxu0 %v86
  %v683 = vpop.f32.mrb[0].mxu0
  %v684 = vadd.f32 %v300, %v683
  %v685 = vpop.f32.mrb[0].mxu0
  %686 = vmatprep.mubr.f32.mxu0 0.0
  %687 = vmatmul.mubr.f32.gmra.mrb[0].mxu0 %v87
  %v688 = vpop.f32.mrb[0].mxu0
  %v689 = vadd.f32 %v300, %v688
  %v690 = vpop.f32.mrb[0].mxu0
  %691 = vmatprep.mubr.f32.mxu0 0.0
  %692 = vmatmul.mubr.f32.gmra.mrb[0].mxu0 %v88
  %v693 = vpop.f32.mrb[0].mxu0
  %v694 = vadd.f32 %v300, %v693
  %v695 = vpop.f32.mrb[0].mxu0
  %696 = vmatprep.mubr.f32.mxu0 0.0
  %697 = vmatmul.mubr.f32.gmra.mrb[0].mxu0 %v89
  %v698 = vpop.f32.mrb[0].mxu0
  %v699 = vadd.f32 %v300, %v698
  %v700 = vpop.f32.mrb[0].mxu0
  %701 = vmatprep.mubr.f32.mxu0 0.0
  %702 = vmatmul.mubr.f32.gmra.mrb[0].mxu0 %v90
  %v703 = vpop.f32.mrb[0].mxu0
  %v704 = vadd.f32 %v300, %v703
  %v705 = vpop.f32.mrb[0].mxu0
  %706 = vmatprep.mubr.f32.mxu0 0.0
  %707 = vmatmul.mubr.f32.gmra.mrb[0].mxu0 %v91
  %v708 = vpop.f32.mrb[0].mxu0
  %v709 = vadd.f32 %v300, %v708
  %v710 = vpop.f32.mrb[0].mxu0
  %711 = vmatprep.mubr.f32.mxu0 0.0
  %712 = vmatmul.mubr.f32.gmra.mrb[0].mxu0 %v92
  %v713 = vpop.f32.mrb[0].mxu0
  %v714 = vadd.f32 %v300, %v713
  %v715 = vpop.f32.mrb[0].mxu0
  %716 = vmatprep.mubr.f32.mxu0 0.0
  %717 = vmatmul.mubr.f32.gmra.mrb[0].mxu0 %v93
  %v718 = vpop.f32.mrb[0].mxu0
  %v719 = vadd.f32 %v300, %v718
  %v720 = vpop.f32.mrb[0].mxu0
  %721 = vmatprep.mubr.f32.mxu0 0.0
  %722 = vmatmul.mubr.f32.gmra.mrb[0].mxu0 %v94
  %v723 = vpop.f32.mrb[0].mxu0
  %v724 = vadd.f32 %v300, %v723
  %v725 = vpop.f32.mrb[0].mxu0
  %726 = vmatprep.mubr.f32.mxu0 0.0
  %727 = vmatmul.mubr.f32.gmra.mrb[0].mxu0 %v95
  %v728 = vpop.f32.mrb[0].mxu0
  %v729 = vadd.f32 %v300, %v728
  %v730 = vpop.f32.mrb[0].mxu0
  %731 = vmatprep.mubr.f32.mxu0 0.0
  %732 = vmatmul.mubr.f32.gmra.mrb[0].mxu0 %v96
  %v733 = vpop.f32.mrb[0].mxu0
  %v734 = vadd.f32 %v300, %v733
  %v735 = vpop.f32.mrb[0].mxu0
  %736 = vmatprep.mubr.f32.mxu0 0.0
  %737 = vmatmul.mubr.f32.gmra.mrb[0].mxu0 %v97
  %v738 = vpop.f32.mrb[0].mxu0
  %v739 = vadd.f32 %v300, %v738
  %v740 = vpop.f32.mrb[0].mxu0
  %741 = vmatprep.mubr.f32.mxu0 0.0
  %742 = vmatmul.mubr.f32.gmra.mrb[0].mxu0 %v98
  %v743 = vpop.f32.mrb[0].mxu0
  %v744 = vadd.f32 %v300, %v743
  %v745 = vpop.f32.mrb[0].mxu0
  %746 = vmatprep.mubr.f32.mxu0 0.0
  %747 = vmatmul.mubr.f32.gmra.mrb[0].mxu0 %v99
  %v748 = vpop.f32.mrb[0].mxu0
  %v749 = vadd.f32 %v300, %v748
  %v750 = vpop.f32.mrb[0].mxu0
  %751 = vmatprep.mubr.f32.mxu0 0.0
  %752 = vmatmul.mubr.f32.gmra.mrb[0].mxu0 %v100
  %v753 = vpop.f32.mrb[0].mxu0
  %v754 = vadd.f32 %v300, %v753
  %v755 = vpop.f32.mrb[0].mxu0
  %756 = vmatprep.mubr.f32.mxu0 0.0
  %757 = vmatmul.mubr.f32.gmra.mrb[0].mxu0 %v101
  %v758 = vpop.f32.mrb[0].mxu0
  %v759 = vadd.f32 %v300, %v758
  %v760 = vpop.f32.mrb[0].mxu0
  %761 = vmatprep.mubr.f32.mxu0 0.0
  %762 = vmatmul.mubr.f32.gmra.mrb[0].mxu0 %v102
  %v763 = vpop.f32.mrb[0].mxu0
  %v764 = vadd.f32 %v300, %v763
  %v765 = vpop.f32.mrb[0].mxu0
  %766 = vmatprep.mubr.f32.mxu0 0.0
  %767 = vmatmul.mubr.f32.gmra.mrb[0].mxu0 %v103
  %v768 = vpop.f32.mrb[0].mxu0
  %v769 = vadd.f32 %v300, %v768
  %v770 = vpop.f32.mrb[0].mxu0
  %771 = vmatprep.mubr.f32.mxu0 0.0
  %772 = vmatmul.mubr.f32.gmra.mrb[0].mxu0 %v104
  %v773 = vpop.f32.mrb[0].mxu0
  %v774 = vadd.f32 %v300, %v773
  %v775 = vpop.f32.mrb[0].mxu0
  %776 = vmatprep.mubr.f32.mxu0 0.0
  %777 = vmatmul.mubr.f32.gmra.mrb[0].mxu0 %v105
  %v778 = vpop.f32.mrb[0].mxu0
  %v779 = vadd.f32 %v300, %v778
  %v780 = vpop.f32.mrb[0].mxu0
  %781 = vmatprep.mubr.f32.mxu0 0.0
  %782 = vmatmul.mubr.f32.gmra.mrb[0].mxu0 %v106
  %v783 = vpop.f32.mrb[0].mxu0
  %v784 = vadd.f32 %v300, %v783
  %v785 = vpop.f32.mrb[0].mxu0
  %786 = vmatprep.mubr.f32.mxu0 0.0
  %787 = vmatmul.mubr.f32.gmra.mrb[0].mxu0 %v107
  %v788 = vpop.f32.mrb[0].mxu0
  %v789 = vadd.f32 %v300, %v788
  %v790 = vpop.f32.mrb[0].mxu0
  %791 = vmatprep.mubr.f32.mxu0 0.0
  %792 = vmatmul.mubr.f32.gmra.mrb[0].mxu0 %v108
  %v793 = vpop.f32.mrb[0].mxu0
  %v794 = vadd.f32 %v300, %v793
  %v795 = vpop.f32.mrb[0].mxu0
  %796 = vmatprep.mubr.f32.mxu0 0.0
  %797 = vmatmul.mubr.f32.gmra.mrb[0].mxu0 %v109
  %v798 = vpop.f32.mrb[0].mxu0
  %v799 = vadd.f32 %v300, %v798
  %v800 = vpop.f32.mrb[0].mxu0
  %801 = vmatprep.mubr.f32.mxu0 0.0
  %802 = vmatmul.mubr.f32.gmra.mrb[0].mxu0 %v110
  %v803 = vpop.f32.mrb[0].mxu0
  %v804 = vadd.f32 %v300, %v803
  %v805 = vpop.f32.mrb[0].mxu0
  %806 = vmatprep.mubr.f32.mxu0 0.0
  %807 = vmatmul.mubr.f32.gmra.mrb[0].mxu0 %v111
  %v808 = vpop.f32.mrb[0].mxu0
  %v809 = vadd.f32 %v300, %v808
  %v810 = vpop.f32.mrb[0].mxu0
  %811 = vmatprep.mubr.f32.mxu0 0.0
  %812 = vmatmul.mubr.f32.gmra.mrb[0].mxu0 %v112
  %v813 = vpop.f32.mrb[0].mxu0
  %v814 = vadd.f32 %v300, %v813
  %v815 = vpop.f32.mrb[0].mxu0
  %816 = vmatprep.mubr.f32.mxu0 0.0
  %817 = vmatmul.mubr.f32.gmra.mrb[0].mxu0 %v113
  %v818 = vpop.f32.mrb[0].mxu0
  %v819 = vadd.f32 %v300, %v818
  %v820 = vpop.f32.mrb[0].mxu0
  %821 = vmatprep.mubr.f32.mxu0 0.0
  %822 = vmatmul.mubr.f32.gmra.mrb[0].mxu0 %v114
  %v823 = vpop.f32.mrb[0].mxu0
  %v824 = vadd.f32 %v300, %v823
  %v825 = vpop.f32.mrb[0].mxu0
  %826 = vmatprep.mubr.f32.mxu0 0.0
  %827 = vmatmul.mubr.f32.gmra.mrb[0].mxu0 %v115
  %v828 = vpop.f32.mrb[0].mxu0
  %v829 = vadd.f32 %v300, %v828
  %v830 = vpop.f32.mrb[0].mxu0
  %831 = vmatprep.mubr.f32.mxu0 0.0
  %832 = vmatmul.mubr.f32.gmra.mrb[0].mxu0 %v116
  %v833 = vpop.f32.mrb[0].mxu0
  %v834 = vadd.f32 %v300, %v833
  %v835 = vpop.f32.mrb[0].mxu0
  %836 = vmatprep.mubr.f32.mxu0 0.0
  %837 = vmatmul.mubr.f32.gmra.mrb[0].mxu0 %v117
  %v838 = vpop.f32.mrb[0].mxu0
  %v839 = vadd.f32 %v300, %v838
  %v840 = vpop.f32.mrb[0].mxu0
  %841 = vmatprep.mubr.f32.mxu0 0.0
  %842 = vmatmul.mubr.f32.gmra.mrb[0].mxu0 %v118
  %v843 = vpop.f32.mrb[0].mxu0
  %v844 = vadd.f32 %v300, %v843
  %v845 = vpop.f32.mrb[0].mxu0
  %846 = vmatprep.mubr.f32.mxu0 0.0
  %847 = vmatmul.mubr.f32.gmra.mrb[0].mxu0 %v119
  %v848 = vpop.f32.mrb[0].mxu0
  %v849 = vadd.f32 %v300, %v848
  %v850 = vpop.f32.mrb[0].mxu0
  %851 = vmatprep.mubr.f32.mxu0 0.0
  %852 = vmatmul.mubr.f32.gmra.mrb[0].mxu0 %v120
  %v853 = vpop.f32.mrb[0].mxu0
  %v854 = vadd.f32 %v300, %v853
  %v855 = vpop.f32.mrb[0].mxu0
  %856 = vmatprep.mubr.f32.mxu0 0.0
  %857 = vmatmul.mubr.f32.gmra.mrb[0].mxu0 %v121
  %v858 = vpop.f32.mrb[0].mxu0
  %v859 = vadd.f32 %v300, %v858
  %v860 = vpop.f32.mrb[0].mxu0
  %861 = vmatprep.mubr.f32.mxu0 0.0
  %862 = vmatmul.mubr.f32.gmra.mrb[0].mxu0 %v122
  %v863 = vpop.f32.mrb[0].mxu0
  %v864 = vadd.f32 %v300, %v863
  %v865 = vpop.f32.mrb[0].mxu0
  %866 = vmatprep.mubr.f32.mxu0 0.0
  %867 = vmatmul.mubr.f32.gmra.mrb[0].mxu0 %v123
  %v868 = vpop.f32.mrb[0].mxu0
  %v869 = vadd.f32 %v300, %v868
  %v870 = vpop.f32.mrb[0].mxu0
  %871 = vmatprep.mubr.f32.mxu0 0.0
  %872 = vmatmul.mubr.f32.gmra.mrb[0].mxu0 %v124
  %v873 = vpop.f32.mrb[0].mxu0
  %v874 = vadd.f32 %v300, %v873
  %v875 = vpop.f32.mrb[0].mxu0
  %876 = vmatprep.mubr.f32.mxu0 0.0
  %877 = vmatmul.mubr.f32.gmra.mrb[0].mxu0 %v125
  %v878 = vpop.f32.mrb[0].mxu0
  %v879 = vadd.f32 %v300, %v878
  %v880 = vpop.f32.mrb[0].mxu0
  %881 = vmatprep.mubr.f32.mxu0 0.0
  %882 = vmatmul.mubr.f32.gmra.mrb[0].mxu0 %v126
  %v883 = vpop.f32.mrb[0].mxu0
  %v884 = vadd.f32 %v300, %v883
  %v885 = vpop.f32.mrb[0].mxu0
  %886 = vmatprep.mubr.f32.mxu0 0.0
  %887 = vmatmul.mubr.f32.gmra.mrb[0].mxu0 %v127
  %v888 = vpop.f32.mrb[0].mxu0
  %v889 = vadd.f32 %v300, %v888
  %v890 = vpop.f32.mrb[0].mxu0
  %891 = vmatprep.mubr.f32.mxu0 0.0
  %892 = vmatmul.mubr.f32.gmra.mrb[0].mxu0 %v128
  %v893 = vpop.f32.mrb[0].mxu0
  %v894 = vadd.f32 %v300, %v893
  %v895 = vpop.f32.mrb[0].mxu0
  %896 = vmatprep.mubr.f32.mxu0 0.0
  %897 = vmatmul.mubr.f32.gmra.mrb[0].mxu0 %v129
  %v898 = vpop.f32.mrb[0].mxu0
  %v899 = vadd.f32 %v300, %v898
  %v900 = vpop.f32.mrb[0].mxu0
  %901 = vmatprep.mubr.f32.mxu0 0.0
  %902 = vmatmul.mubr.f32.gmra.mrb[0].mxu0 %v130
  %v903 = vpop.f32.mrb[0].mxu0
  %v904 = vadd.f32 %v300, %v903
  %v905 = vpop.f32.mrb[0].mxu0
  %906 = vmatprep.mubr.f32.mxu0 0.0
  %907 = vmatmul.mubr.f32.gmra.mrb[0].mxu0 %v131
  %v908 = vpop.f32.mrb[0].mxu0
  %v909 = vadd.f32 %v300, %v908
  %v910 = vpop.f32.mrb[0].mxu0
  %911 = vmatprep.mubr.f32.mxu0 0.0
  %912 = vmatmul.mubr.f32.gmra.mrb[0].mxu0 %v132
  %v913 = vpop.f32.mrb[0].mxu0
  %v914 = vadd.f32 %v300, %v913
  %v915 = vpop.f32.mrb[0].mxu0
  %916 = vmatprep.mubr.f32.mxu0 0.0
  %917 = vmatmul.mubr.f32.gmra.mrb[0].mxu0 %v133
  %v918 = vpop.f32.mrb[0].mxu0
  %v919 = vadd.f32 %v300, %v918
  %v920 = vpop.f32.mrb[0].mxu0
  %921 = vmatprep.mubr.f32.mxu0 0.0
  %922 = vmatmul.mubr.f32.gmra.mrb[0].mxu0 %v134
  %v923 = vpop.f32.mrb[0].mxu0
  %v924 = vadd.f32 %v300, %v923
  %v925 = vpop.f32.mrb[0].mxu0
  %926 = vmatprep.mubr.f32.mxu0 0.0
  %927 = vmatmul.mubr.f32.gmra.mrb[0].mxu0 %v135
  %v928 = vpop.f32.mrb[0].mxu0
  %v929 = vadd.f32 %v300, %v928
  %v930 = vpop.f32.mrb[0].mxu0
  %931 = vmatprep.mubr.f32.mxu0 0.0
  %932 = vmatmul.mubr.f32.gmra.mrb[0].mxu0 %v136
  %v933 = vpop.f32.mrb[0].mxu0
  %v934 = vadd.f32 %v300, %v933
  %v935 = vpop.f32.mrb[0].mxu0
  %936 = vmatprep.mubr.f32.mxu0 0.0
  %937 = vmatmul.mubr.f32.gmra.mrb[0].mxu0 %v137
  %v938 = vpop.f32.mrb[0].mxu0
  %v939 = vadd.f32 %v300, %v938
  %v940 = vpop.f32.mrb[0].mxu0
  %941 = vmatprep.mubr.f32.mxu0 0.0
  %942 = vmatmul.mubr.f32.gmra.mrb[0].mxu0 %v138
  %v943 = vpop.f32.mrb[0].mxu0
  %v944 = vadd.f32 %v300, %v943
  %v945 = vpop.f32.mrb[0].mxu0
  %946 = vmatprep.mubr.f32.mxu0 0.0
  %947 = vmatmul.mubr.f32.gmra.mrb[0].mxu0 %v139
  %v948 = vpop.f32.mrb[0].mxu0
  %v949 = vadd.f32 %v300, %v948
  %v950 = vpop.f32.mrb[0].mxu0
  %951 = vmatprep.mubr.f32.mxu0 0.0
  %952 = vmatmul.mubr.f32.gmra.mrb[0].mxu0 %v140
  %v953 = vpop.f32.mrb[0].mxu0
  %v954 = vadd.f32 %v300, %v953
  %v955 = vpop.f32.mrb[0].mxu0
  %956 = vmatprep.mubr.f32.mxu0 0.0
  %957 = vmatmul.mubr.f32.gmra.mrb[0].mxu0 %v141
  %v958 = vpop.f32.mrb[0].mxu0
  %v959 = vadd.f32 %v300, %v958
  %v960 = vpop.f32.mrb[0].mxu0
  %961 = vmatprep.mubr.f32.mxu0 0.0
  %962 = vmatmul.mubr.f32.gmra.mrb[0].mxu0 %v142
  %v963 = vpop.f32.mrb[0].mxu0
  %v964 = vadd.f32 %v300, %v963
  %v965 = vpop.f32.mrb[0].mxu0
  %966 = vmatprep.mubr.f32.mxu0 0.0
  %967 = vmatmul.mubr.f32.gmra.mrb[0].mxu0 %v143
  %v968 = vpop.f32.mrb[0].mxu0
  %v969 = vadd.f32 %v300, %v968
  %v970 = vpop.f32.mrb[0].mxu0
  %971 = vmatprep.mubr.f32.mxu0 0.0
  %972 = vmatmul.mubr.f32.gmra.mrb[0].mxu0 %v144
  %v973 = vpop.f32.mrb[0].mxu0
  %v974 = vadd.f32 %v300, %v973
  %v975 = vpop.f32.mrb[0].mxu0
  %976 = vmatprep.mubr.f32.mxu0 0.0
  %977 = vmatmul.mubr.f32.gmra.mrb[0].mxu0 %v145
  %v978 = vpop.f32.mrb[0].mxu0
  %v979 = vadd.f32 %v300, %v978
  %v980 = vpop.f32.mrb[0].mxu0
  %981 = vmatprep.mubr.f32.mxu0 0.0
  %982 = vmatmul.mubr.f32.gmra.mrb[0].mxu0 %v146
  %v983 = vpop.f32.mrb[0].mxu0
  %v984 = vadd.f32 %v300, %v983
  %v985 = vpop.f32.mrb[0].mxu0
  %986 = vmatprep.mubr.f32.mxu0 0.0
  %987 = vmatmul.mubr.f32.gmra.mrb[0].mxu0 %v147
  %v988 = vpop.f32.mrb[0].mxu0
  %v989 = vadd.f32 %v300, %v988
  %v990 = vpop.f32.mrb[0].mxu0
  %991 = vmatprep.mubr.f32.mxu0 0.0
  %992 = vmatmul.mubr.f32.gmra.mrb[0].mxu0 %v148
  %v993 = vpop.f32.mrb[0].mxu0
  %v994 = vadd.f32 %v300, %v993
  %v995 = vpop.f32.mrb[0].mxu0
  %996 = vmatprep.mubr.f32.mxu0 0.0
  %997 = vmatmul.mubr.f32.gmra.mrb[0].mxu0 %v149
  %v998 = vpop.f32.mrb[0].mxu0
  %v999 = vadd.f32 %v300, %v998
  %v1000 = vpop.f32.mrb[0].mxu0
  %1001 = vmatprep.mubr.f32.mxu0 0.0
  %1002 = vmatmul.mubr.f32.gmra.mrb[0].mxu0 %v150
  %v1003 = vpop.f32.mrb[0].mxu0
  %v1004 = vadd.f32 %v300, %v1003
  %v1005 = vpop.f32.mrb[0].mxu0
  %1006 = vmatprep.mubr.f32.mxu0 0.0
  %1007 = vmatmul.mubr.f32.gmra.mrb[0].mxu0 %v151
  %v1008 = vpop.f32.mrb[0].mxu0
  %v1009 = vadd.f32 %v300, %v1008
  %v1010 = vpop.f32.mrb[0].mxu0
  %1011 = vmatprep.mubr.f32.mxu0 0.0
  %1012 = vmatmul.mubr.f32.gmra.mrb[0].mxu0 %v152
  %v1013 = vpop.f32.mrb[0].mxu0
  %v1014 = vadd.f32 %v300, %v1013
  %v1015 = vpop.f32.mrb[0].mxu0
  %1016 = vmatprep.mubr.f32.mxu0 0.0
  %1017 = vmatmul.mubr.f32.gmra.mrb[0].mxu0 %v153
  %v1018 = vpop.f32.mrb[0].mxu0
  %v1019 = vadd.f32 %v300, %v1018
  %v1020 = vpop.f32.mrb[0].mxu0
  %1021 = vmatprep.mubr.f32.mxu0 0.0
  %1022 = vmatmul.mubr.f32.gmra.mrb[0].mxu0 %v154
  %v1023 = vpop.f32.mrb[0].mxu0
  %v1024 = vadd.f32 %v300, %v1023
  %v1025 = vpop.f32.mrb[0].mxu0
  %1026 = vmatprep.mubr.f32.mxu0 0.0
  %1027 = vmatmul.mubr.f32.gmra.mrb[0].mxu0 %v155
  %v1028 = vpop.f32.mrb[0].mxu0
  %v1029 = vadd.f32 %v300, %v1028
  %v1030 = vpop.f32.mrb[0].mxu0
  %1031 = vmatprep.mubr.f32.mxu0 0.0
  %1032 = vmatmul.mubr.f32.gmra.mrb[0].mxu0 %v156
  %v1033 = vpop.f32.mrb[0].mxu0
  %v1034 = vadd.f32 %v300, %v1033
  %v1035 = vpop.f32.mrb[0].mxu0
  %1036 = vmatprep.mubr.f32.mxu0 0.0
  %1037 = vmatmul.mubr.f32.gmra.mrb[0].mxu0 %v157
  %v1038 = vpop.f32.mrb[0].mxu0
  %v1039 = vadd.f32 %v300, %v1038
  %v1040 = vpop.f32.mrb[0].mxu0
  %1041 = vmatprep.mubr.f32.mxu0 0.0
  %1042 = vmatmul.mubr.f32.gmra.mrb[0].mxu0 %v158
  %v1043 = vpop.f32.mrb[0].mxu0
  %v1044 = vadd.f32 %v300, %v1043
  %v1045 = vpop.f32.mrb[0].mxu0
  %1046 = vmatprep.mubr.f32.mxu0 0.0
  %1047 = vmatmul.mubr.f32.gmra.mrb[0].mxu0 %v159
  %v1048 = vpop.f32.mrb[0].mxu0
  %v1049 = vadd.f32 %v300, %v1048
  %v1050 = vpop.f32.mrb[0].mxu0
  %1051 = vmatprep.mubr.f32.mxu0 0.0
  %1052 = vmatmul.mubr.f32.gmra.mrb[0].mxu0 %v160
  %v1053 = vpop.f32.mrb[0].mxu0
  %v1054 = vadd.f32 %v300, %v1053
  %v1055 = vpop.f32.mrb[0].mxu0
  %1056 = vmatprep.mubr.f32.mxu0 0.0
  %1057 = vmatmul.mubr.f32.gmra.mrb[0].mxu0 %v161
  %v1058 = vpop.f32.mrb[0].mxu0
  %v1059 = vadd.f32 %v300, %v1058
  %v1060 = vpop.f32.mrb[0].mxu0
  %1061 = vmatprep.mubr.f32.mxu0 0.0
  %1062 = vmatmul.mubr.f32.gmra.mrb[0].mxu0 %v162
  %v1063 = vpop.f32.mrb[0].mxu0
  %v1064 = vadd.f32 %v300, %v1063
  %v1065 = vpop.f32.mrb[0].mxu0
  %1066 = vmatprep.mubr.f32.mxu0 0.0
  %1067 = vmatmul.mubr.f32.gmra.mrb[0].mxu0 %v163
  %v1068 = vpop.f32.mrb[0].mxu0
  %v1069 = vadd.f32 %v300, %v1068
  %v1070 = vpop.f32.mrb[0].mxu0
  %1071 = vmatprep.mubr.f32.mxu0 0.0
  %1072 = vmatmul.mubr.f32.gmra.mrb[0].mxu0 %v164
  %v1073 = vpop.f32.mrb[0].mxu0
  %v1074 = vadd.f32 %v300, %v1073
  %v1075 = vpop.f32.mrb[0].mxu0
  %1076 = vmatprep.mubr.f32.mxu0 0.0
  %1077 = vmatmul.mubr.f32.gmra.mrb[0].mxu0 %v165
  %v1078 = vpop.f32.mrb[0].mxu0
  %v1079 = vadd.f32 %v300, %v1078
  %v1080 = vpop.f32.mrb[0].mxu0
  %1081 = vmatprep.mubr.f32.mxu0 0.0
  %1082 = vmatmul.mubr.f32.gmra.mrb[0].mxu0 %v166
  %v1083 = vpop.f32.mrb[0].mxu0
  %v1084 = vadd.f32 %v300, %v1083
  %v1085 = vpop.f32.mrb[0].mxu0
  %1086 = vmatprep.mubr.f32.mxu0 0.0
  %1087 = vmatmul.mubr.f32.gmra.mrb[0].mxu0 %v167
  %v1088 = vpop.f32.mrb[0].mxu0
  %v1089 = vadd.f32 %v300, %v1088
  %v1090 = vpop.f32.mrb[0].mxu0
  %1091 = vmatprep.mubr.f32.mxu0 0.0
  %1092 = vmatmul.mubr.f32.gmra.mrb[0].mxu0 %v168
  %v1093 = vpop.f32.mrb[0].mxu0
  %v1094 = vadd.f32 %v300, %v1093
  %v1095 = vpop.f32.mrb[0].mxu0
  %1096 = vmatprep.mubr.f32.mxu0 0.0
  %1097 = vmatmul.mubr.f32.gmra.mrb[0].mxu0 %v169
  %v1098 = vpop.f32.mrb[0].mxu0
  %v1099 = vadd.f32 %v300, %v1098
  %v1100 = vpop.f32.mrb[0].mxu0
  %1101 = vmatprep.mubr.f32.mxu0 0.0
  %1102 = vmatmul.mubr.f32.gmra.mrb[0].mxu0 %v170
  %v1103 = vpop.f32.mrb[0].mxu0
  %v1104 = vadd.f32 %v300, %v1103
  %v1105 = vpop.f32.mrb[0].mxu0
  %1106 = vmatprep.mubr.f32.mxu0 0.0
  %1107 = vmatmul.mubr.f32.gmra.mrb[0].mxu0 %v171
  %v1108 = vpop.f32.mrb[0].mxu0
  %v1109 = vadd.f32 %v300, %v1108
  %v1110 = vpop.f32.mrb[0].mxu0
  %1111 = vmatprep.mubr.f32.mxu0 0.0
  %1112 = vmatmul.mubr.f32.gmra.mrb[0].mxu0 %v172
  %v1113 = vpop.f32.mrb[0].mxu0
  %v1114 = vadd.f32 %v300, %v1113
  %v1115 = vpop.f32.mrb[0].mxu0
  %1116 = vmatprep.mubr.f32.mxu0 0.0
  %1117 = vmatmul.mubr.f32.gmra.mrb[0].mxu0 %v173
  %v1118 = vpop.f32.mrb[0].mxu0
  %v1119 = vadd.f32 %v300, %v1118
  %v1120 = vpop.f32.mrb[0].mxu0
  %1121 = vmatprep.mubr.f32.mxu0 0.0
  %1122 = vmatmul.mubr.f32.gmra.mrb[0].mxu0 %v174
  %v1123 = vpop.f32.mrb[0].mxu0
  %v1124 = vadd.f32 %v300, %v1123
  %v1125 = vpop.f32.mrb[0].mxu0
  %1126 = vmatprep.mubr.f32.mxu0 0.0
  %1127 = vmatmul.mubr.f32.gmra.mrb[0].mxu0 %v175
  %v1128 = vpop.f32.mrb[0].mxu0
  %v1129 = vadd.f32 %v300, %v1128
  %v1130 = vpop.f32.mrb[0].mxu0
  %1131 = vmatprep.mubr.f32.mxu0 0.0
  %1132 = vmatmul.mubr.f32.gmra.mrb[0].mxu0 %v176
  %v1133 = vpop.f32.mrb[0].mxu0
  %v1134 = vadd.f32 %v300, %v1133
  %v1135 = vpop.f32.mrb[0].mxu0
  %1136 = vmatprep.mubr.f32.mxu0 0.0
  %1137 = vmatmul.mubr.f32.gmra.mrb[0].mxu0 %v177
  %v1138 = vpop.f32.mrb[0].mxu0
  %v1139 = vadd.f32 %v300, %v1138
  %v1140 = vpop.f32.mrb[0].mxu0
  %1141 = vmatprep.mubr.f32.mxu0 0.0
  %1142 = vmatmul.mubr.f32.gmra.mrb[0].mxu0 %v178
  %v1143 = vpop.f32.mrb[0].mxu0
  %v1144 = vadd.f32 %v300, %v1143
  %v1145 = vpop.f32.mrb[0].mxu0
  %1146 = vmatprep.mubr.f32.mxu0 0.0
  %1147 = vmatmul.mubr.f32.gmra.mrb[0].mxu0 %v179
  %v1148 = vpop.f32.mrb[0].mxu0
  %v1149 = vadd.f32 %v300, %v1148
  %v1150 = vpop.f32.mrb[0].mxu0
  %1151 = vmatprep.mubr.f32.mxu0 0.0
  %1152 = vmatmul.mubr.f32.gmra.mrb[0].mxu0 %v180
  %v1153 = vpop.f32.mrb[0].mxu0
  %v1154 = vadd.f32 %v300, %v1153
  %v1155 = vpop.f32.mrb[0].mxu0
  %1156 = vmatprep.mubr.f32.mxu0 0.0
  %1157 = vmatmul.mubr.f32.gmra.mrb[0].mxu0 %v181
  %v1158 = vpop.f32.mrb[0].mxu0
  %v1159 = vadd.f32 %v300, %v1158
  %v1160 = vpop.f32.mrb[0].mxu0
  %1161 = vmatprep.mubr.f32.mxu0 0.0
  %1162 = vmatmul.mubr.f32.gmra.mrb[0].mxu0 %v182
  %v1163 = vpop.f32.mrb[0].mxu0
  %v1164 = vadd.f32 %v300, %v1163
  %v1165 = vpop.f32.mrb[0].mxu0
  %1166 = vmatprep.mubr.f32.mxu0 0.0
  %1167 = vmatmul.mubr.f32.gmra.mrb[0].mxu0 %v183
  %v1168 = vpop.f32.mrb[0].mxu0
  %v1169 = vadd.f32 %v300, %v1168
  %v1170 = vpop.f32.mrb[0].mxu0
  %1171 = vmatprep.mubr.f32.mxu0 0.0
  %1172 = vmatmul.mubr.f32.gmra.mrb[0].mxu0 %v184
  %v1173 = vpop.f32.mrb[0].mxu0
  %v1174 = vadd.f32 %v300, %v1173
  %v1175 = vpop.f32.mrb[0].mxu0
  %1176 = vmatprep.mubr.f32.mxu0 0.0
  %1177 = vmatmul.mubr.f32.gmra.mrb[0].mxu0 %v185
  %v1178 = vpop.f32.mrb[0].mxu0
  %v1179 = vadd.f32 %v300, %v1178
  %v1180 = vpop.f32.mrb[0].mxu0
  %1181 = vmatprep.mubr.f32.mxu0 0.0
  %1182 = vmatmul.mubr.f32.gmra.mrb[0].mxu0 %v186
  %v1183 = vpop.f32.mrb[0].mxu0
  %v1184 = vadd.f32 %v300, %v1183
  %v1185 = vpop.f32.mrb[0].mxu0
  %1186 = vmatprep.mubr.f32.mxu0 0.0
  %1187 = vmatmul.mubr.f32.gmra.mrb[0].mxu0 %v187
  %v1188 = vpop.f32.mrb[0].mxu0
  %v1189 = vadd.f32 %v300, %v1188
  %v1190 = vpop.f32.mrb[0].mxu0
  %1191 = vmatprep.mubr.f32.mxu0 0.0
  %1192 = vmatmul.mubr.f32.gmra.mrb[0].mxu0 %v188
  %v1193 = vpop.f32.mrb[0].mxu0
  %v1194 = vadd.f32 %v300, %v1193
  %v1195 = vpop.f32.mrb[0].mxu0
  %1196 = vmatprep.mubr.f32.mxu0 0.0
  %1197 = vmatmul.mubr.f32.gmra.mrb[0].mxu0 %v189
  %v1198 = vpop.f32.mrb[0].mxu0
  %v1199 = vadd.f32 %v300, %v1198
  %v1200 = vpop.f32.mrb[0].mxu0
  %1201 = vmatprep.mubr.f32.mxu0 0.0
  %1202 = vmatmul.mubr.f32.gmra.mrb[0].mxu0 %v190
  %v1203 = vpop.f32.mrb[0].mxu0
  %v1204 = vadd.f32 %v300, %v1203
  %v1205 = vpop.f32.mrb[0].mxu0
  %1206 = vmatprep.mubr.f32.mxu0 0.0
  %1207 = vmatmul.mubr.f32.gmra.mrb[0].mxu0 %v191
  %v1208 = vpop.f32.mrb[0].mxu0
  %v1209 = vadd.f32 %v300, %v1208
  %v1210 = vpop.f32.mrb[0].mxu0
  %1211 = vmatprep.mubr.f32.mxu0 0.0
  %1212 = vmatmul.mubr.f32.gmra.mrb[0].mxu0 %v192
  %v1213 = vpop.f32.mrb[0].mxu0
  %v1214 = vadd.f32 %v300, %v1213
  %v1215 = vpop.f32.mrb[0].mxu0
  %1216 = vmatprep.mubr.f32.mxu0 0.0
  %1217 = vmatmul.mubr.f32.gmra.mrb[0].mxu0 %v193
  %v1218 = vpop.f32.mrb[0].mxu0
  %v1219 = vadd.f32 %v300, %v1218
  %v1220 = vpop.f32.mrb[0].mxu0
  %1221 = vmatprep.mubr.f32.mxu0 0.0
  %1222 = vmatmul.mubr.f32.gmra.mrb[0].mxu0 %v194
  %v1223 = vpop.f32.mrb[0].mxu0
  %v1224 = vadd.f32 %v300, %v1223
  %v1225 = vpop.f32.mrb[0].mxu0
  %1226 = vmatprep.mubr.f32.mxu0 0.0
  %1227 = vmatmul.mubr.f32.gmra.mrb[0].mxu0 %v195
  %v1228 = vpop.f32.mrb[0].mxu0
  %v1229 = vadd.f32 %v300, %v1228
  %v1230 = vpop.f32.mrb[0].mxu0
  %1231 = vmatprep.mubr.f32.mxu0 0.0
  %1232 = vmatmul.mubr.f32.gmra.mrb[0].mxu0 %v196
  %v1233 = vpop.f32.mrb[0].mxu0
  %v1234 = vadd.f32 %v300, %v1233
  %v1235 = vpop.f32.mrb[0].mxu0
  %1236 = vmatprep.mubr.f32.mxu0 0.0
  %1237 = vmatmul.mubr.f32.gmra.mrb[0].mxu0 %v197
  %v1238 = vpop.f32.mrb[0].mxu0
  %v1239 = vadd.f32 %v300, %v1238
  %v1240 = vpop.f32.mrb[0].mxu0
  %1241 = vmatprep.mubr.f32.mxu0 0.0
  %1242 = vmatmul.mubr.f32.gmra.mrb[0].mxu0 %v198
  %v1243 = vpop.f32.mrb[0].mxu0
  %v1244 = vadd.f32 %v300, %v1243
  %v1245 = vpop.f32.mrb[0].mxu0
  %1246 = vmatprep.mubr.f32.mxu0 0.0
  %1247 = vmatmul.mubr.f32.gmra.mrb[0].mxu0 %v199
  %v1248 = vpop.f32.mrb[0].mxu0
  %v1249 = vadd.f32 %v300, %v1248
  %v1250 = vpop.f32.mrb[0].mxu0
  %1251 = vmatprep.mubr.f32.mxu0 0.0
  %1252 = vmatmul.mubr.f32.gmra.mrb[0].mxu0 %v200
  %v1253 = vpop.f32.mrb[0].mxu0
  %v1254 = vadd.f32 %v300, %v1253
  %v1255 = vpop.f32.mrb[0].mxu0
  %1256 = vmatprep.mubr.f32.mxu0 0.0
  %1257 = vmatmul.mubr.f32.gmra.mrb[0].mxu0 %v201
  %v1258 = vpop.f32.mrb[0].mxu0
  %v1259 = vadd.f32 %v300, %v1258
  %v1260 = vpop.f32.mrb[0].mxu0
  %1261 = vmatprep.mubr.f32.mxu0 0.0
  %1262 = vmatmul.mubr.f32.gmra.mrb[0].mxu0 %v202
  %v1263 = vpop.f32.mrb[0].mxu0
  %v1264 = vadd.f32 %v300, %v1263
  %v1265 = vpop.f32.mrb[0].mxu0
  %1266 = vmatprep.mubr.f32.mxu0 0.0
  %1267 = vmatmul.mubr.f32.gmra.mrb[0].mxu0 %v203
  %v1268 = vpop.f32.mrb[0].mxu0
  %v1269 = vadd.f32 %v300, %v1268
  %v1270 = vpop.f32.mrb[0].mxu0
  %1271 = vmatprep.mubr.f32.mxu0 0.0
  %1272 = vmatmul.mubr.f32.gmra.mrb[0].mxu0 %v204
  %v1273 = vpop.f32.mrb[0].mxu0
  %v1274 = vadd.f32 %v300, %v1273
  %v1275 = vpop.f32.mrb[0].mxu0
  %1276 = vmatprep.mubr.f32.mxu0 0.0
  %1277 = vmatmul.mubr.f32.gmra.mrb[0].mxu0 %v205
  %v1278 = vpop.f32.mrb[0].mxu0
  %v1279 = vadd.f32 %v300, %v1278
  %v1280 = vpop.f32.mrb[0].mxu0
  %1281 = vmatprep.mubr.f32.mxu0 0.0
  %1282 = vmatmul.mubr.f32.gmra.mrb[0].mxu0 %v206
  %v1283 = vpop.f32.mrb[0].mxu0
  %v1284 = vadd.f32 %v300, %v1283
  %v1285 = vpop.f32.mrb[0].mxu0
  %1286 = vmatprep.mubr.f32.mxu0 0.0
  %1287 = vmatmul.mubr.f32.gmra.mrb[0].mxu0 %v207
  %v1288 = vpop.f32.mrb[0].mxu0
  %v1289 = vadd.f32 %v300, %v1288
  %v1290 = vpop.f32.mrb[0].mxu0
  %1291 = vmatprep.mubr.f32.mxu0 0.0
  %1292 = vmatmul.mubr.f32.gmra.mrb[0].mxu0 %v208
  %v1293 = vpop.f32.mrb[0].mxu0
  %v1294 = vadd.f32 %v300, %v1293
  %v1295 = vpop.f32.mrb[0].mxu0
  %1296 = vmatprep.mubr.f32.mxu0 0.0
  %1297 = vmatmul.mubr.f32.gmra.mrb[0].mxu0 %v209
  %v1298 = vpop.f32.mrb[0].mxu0
  %v1299 = vadd.f32 %v300, %v1298
  %v1300 = vpop.f32.mrb[0].mxu0
  %1301 = vmatprep.mubr.f32.mxu0 0.0
  %1302 = vmatmul.mubr.f32.gmra.mrb[0].mxu0 %v210
  %v1303 = vpop.f32.mrb[0].mxu0
  %v1304 = vadd.f32 %v300, %v1303
  %v1305 = vpop.f32.mrb[0].mxu0
  %1306 = vmatprep.mubr.f32.mxu0 0.0
  %1307 = vmatmul.mubr.f32.gmra.mrb[0].mxu0 %v211
  %v1308 = vpop.f32.mrb[0].mxu0
  %v1309 = vadd.f32 %v300, %v1308
  %v1310 = vpop.f32.mrb[0].mxu0
  %1311 = vmatprep.mubr.f32.mxu0 0.0
  %1312 = vmatmul.mubr.f32.gmra.mrb[0].mxu0 %v212
  %v1313 = vpop.f32.mrb[0].mxu0
  %v1314 = vadd.f32 %v300, %v1313
  %v1315 = vpop.f32.mrb[0].mxu0
  %1316 = vmatprep.mubr.f32.mxu0 0.0
  %1317 = vmatmul.mubr.f32.gmra.mrb[0].mxu0 %v213
  %v1318 = vpop.f32.mrb[0].mxu0
  %v1319 = vadd.f32 %v300, %v1318
  %v1320 = vpop.f32.mrb[0].mxu0
  %1321 = vmatprep.mubr.f32.mxu0 0.0
  %1322 = vmatmul.mubr.f32.gmra.mrb[0].mxu0 %v214
  %v1323 = vpop.f32.mrb[0].mxu0
  %v1324 = vadd.f32 %v300, %v1323
  %v1325 = vpop.f32.mrb[0].mxu0
  %1326 = vmatprep.mubr.f32.mxu0 0.0
  %1327 = vmatmul.mubr.f32.gmra.mrb[0].mxu0 %v215
  %v1328 = vpop.f32.mrb[0].mxu0
  %v1329 = vadd.f32 %v300, %v1328
  %v1330 = vpop.f32.mrb[0].mxu0
  %1331 = vmatprep.mubr.f32.mxu0 0.0
  %1332 = vmatmul.mubr.f32.gmra.mrb[0].mxu0 %v216
  %v1333 = vpop.f32.mrb[0].mxu0
  %v1334 = vadd.f32 %v300, %v1333
  %v1335 = vpop.f32.mrb[0].mxu0
  %1336 = vmatprep.mubr.f32.mxu0 0.0
  %1337 = vmatmul.mubr.f32.gmra.mrb[0].mxu0 %v217
  %v1338 = vpop.f32.mrb[0].mxu0
  %v1339 = vadd.f32 %v300, %v1338
  %v1340 = vpop.f32.mrb[0].mxu0
  %1341 = vmatprep.mubr.f32.mxu0 0.0
  %1342 = vmatmul.mubr.f32.gmra.mrb[0].mxu0 %v218
  %v1343 = vpop.f32.mrb[0].mxu0
  %v1344 = vadd.f32 %v300, %v1343
  %v1345 = vpop.f32.mrb[0].mxu0
  %1346 = vmatprep.mubr.f32.mxu0 0.0
  %1347 = vmatmul.mubr.f32.gmra.mrb[0].mxu0 %v219
  %v1348 = vpop.f32.mrb[0].mxu0
  %v1349 = vadd.f32 %v300, %v1348
  %v1350 = vpop.f32.mrb[0].mxu0
  %1351 = vmatprep.mubr.f32.mxu0 0.0
  %1352 = vmatmul.mubr.f32.gmra.mrb[0].mxu0 %v220
  %v1353 = vpop.f32.mrb[0].mxu0
  %v1354 = vadd.f32 %v300, %v1353
  %v1355 = vpop.f32.mrb[0].mxu0
  %1356 = vmatprep.mubr.f32.mxu0 0.0
  %1357 = vmatmul.mubr.f32.gmra.mrb[0].mxu0 %v221
  %v1358 = vpop.f32.mrb[0].mxu0
  %v1359 = vadd.f32 %v300, %v1358
  %v1360 = vpop.f32.mrb[0].mxu0
  %1361 = vmatprep.mubr.f32.mxu0 0.0
  %1362 = vmatmul.mubr.f32.gmra.mrb[0].mxu0 %v222
  %v1363 = vpop.f32.mrb[0].mxu0
  %v1364 = vadd.f32 %v300, %v1363
  %v1365 = vpop.f32.mrb[0].mxu0
  %1366 = vmatprep.mubr.f32.mxu0 0.0
  %1367 = vmatmul.mubr.f32.gmra.mrb[0].mxu0 %v223
  %v1368 = vpop.f32.mrb[0].mxu0
  %v1369 = vadd.f32 %v300, %v1368
  %v1370 = vpop.f32.mrb[0].mxu0
  %1371 = vmatprep.mubr.f32.mxu0 0.0
  %1372 = vmatmul.mubr.f32.gmra.mrb[0].mxu0 %v224
  %v1373 = vpop.f32.mrb[0].mxu0
  %v1374 = vadd.f32 %v300, %v1373
  %v1375 = vpop.f32.mrb[0].mxu0
  %1376 = vmatprep.mubr.f32.mxu0 0.0
  %1377 = vmatmul.mubr.f32.gmra.mrb[0].mxu0 %v225
  %v1378 = vpop.f32.mrb[0].mxu0
  %v1379 = vadd.f32 %v300, %v1378
  %v1380 = vpop.f32.mrb[0].mxu0
  %1381 = vmatprep.mubr.f32.mxu0 0.0
  %1382 = vmatmul.mubr.f32.gmra.mrb[0].mxu0 %v226
  %v1383 = vpop.f32.mrb[0].mxu0
  %v1384 = vadd.f32 %v300, %v1383
  %v1385 = vpop.f32.mrb[0].mxu0
  %1386 = vmatprep.mubr.f32.mxu0 0.0
  %1387 = vmatmul.mubr.f32.gmra.mrb[0].mxu0 %v227
  %v1388 = vpop.f32.mrb[0].mxu0
  %v1389 = vadd.f32 %v300, %v1388
  %v1390 = vpop.f32.mrb[0].mxu0
  %1391 = vmatprep.mubr.f32.mxu0 0.0
  %1392 = vmatmul.mubr.f32.gmra.mrb[0].mxu0 %v228
  %v1393 = vpop.f32.mrb[0].mxu0
  %v1394 = vadd.f32 %v300, %v1393
  %v1395 = vpop.f32.mrb[0].mxu0
  %1396 = vmatprep.mubr.f32.mxu0 0.0
  %1397 = vmatmul.mubr.f32.gmra.mrb[0].mxu0 %v229
  %v1398 = vpop.f32.mrb[0].mxu0
  %v1399 = vadd.f32 %v300, %v1398
  %v1400 = vpop.f32.mrb[0].mxu0
  %1401 = vmatprep.mubr.f32.mxu0 0.0
  %1402 = vmatmul.mubr.f32.gmra.mrb[0].mxu0 %v230
  %v1403 = vpop.f32.mrb[0].mxu0
  %v1404 = vadd.f32 %v300, %v1403
  %v1405 = vpop.f32.mrb[0].mxu0
  %1406 = vmatprep.mubr.f32.mxu0 0.0
  %1407 = vmatmul.mubr.f32.gmra.mrb[0].mxu0 %v231
  %v1408 = vpop.f32.mrb[0].mxu0
  %v1409 = vadd.f32 %v300, %v1408
  %v1410 = vpop.f32.mrb[0].mxu0
  %1411 = vmatprep.mubr.f32.mxu0 0.0
  %1412 = vmatmul.mubr.f32.gmra.mrb[0].mxu0 %v232
  %v1413 = vpop.f32.mrb[0].mxu0
  %v1414 = vadd.f32 %v300, %v1413
  %v1415 = vpop.f32.mrb[0].mxu0
  %1416 = vmatprep.mubr.f32.mxu0 0.0
  %1417 = vmatmul.mubr.f32.gmra.mrb[0].mxu0 %v233
  %v1418 = vpop.f32.mrb[0].mxu0
  %v1419 = vadd.f32 %v300, %v1418
  %v1420 = vpop.f32.mrb[0].mxu0
  %1421 = vmatprep.mubr.f32.mxu0 0.0
  %1422 = vmatmul.mubr.f32.gmra.mrb[0].mxu0 %v234
  %v1423 = vpop.f32.mrb[0].mxu0
  %v1424 = vadd.f32 %v300, %v1423
  %v1425 = vpop.f32.mrb[0].mxu0
  %1426 = vmatprep.mubr.f32.mxu0 0.0
  %1427 = vmatmul.mubr.f32.gmra.mrb[0].mxu0 %v235
  %v1428 = vpop.f32.mrb[0].mxu0
  %v1429 = vadd.f32 %v300, %v1428
  %v1430 = vpop.f32.mrb[0].mxu0
  %1431 = vmatprep.mubr.f32.mxu0 0.0
  %1432 = vmatmul.mubr.f32.gmra.mrb[0].mxu0 %v236
  %v1433 = vpop.f32.mrb[0].mxu0
  %v1434 = vadd.f32 %v300, %v1433
  %v1435 = vpop.f32.mrb[0].mxu0
  %1436 = vmatprep.mubr.f32.mxu0 0.0
  %1437 = vmatmul.mubr.f32.gmra.mrb[0].mxu0 %v237
  %v1438 = vpop.f32.mrb[0].mxu0
  %v1439 = vadd.f32 %v300, %v1438
  %v1440 = vpop.f32.mrb[0].mxu0
  %1441 = vmatprep.mubr.f32.mxu0 0.0
  %1442 = vmatmul.mubr.f32.gmra.mrb[0].mxu0 %v238
  %v1443 = vpop.f32.mrb[0].mxu0
  %v1444 = vadd.f32 %v300, %v1443
  %v1445 = vpop.f32.mrb[0].mxu0
  %1446 = vmatprep.mubr.f32.mxu0 0.0
  %1447 = vmatmul.mubr.f32.gmra.mrb[0].mxu0 %v239
  %v1448 = vpop.f32.mrb[0].mxu0
  %v1449 = vadd.f32 %v300, %v1448
  %v1450 = vpop.f32.mrb[0].mxu0
  %1451 = vmatprep.mubr.f32.mxu0 0.0
  %1452 = vmatmul.mubr.f32.gmra.mrb[0].mxu0 %v240
  %v1453 = vpop.f32.mrb[0].mxu0
  %v1454 = vadd.f32 %v300, %v1453
  %v1455 = vpop.f32.mrb[0].mxu0
  %1456 = vmatprep.mubr.f32.mxu0 0.0
  %1457 = vmatmul.mubr.f32.gmra.mrb[0].mxu0 %v241
  %v1458 = vpop.f32.mrb[0].mxu0
  %v1459 = vadd.f32 %v300, %v1458
  %v1460 = vpop.f32.mrb[0].mxu0
  %1461 = vmatprep.mubr.f32.mxu0 0.0
  %1462 = vmatmul.mubr.f32.gmra.mrb[0].mxu0 %v242
  %v1463 = vpop.f32.mrb[0].mxu0
  %v1464 = vadd.f32 %v300, %v1463
  %v1465 = vpop.f32.mrb[0].mxu0
  %1466 = vmatprep.mubr.f32.mxu0 0.0
  %1467 = vmatmul.mubr.f32.gmra.mrb[0].mxu0 %v243
  %v1468 = vpop.f32.mrb[0].mxu0
  %v1469 = vadd.f32 %v300, %v1468
  %v1470 = vpop.f32.mrb[0].mxu0
  %1471 = vmatprep.mubr.f32.mxu0 0.0
  %1472 = vmatmul.mubr.f32.gmra.mrb[0].mxu0 %v244
  %v1473 = vpop.f32.mrb[0].mxu0
  %v1474 = vadd.f32 %v300, %v1473
  %v1475 = vpop.f32.mrb[0].mxu0
  %1476 = vmatprep.mubr.f32.mxu0 0.0
  %1477 = vmatmul.mubr.f32.gmra.mrb[0].mxu0 %v245
  %v1478 = vpop.f32.mrb[0].mxu0
  %v1479 = vadd.f32 %v300, %v1478
  %v1480 = vpop.f32.mrb[0].mxu0
  %1481 = vmatprep.mubr.f32.mxu0 0.0
  %1482 = vmatmul.mubr.f32.gmra.mrb[0].mxu0 %v246
  %v1483 = vpop.f32.mrb[0].mxu0
  %v1484 = vadd.f32 %v300, %v1483
  %v1485 = vpop.f32.mrb[0].mxu0
  %1486 = vmatprep.mubr.f32.mxu0 0.0
  %1487 = vmatmul.mubr.f32.gmra.mrb[0].mxu0 %v247
  %v1488 = vpop.f32.mrb[0].mxu0
  %v1489 = vadd.f32 %v300, %v1488
  %v1490 = vpop.f32.mrb[0].mxu0
  %1491 = vmatprep.mubr.f32.mxu0 0.0
  %1492 = vmatmul.mubr.f32.gmra.mrb[0].mxu0 %v248
  %v1493 = vpop.f32.mrb[0].mxu0
  %v1494 = vadd.f32 %v300, %v1493
  %v1495 = vpop.f32.mrb[0].mxu0
  %1496 = vmatprep.mubr.f32.mxu0 0.0
  %1497 = vmatmul.mubr.f32.gmra.mrb[0].mxu0 %v249
  %v1498 = vpop.f32.mrb[0].mxu0
  %v1499 = vadd.f32 %v300, %v1498
  %v1500 = vpop.f32.mrb[0].mxu0
  %1501 = vmatprep.mubr.f32.mxu0 0.0
  %1502 = vmatmul.mubr.f32.gmra.mrb[0].mxu0 %v250
  %v1503 = vpop.f32.mrb[0].mxu0
  %v1504 = vadd.f32 %v300, %v1503
  %v1505 = vpop.f32.mrb[0].mxu0
  %1506 = vmatprep.mubr.f32.mxu0 0.0
  %1507 = vmatmul.mubr.f32.gmra.mrb[0].mxu0 %v251
  %v1508 = vpop.f32.mrb[0].mxu0
  %v1509 = vadd.f32 %v300, %v1508
  %v1510 = vpop.f32.mrb[0].mxu0
  %1511 = vmatprep.mubr.f32.mxu0 0.0
  %1512 = vmatmul.mubr.f32.gmra.mrb[0].mxu0 %v252
  %v1513 = vpop.f32.mrb[0].mxu0
  %v1514 = vadd.f32 %v300, %v1513
  %v1515 = vpop.f32.mrb[0].mxu0
  %1516 = vmatprep.mubr.f32.mxu0 0.0
  %1517 = vmatmul.mubr.f32.gmra.mrb[0].mxu0 %v253
  %v1518 = vpop.f32.mrb[0].mxu0
  %v1519 = vadd.f32 %v300, %v1518
  %v1520 = vpop.f32.mrb[0].mxu0
  %1521 = vmatprep.mubr.f32.mxu0 0.0
  %1522 = vmatmul.mubr.f32.gmra.mrb[0].mxu0 %v254
  %v1523 = vpop.f32.mrb[0].mxu0
  %v1524 = vadd.f32 %v300, %v1523
  %v1525 = vpop.f32.mrb[0].mxu0
  %1526 = vmatprep.mubr.f32.mxu0 0.0
  %1527 = vmatmul.mubr.f32.gmra.mrb[0].mxu0 %v255
  %v1528 = vpop.f32.mrb[0].mxu0
  %v1529 = vadd.f32 %v300, %v1528
  %v1530 = vpop.f32.mrb[0].mxu0
  %1531 = vmatprep.mubr.f32.mxu0 0.0
  %1532 = vmatmul.mubr.f32.gmra.mrb[0].mxu0 %v256
  %v1533 = vpop.f32.mrb[0].mxu0
  %v1534 = vadd.f32 %v300, %v1533
  %v1535 = vpop.f32.mrb[0].mxu0
  %1536 = vmatprep.mubr.f32.mxu0 0.0
  %1537 = vmatmul.mubr.f32.gmra.mrb[0].mxu0 %v257
  %v1538 = vpop.f32.mrb[0].mxu0
  %v1539 = vadd.f32 %v300, %v1538
  %v1540 = vpop.f32.mrb[0].mxu0
  %1541 = vmatprep.mubr.f32.mxu0 0.0
  %1542 = vmatmul.mubr.f32.gmra.mrb[0].mxu0 %v258
  %v1543 = vpop.f32.mrb[0].mxu0
  %v1544 = vadd.f32 %v300, %v1543
  %v1545 = vpop.f32.mrb[0].mxu0
  %1546 = vmatprep.mubr.f32.mxu0 0.0
  %1547 = vmatmul.mubr.f32.gmra.mrb[0].mxu0 %v259
  %v1548 = vpop.f32.mrb[0].mxu0
  %v1549 = vadd.f32 %v300, %v1548
  %v1550 = vpop.f32.mrb[0].mxu0
  %1551 = vmatprep.mubr.f32.mxu0 0.0
  %1552 = vmatmul.mubr.f32.gmra.mrb[0].mxu0 %v260
  %v1553 = vpop.f32.mrb[0].mxu0
  %v1554 = vadd.f32 %v300, %v1553
  %v1555 = vpop.f32.mrb[0].mxu0
  %1556 = vmatprep.mubr.f32.mxu0 0.0
  %1557 = vmatmul.mubr.f32.gmra.mrb[0].mxu0 %v261
  %v1558 = vpop.f32.mrb[0].mxu0
  %v1559 = vadd.f32 %v300, %v1558
  %v1560 = vpop.f32.mrb[0].mxu0
  %1561 = vmatprep.mubr.f32.mxu0 0.0
  %1562 = vmatmul.mubr.f32.gmra.mrb[0].mxu0 %v262
  %v1563 = vpop.f32.mrb[0].mxu0
  %v1564 = vadd.f32 %v300, %v1563
  %v1565 = vpop.f32.mrb[0].mxu0
  %1566 = vmatprep.mubr.f32.mxu0 0.0
  %1567 = vmatmul.mubr.f32.gmra.mrb[0].mxu0 %v263
  %v1568 = vpop.f32.mrb[0].mxu0
  %v1569 = vadd.f32 %v300, %v1568
  %v1570 = vpop.f32.mrb[0].mxu0
  %1571 = vmatprep.mubr.f32.mxu0 0.0
  %1572 = vmatmul.mubr.f32.gmra.mrb[0].mxu0 %v264
  %v1573 = vpop.f32.mrb[0].mxu0
  %v1574 = vadd.f32 %v300, %v1573
  %v1575 = vpop.f32.mrb[0].mxu0
  %1576 = vmatprep.mubr.f32.mxu0 0.0
  %1577 = vmatmul.mubr.f32.gmra.mrb[0].mxu0 %v265
  %v1578 = vpop.f32.mrb[0].mxu0
  %v1579 = vadd.f32 %v300, %v1578
  %v1580 = vpop.f32.mrb[0].mxu0
  %1581 = vmatprep.mubr.f32.mxu0 0.0
  %1582 = vmatmul.mubr.f32.gmra.mrb[0].mxu0 %v266
  %v1583 = vpop.f32.mrb[0].mxu0
  %v1584 = vadd.f32 %v300, %v1583
  %v1585 = vpop.f32.mrb[0].mxu0
  %1586 = vmatprep.mubr.f32.mxu0 0.0
  %1587 = vmatmul.mubr.f32.gmra.mrb[0].mxu0 %v267
  %v1588 = vpop.f32.mrb[0].mxu0
  %v1589 = vadd.f32 %v300, %v1588
  %v1590 = vpop.f32.mrb[0].mxu0
  %1591 = vmatprep.mubr.f32.mxu0 0.0
  %1592 = vmatmul.mubr.f32.gmra.mrb[0].mxu0 %v268
  %v1593 = vpop.f32.mrb[0].mxu0
  %v1594 = vadd.f32 %v300, %v1593
  %v1595 = vpop.f32.mrb[0].mxu0
  %1596 = vmatprep.mubr.f32.mxu0 0.0
  %1597 = vmatmul.mubr.f32.gmra.mrb[0].mxu0 %v269
  %v1598 = vpop.f32.mrb[0].mxu0
  %v1599 = vadd.f32 %v300, %v1598
  %v1600 = vpop.f32.mrb[0].mxu0
  %1601 = vmatprep.mubr.f32.mxu0 0.0
  %1602 = vmatmul.mubr.f32.gmra.mrb[0].mxu0 %v270
  %v1603 = vpop.f32.mrb[0].mxu0
  %v1604 = vadd.f32 %v300, %v1603
  %v1605 = vpop.f32.mrb[0].mxu0
  %1606 = vmatprep.mubr.f32.mxu0 0.0
  %1607 = vmatmul.mubr.f32.gmra.mrb[0].mxu0 %v271
  %v1608 = vpop.f32.mrb[0].mxu0
  %v1609 = vadd.f32 %v300, %v1608
  %v1610 = vpop.f32.mrb[0].mxu0
  %1611 = vmatprep.mubr.f32.mxu0 0.0
  %1612 = vmatmul.mubr.f32.gmra.mrb[0].mxu0 %v272
  %v1613 = vpop.f32.mrb[0].mxu0
  %v1614 = vadd.f32 %v300, %v1613
  %v1615 = vpop.f32.mrb[0].mxu0
  %1616 = vmatprep.mubr.f32.mxu0 0.0
  %1617 = vmatmul.mubr.f32.gmra.mrb[0].mxu0 %v273
  %v1618 = vpop.f32.mrb[0].mxu0
  %v1619 = vadd.f32 %v300, %v1618
  %v1620 = vpop.f32.mrb[0].mxu0
  %1621 = vmatprep.mubr.f32.mxu0 0.0
  %1622 = vmatmul.mubr.f32.gmra.mrb[0].mxu0 %v274
  %v1623 = vpop.f32.mrb[0].mxu0
  %v1624 = vadd.f32 %v300, %v1623
  %v1625 = vpop.f32.mrb[0].mxu0
  %1626 = vmatprep.mubr.f32.mxu0 0.0
  %1627 = vmatmul.mubr.f32.gmra.mrb[0].mxu0 %v275
  %v1628 = vpop.f32.mrb[0].mxu0
  %v1629 = vadd.f32 %v300, %v1628
  %v1630 = vpop.f32.mrb[0].mxu0
  %1631 = vmatprep.mubr.f32.mxu0 0.0
  %1632 = vmatmul.mubr.f32.gmra.mrb[0].mxu0 %v276
  %v1633 = vpop.f32.mrb[0].mxu0
  %v1634 = vadd.f32 %v300, %v1633
  %v1635 = vpop.f32.mrb[0].mxu0
  %1636 = vmatprep.mubr.f32.mxu0 0.0
  %1637 = vmatmul.mubr.f32.gmra.mrb[0].mxu0 %v277
  %v1638 = vpop.f32.mrb[0].mxu0
  %v1639 = vadd.f32 %v300, %v1638
  %v1640 = vpop.f32.mrb[0].mxu0
  %1641 = vmatprep.mubr.f32.mxu0 0.0
  %1642 = vmatmul.mubr.f32.gmra.mrb[0].mxu0 %v278
  %v1643 = vpop.f32.mrb[0].mxu0
  %v1644 = vadd.f32 %v300, %v1643
  %v1645 = vpop.f32.mrb[0].mxu0
  %1646 = vdwg.mxu0
  %v1647 = vmax.f32 %v369, 0.0
  %v1648 = vmax.f32 %v374, 0.0
  %v1649 = vmax.f32 %v379, 0.0
  %v1650 = vmax.f32 %v384, 0.0
  %v1651 = vmax.f32 %v389, 0.0
  %v1652 = vmax.f32 %v394, 0.0
  %v1653 = vmax.f32 %v399, 0.0
  %v1654 = vmax.f32 %v404, 0.0
  %v1655 = vmax.f32 %v409, 0.0
  %v1656 = vmax.f32 %v414, 0.0
  %v1657 = vmax.f32 %v419, 0.0
  %v1658 = vmax.f32 %v424, 0.0
  %v1659 = vmax.f32 %v429, 0.0
  %v1660 = vmax.f32 %v434, 0.0
  %v1661 = vmax.f32 %v439, 0.0
  %v1662 = vmax.f32 %v444, 0.0
  %v1663 = vmax.f32 %v449, 0.0
  %v1664 = vmax.f32 %v454, 0.0
  %v1665 = vmax.f32 %v459, 0.0
  %v1666 = vmax.f32 %v464, 0.0
  %v1667 = vmax.f32 %v469, 0.0
  %v1668 = vmax.f32 %v474, 0.0
  %v1669 = vmax.f32 %v479, 0.0
  %v1670 = vmax.f32 %v484, 0.0
  %v1671 = vmax.f32 %v489, 0.0
  %v1672 = vmax.f32 %v494, 0.0
  %v1673 = vmax.f32 %v499, 0.0
  %v1674 = vmax.f32 %v504, 0.0
  %v1675 = vmax.f32 %v509, 0.0
  %v1676 = vmax.f32 %v514, 0.0
  %v1677 = vmax.f32 %v519, 0.0
  %v1678 = vmax.f32 %v524, 0.0
  %v1679 = vmax.f32 %v529, 0.0
  %v1680 = vmax.f32 %v534, 0.0
  %v1681 = vmax.f32 %v539, 0.0
  %v1682 = vmax.f32 %v544, 0.0
  %v1683 = vmax.f32 %v549, 0.0
  %v1684 = vmax.f32 %v554, 0.0
  %v1685 = vmax.f32 %v559, 0.0
  %v1686 = vmax.f32 %v564, 0.0
  %v1687 = vmax.f32 %v569, 0.0
  %v1688 = vmax.f32 %v574, 0.0
  %v1689 = vmax.f32 %v579, 0.0
  %v1690 = vmax.f32 %v584, 0.0
  %v1691 = vmax.f32 %v589, 0.0
  %v1692 = vmax.f32 %v594, 0.0
  %v1693 = vmax.f32 %v599, 0.0
  %v1694 = vmax.f32 %v604, 0.0
  %v1695 = vmax.f32 %v609, 0.0
  %v1696 = vmax.f32 %v614, 0.0
  %v1697 = vmax.f32 %v619, 0.0
  %v1698 = vmax.f32 %v624, 0.0
  %v1699 = vmax.f32 %v629, 0.0
  %v1700 = vmax.f32 %v634, 0.0
  %v1701 = vmax.f32 %v639, 0.0
  %v1702 = vmax.f32 %v644, 0.0
  %v1703 = vmax.f32 %v649, 0.0
  %v1704 = vmax.f32 %v654, 0.0
  %v1705 = vmax.f32 %v659, 0.0
  %v1706 = vmax.f32 %v664, 0.0
  %v1707 = vmax.f32 %v669, 0.0
  %v1708 = vmax.f32 %v674, 0.0
  %v1709 = vmax.f32 %v679, 0.0
  %v1710 = vmax.f32 %v684, 0.0
  %v1711 = vmax.f32 %v689, 0.0
  %v1712 = vmax.f32 %v694, 0.0
  %v1713 = vmax.f32 %v699, 0.0
  %v1714 = vmax.f32 %v704, 0.0
  %v1715 = vmax.f32 %v709, 0.0
  %v1716 = vmax.f32 %v714, 0.0
  %v1717 = vmax.f32 %v719, 0.0
  %v1718 = vmax.f32 %v724, 0.0
  %v1719 = vmax.f32 %v729, 0.0
  %v1720 = vmax.f32 %v734, 0.0
  %v1721 = vmax.f32 %v739, 0.0
  %v1722 = vmax.f32 %v744, 0.0
  %v1723 = vmax.f32 %v749, 0.0
  %v1724 = vmax.f32 %v754, 0.0
  %v1725 = vmax.f32 %v759, 0.0
  %v1726 = vmax.f32 %v764, 0.0
  %v1727 = vmax.f32 %v769, 0.0
  %v1728 = vmax.f32 %v774, 0.0
  %v1729 = vmax.f32 %v779, 0.0
  %v1730 = vmax.f32 %v784, 0.0
  %v1731 = vmax.f32 %v789, 0.0
  %v1732 = vmax.f32 %v794, 0.0
  %v1733 = vmax.f32 %v799, 0.0
  %v1734 = vmax.f32 %v804, 0.0
  %v1735 = vmax.f32 %v809, 0.0
  %v1736 = vmax.f32 %v814, 0.0
  %v1737 = vmax.f32 %v819, 0.0
  %v1738 = vmax.f32 %v824, 0.0
  %v1739 = vmax.f32 %v829, 0.0
  %v1740 = vmax.f32 %v834, 0.0
  %v1741 = vmax.f32 %v839, 0.0
  %v1742 = vmax.f32 %v844, 0.0
  %v1743 = vmax.f32 %v849, 0.0
  %v1744 = vmax.f32 %v854, 0.0
  %v1745 = vmax.f32 %v859, 0.0
  %v1746 = vmax.f32 %v864, 0.0
  %v1747 = vmax.f32 %v869, 0.0
  %v1748 = vmax.f32 %v874, 0.0
  %v1749 = vmax.f32 %v879, 0.0
  %v1750 = vmax.f32 %v884, 0.0
  %v1751 = vmax.f32 %v889, 0.0
  %v1752 = vmax.f32 %v894, 0.0
  %v1753 = vmax.f32 %v899, 0.0
  %v1754 = vmax.f32 %v904, 0.0
  %v1755 = vmax.f32 %v909, 0.0
  %v1756 = vmax.f32 %v914, 0.0
  %v1757 = vmax.f32 %v919, 0.0
  %v1758 = vmax.f32 %v924, 0.0
  %v1759 = vmax.f32 %v929, 0.0
  %v1760 = vmax.f32 %v934, 0.0
  %v1761 = vmax.f32 %v939, 0.0
  %v1762 = vmax.f32 %v944, 0.0
  %v1763 = vmax.f32 %v949, 0.0
  %v1764 = vmax.f32 %v954, 0.0
  %v1765 = vmax.f32 %v959, 0.0
  %v1766 = vmax.f32 %v964, 0.0
  %v1767 = vmax.f32 %v969, 0.0
  %v1768 = vmax.f32 %v974, 0.0
  %v1769 = vmax.f32 %v979, 0.0
  %v1770 = vmax.f32 %v984, 0.0
  %v1771 = vmax.f32 %v989, 0.0
  %v1772 = vmax.f32 %v994, 0.0
  %v1773 = vmax.f32 %v999, 0.0
  %v1774 = vmax.f32 %v1004, 0.0
  %v1775 = vmax.f32 %v1009, 0.0
  %v1776 = vmax.f32 %v1014, 0.0
  %v1777 = vmax.f32 %v1019, 0.0
  %v1778 = vmax.f32 %v1024, 0.0
  %v1779 = vmax.f32 %v1029, 0.0
  %v1780 = vmax.f32 %v1034, 0.0
  %v1781 = vmax.f32 %v1039, 0.0
  %v1782 = vmax.f32 %v1044, 0.0
  %v1783 = vmax.f32 %v1049, 0.0
  %v1784 = vmax.f32 %v1054, 0.0
  %v1785 = vmax.f32 %v1059, 0.0
  %v1786 = vmax.f32 %v1064, 0.0
  %v1787 = vmax.f32 %v1069, 0.0
  %v1788 = vmax.f32 %v1074, 0.0
  %v1789 = vmax.f32 %v1079, 0.0
  %v1790 = vmax.f32 %v1084, 0.0
  %v1791 = vmax.f32 %v1089, 0.0
  %v1792 = vmax.f32 %v1094, 0.0
  %v1793 = vmax.f32 %v1099, 0.0
  %v1794 = vmax.f32 %v1104, 0.0
  %v1795 = vmax.f32 %v1109, 0.0
  %v1796 = vmax.f32 %v1114, 0.0
  %v1797 = vmax.f32 %v1119, 0.0
  %v1798 = vmax.f32 %v1124, 0.0
  %v1799 = vmax.f32 %v1129, 0.0
  %v1800 = vmax.f32 %v1134, 0.0
  %v1801 = vmax.f32 %v1139, 0.0
  %v1802 = vmax.f32 %v1144, 0.0
  %v1803 = vmax.f32 %v1149, 0.0
  %v1804 = vmax.f32 %v1154, 0.0
  %v1805 = vmax.f32 %v1159, 0.0
  %v1806 = vmax.f32 %v1164, 0.0
  %v1807 = vmax.f32 %v1169, 0.0
  %v1808 = vmax.f32 %v1174, 0.0
  %v1809 = vmax.f32 %v1179, 0.0
  %v1810 = vmax.f32 %v1184, 0.0
  %v1811 = vmax.f32 %v1189, 0.0
  %v1812 = vmax.f32 %v1194, 0.0
  %v1813 = vmax.f32 %v1199, 0.0
  %v1814 = vmax.f32 %v1204, 0.0
  %v1815 = vmax.f32 %v1209, 0.0
  %v1816 = vmax.f32 %v1214, 0.0
  %v1817 = vmax.f32 %v1219, 0.0
  %v1818 = vmax.f32 %v1224, 0.0
  %v1819 = vmax.f32 %v1229, 0.0
  %v1820 = vmax.f32 %v1234, 0.0
  %v1821 = vmax.f32 %v1239, 0.0
  %v1822 = vmax.f32 %v1244, 0.0
  %v1823 = vmax.f32 %v1249, 0.0
  %v1824 = vmax.f32 %v1254, 0.0
  %v1825 = vmax.f32 %v1259, 0.0
  %v1826 = vmax.f32 %v1264, 0.0
  %v1827 = vmax.f32 %v1269, 0.0
  %v1828 = vmax.f32 %v1274, 0.0
  %v1829 = vmax.f32 %v1279, 0.0
  %v1830 = vmax.f32 %v1284, 0.0
  %v1831 = vmax.f32 %v1289, 0.0
  %v1832 = vmax.f32 %v1294, 0.0
  %v1833 = vmax.f32 %v1299, 0.0
  %v1834 = vmax.f32 %v1304, 0.0
  %v1835 = vmax.f32 %v1309, 0.0
  %v1836 = vmax.f32 %v1314, 0.0
  %v1837 = vmax.f32 %v1319, 0.0
  %v1838 = vmax.f32 %v1324, 0.0
  %v1839 = vmax.f32 %v1329, 0.0
  %v1840 = vmax.f32 %v1334, 0.0
  %v1841 = vmax.f32 %v1339, 0.0
  %v1842 = vmax.f32 %v1344, 0.0
  %v1843 = vmax.f32 %v1349, 0.0
  %v1844 = vmax.f32 %v1354, 0.0
  %v1845 = vmax.f32 %v1359, 0.0
  %v1846 = vmax.f32 %v1364, 0.0
  %v1847 = vmax.f32 %v1369, 0.0
  %v1848 = vmax.f32 %v1374, 0.0
  %v1849 = vmax.f32 %v1379, 0.0
  %v1850 = vmax.f32 %v1384, 0.0
  %v1851 = vmax.f32 %v1389, 0.0
  %v1852 = vmax.f32 %v1394, 0.0
  %v1853 = vmax.f32 %v1399, 0.0
  %v1854 = vmax.f32 %v1404, 0.0
  %v1855 = vmax.f32 %v1409, 0.0
  %v1856 = vmax.f32 %v1414, 0.0
  %v1857 = vmax.f32 %v1419, 0.0
  %v1858 = vmax.f32 %v1424, 0.0
  %v1859 = vmax.f32 %v1429, 0.0
  %v1860 = vmax.f32 %v1434, 0.0
  %v1861 = vmax.f32 %v1439, 0.0
  %v1862 = vmax.f32 %v1444, 0.0
  %v1863 = vmax.f32 %v1449, 0.0
  %v1864 = vmax.f32 %v1454, 0.0
  %v1865 = vmax.f32 %v1459, 0.0
  %v1866 = vmax.f32 %v1464, 0.0
  %v1867 = vmax.f32 %v1469, 0.0
  %v1868 = vmax.f32 %v1474, 0.0
  %v1869 = vmax.f32 %v1479, 0.0
  %v1870 = vmax.f32 %v1484, 0.0
  %v1871 = vmax.f32 %v1489, 0.0
  %v1872 = vmax.f32 %v1494, 0.0
  %v1873 = vmax.f32 %v1499, 0.0
  %v1874 = vmax.f32 %v1504, 0.0
  %v1875 = vmax.f32 %v1509, 0.0
  %v1876 = vmax.f32 %v1514, 0.0
  %v1877 = vmax.f32 %v1519, 0.0
  %v1878 = vmax.f32 %v1524, 0.0
  %v1879 = vmax.f32 %v1529, 0.0
  %v1880 = vmax.f32 %v1534, 0.0
  %v1881 = vmax.f32 %v1539, 0.0
  %v1882 = vmax.f32 %v1544, 0.0
  %v1883 = vmax.f32 %v1549, 0.0
  %v1884 = vmax.f32 %v1554, 0.0
  %v1885 = vmax.f32 %v1559, 0.0
  %v1886 = vmax.f32 %v1564, 0.0
  %v1887 = vmax.f32 %v1569, 0.0
  %v1888 = vmax.f32 %v1574, 0.0
  %v1889 = vmax.f32 %v1579, 0.0
  %v1890 = vmax.f32 %v1584, 0.0
  %v1891 = vmax.f32 %v1589, 0.0
  %v1892 = vmax.f32 %v1594, 0.0
  %v1893 = vmax.f32 %v1599, 0.0
  %v1894 = vmax.f32 %v1604, 0.0
  %v1895 = vmax.f32 %v1609, 0.0
  %v1896 = vmax.f32 %v1614, 0.0
  %v1897 = vmax.f32 %v1619, 0.0
  %v1898 = vmax.f32 %v1624, 0.0
  %v1899 = vmax.f32 %v1629, 0.0
  %v1900 = vmax.f32 %v1634, 0.0
  %v1901 = vmax.f32 %v1639, 0.0
  %v1902 = vmax.f32 %v1644, 0.0
  %v1903 = vlaneseq
  %v1904 = vshrl.u32 %v1903, 7
  %v1905 = vadd.s32 %v1904, 8
  %v1906 = vadd.s32 %v1904, 16
  %v1907 = vadd.s32 %v1904, 24
  %v1908 = vadd.s32 %v1904, 32
  %v1909 = vadd.s32 %v1904, 40
  %v1910 = vadd.s32 %v1904, 48
  %v1911 = vadd.s32 %v1904, 56
  %v1912 = vadd.s32 %v1904, 64
  %v1913 = vadd.s32 %v1904, 72
  %v1914 = vadd.s32 %v1904, 80
  %v1915 = vadd.s32 %v1904, 88
  %v1916 = vadd.s32 %v1904, 96
  %v1917 = vadd.s32 %v1904, 104
  %v1918 = vadd.s32 %v1904, 112
  %v1919 = vadd.s32 %v1904, 120
  %v1920 = vadd.s32 %v1904, 128
  %v1921 = vadd.s32 %v1904, 136
  %v1922 = vadd.s32 %v1904, 144
  %v1923 = vadd.s32 %v1904, 152
  %v1924 = vadd.s32 %v1904, 160
  %v1925 = vadd.s32 %v1904, 168
  %v1926 = vadd.s32 %v1904, 176
  %v1927 = vadd.s32 %v1904, 184
  %v1928 = vadd.s32 %v1904, 192
  %v1929 = vadd.s32 %v1904, 200
  %v1930 = vadd.s32 %v1904, 208
  %v1931 = vadd.s32 %v1904, 216
  %v1932 = vadd.s32 %v1904, 224
  %v1933 = vadd.s32 %v1904, 232
  %v1934 = vadd.s32 %v1904, 240
  %v1935 = vadd.s32 %v1904, 248
  %v1936 = vadd.s32 %v1904, 256
  %v1937 = vadd.s32 %v1904, 264
  %v1938 = vadd.s32 %v1904, 272
  %v1939 = vadd.s32 %v1904, 280
  %v1940 = vadd.s32 %v1904, 288
  %v1941 = vadd.s32 %v1904, 296
  %v1942 = vadd.s32 %v1904, 304
  %v1943 = vadd.s32 %v1904, 312
  %v1944 = vadd.s32 %v1904, 320
  %v1945 = vadd.s32 %v1904, 328
  %v1946 = vadd.s32 %v1904, 336
  %v1947 = vadd.s32 %v1904, 344
  %v1948 = vadd.s32 %v1904, 352
  %v1949 = vadd.s32 %v1904, 360
  %v1950 = vadd.s32 %v1904, 368
  %v1951 = vadd.s32 %v1904, 376
  %v1952 = vadd.s32 %v1904, 384
  %v1953 = vadd.s32 %v1904, 392
  %v1954 = vadd.s32 %v1904, 400
  %v1955 = vadd.s32 %v1904, 408
  %v1956 = vadd.s32 %v1904, 416
  %v1957 = vadd.s32 %v1904, 424
  %v1958 = vadd.s32 %v1904, 432
  %v1959 = vadd.s32 %v1904, 440
  %v1960 = vadd.s32 %v1904, 448
  %v1961 = vadd.s32 %v1904, 456
  %v1962 = vadd.s32 %v1904, 464
  %v1963 = vadd.s32 %v1904, 472
  %v1964 = vadd.s32 %v1904, 480
  %v1965 = vadd.s32 %v1904, 488
  %v1966 = vadd.s32 %v1904, 496
  %v1967 = vadd.s32 %v1904, 504
  %v1968 = vadd.s32 %v1904, 512
  %v1969 = vadd.s32 %v1904, 520
  %v1970 = vadd.s32 %v1904, 528
  %v1971 = vadd.s32 %v1904, 536
  %v1972 = vadd.s32 %v1904, 544
  %v1973 = vadd.s32 %v1904, 552
  %v1974 = vadd.s32 %v1904, 560
  %v1975 = vadd.s32 %v1904, 568
  %v1976 = vadd.s32 %v1904, 576
  %v1977 = vadd.s32 %v1904, 584
  %v1978 = vadd.s32 %v1904, 592
  %v1979 = vadd.s32 %v1904, 600
  %v1980 = vadd.s32 %v1904, 608
  %v1981 = vadd.s32 %v1904, 616
  %v1982 = vadd.s32 %v1904, 624
  %v1983 = vadd.s32 %v1904, 632
  %v1984 = vadd.s32 %v1904, 640
  %v1985 = vadd.s32 %v1904, 648
  %v1986 = vadd.s32 %v1904, 656
  %v1987 = vadd.s32 %v1904, 664
  %v1988 = vadd.s32 %v1904, 672
  %v1989 = vadd.s32 %v1904, 680
  %v1990 = vadd.s32 %v1904, 688
  %v1991 = vadd.s32 %v1904, 696
  %v1992 = vadd.s32 %v1904, 704
  %v1993 = vadd.s32 %v1904, 712
  %v1994 = vadd.s32 %v1904, 720
  %v1995 = vadd.s32 %v1904, 728
  %v1996 = vadd.s32 %v1904, 736
  %v1997 = vadd.s32 %v1904, 744
  %v1998 = vadd.s32 %v1904, 752
  %v1999 = vadd.s32 %v1904, 760
  %v2000 = vadd.s32 %v1904, 768
  %v2001 = vadd.s32 %v1904, 776
  %v2002 = vadd.s32 %v1904, 784
  %v2003 = vadd.s32 %v1904, 792
  %v2004 = vadd.s32 %v1904, 800
  %v2005 = vadd.s32 %v1904, 808
  %v2006 = vadd.s32 %v1904, 816
  %v2007 = vadd.s32 %v1904, 824
  %v2008 = vadd.s32 %v1904, 832
  %v2009 = vadd.s32 %v1904, 840
  %v2010 = vadd.s32 %v1904, 848
  %v2011 = vadd.s32 %v1904, 856
  %v2012 = vadd.s32 %v1904, 864
  %v2013 = vadd.s32 %v1904, 872
  %v2014 = vadd.s32 %v1904, 880
  %v2015 = vadd.s32 %v1904, 888
  %v2016 = vadd.s32 %v1904, 896
  %v2017 = vadd.s32 %v1904, 904
  %v2018 = vadd.s32 %v1904, 912
  %v2019 = vadd.s32 %v1904, 920
  %v2020 = vadd.s32 %v1904, 928
  %v2021 = vadd.s32 %v1904, 936
  %v2022 = vadd.s32 %v1904, 944
  %v2023 = vadd.s32 %v1904, 952
  %v2024 = vadd.s32 %v1904, 960
  %v2025 = vadd.s32 %v1904, 968
  %v2026 = vadd.s32 %v1904, 976
  %v2027 = vadd.s32 %v1904, 984
  %v2028 = vadd.s32 %v1904, 992
  %v2029 = vadd.s32 %v1904, 1000
  %v2030 = vadd.s32 %v1904, 1008
  %v2031 = vadd.s32 %v1904, 1016
  %v2032 = vadd.s32 %v1904, 1024
  %v2033 = vadd.s32 %v1904, 1032
  %v2034 = vadd.s32 %v1904, 1040
  %v2035 = vadd.s32 %v1904, 1048
  %v2036 = vadd.s32 %v1904, 1056
  %v2037 = vadd.s32 %v1904, 1064
  %v2038 = vadd.s32 %v1904, 1072
  %v2039 = vadd.s32 %v1904, 1080
  %v2040 = vadd.s32 %v1904, 1088
  %v2041 = vadd.s32 %v1904, 1096
  %v2042 = vadd.s32 %v1904, 1104
  %v2043 = vadd.s32 %v1904, 1112
  %v2044 = vadd.s32 %v1904, 1120
  %v2045 = vadd.s32 %v1904, 1128
  %v2046 = vadd.s32 %v1904, 1136
  %v2047 = vadd.s32 %v1904, 1144
  %v2048 = vadd.s32 %v1904, 1152
  %v2049 = vadd.s32 %v1904, 1160
  %v2050 = vadd.s32 %v1904, 1168
  %v2051 = vadd.s32 %v1904, 1176
  %v2052 = vadd.s32 %v1904, 1184
  %v2053 = vadd.s32 %v1904, 1192
  %v2054 = vadd.s32 %v1904, 1200
  %v2055 = vadd.s32 %v1904, 1208
  %v2056 = vadd.s32 %v1904, 1216
  %v2057 = vadd.s32 %v1904, 1224
  %v2058 = vadd.s32 %v1904, 1232
  %v2059 = vadd.s32 %v1904, 1240
  %v2060 = vadd.s32 %v1904, 1248
  %v2061 = vadd.s32 %v1904, 1256
  %v2062 = vadd.s32 %v1904, 1264
  %v2063 = vadd.s32 %v1904, 1272
  %v2064 = vadd.s32 %v1904, 1280
  %v2065 = vadd.s32 %v1904, 1288
  %v2066 = vadd.s32 %v1904, 1296
  %v2067 = vadd.s32 %v1904, 1304
  %v2068 = vadd.s32 %v1904, 1312
  %v2069 = vadd.s32 %v1904, 1320
  %v2070 = vadd.s32 %v1904, 1328
  %v2071 = vadd.s32 %v1904, 1336
  %v2072 = vadd.s32 %v1904, 1344
  %v2073 = vadd.s32 %v1904, 1352
  %v2074 = vadd.s32 %v1904, 1360
  %v2075 = vadd.s32 %v1904, 1368
  %v2076 = vadd.s32 %v1904, 1376
  %v2077 = vadd.s32 %v1904, 1384
  %v2078 = vadd.s32 %v1904, 1392
  %v2079 = vadd.s32 %v1904, 1400
  %v2080 = vadd.s32 %v1904, 1408
  %v2081 = vadd.s32 %v1904, 1416
  %v2082 = vadd.s32 %v1904, 1424
  %v2083 = vadd.s32 %v1904, 1432
  %v2084 = vadd.s32 %v1904, 1440
  %v2085 = vadd.s32 %v1904, 1448
  %v2086 = vadd.s32 %v1904, 1456
  %v2087 = vadd.s32 %v1904, 1464
  %v2088 = vadd.s32 %v1904, 1472
  %v2089 = vadd.s32 %v1904, 1480
  %v2090 = vadd.s32 %v1904, 1488
  %v2091 = vadd.s32 %v1904, 1496
  %v2092 = vadd.s32 %v1904, 1504
  %v2093 = vadd.s32 %v1904, 1512
  %v2094 = vadd.s32 %v1904, 1520
  %v2095 = vadd.s32 %v1904, 1528
  %v2096 = vadd.s32 %v1904, 1536
  %v2097 = vadd.s32 %v1904, 1544
  %v2098 = vadd.s32 %v1904, 1552
  %v2099 = vadd.s32 %v1904, 1560
  %v2100 = vadd.s32 %v1904, 1568
  %v2101 = vadd.s32 %v1904, 1576
  %v2102 = vadd.s32 %v1904, 1584
  %v2103 = vadd.s32 %v1904, 1592
  %v2104 = vadd.s32 %v1904, 1600
  %v2105 = vadd.s32 %v1904, 1608
  %v2106 = vadd.s32 %v1904, 1616
  %v2107 = vadd.s32 %v1904, 1624
  %v2108 = vadd.s32 %v1904, 1632
  %v2109 = vadd.s32 %v1904, 1640
  %v2110 = vadd.s32 %v1904, 1648
  %v2111 = vadd.s32 %v1904, 1656
  %v2112 = vadd.s32 %v1904, 1664
  %v2113 = vadd.s32 %v1904, 1672
  %v2114 = vadd.s32 %v1904, 1680
  %v2115 = vadd.s32 %v1904, 1688
  %v2116 = vadd.s32 %v1904, 1696
  %v2117 = vadd.s32 %v1904, 1704
  %v2118 = vadd.s32 %v1904, 1712
  %v2119 = vadd.s32 %v1904, 1720
  %v2120 = vadd.s32 %v1904, 1728
  %v2121 = vadd.s32 %v1904, 1736
  %v2122 = vadd.s32 %v1904, 1744
  %v2123 = vadd.s32 %v1904, 1752
  %v2124 = vadd.s32 %v1904, 1760
  %v2125 = vadd.s32 %v1904, 1768
  %v2126 = vadd.s32 %v1904, 1776
  %v2127 = vadd.s32 %v1904, 1784
  %v2128 = vadd.s32 %v1904, 1792
  %v2129 = vadd.s32 %v1904, 1800
  %v2130 = vadd.s32 %v1904, 1808
  %v2131 = vadd.s32 %v1904, 1816
  %v2132 = vadd.s32 %v1904, 1824
  %v2133 = vadd.s32 %v1904, 1832
  %v2134 = vadd.s32 %v1904, 1840
  %v2135 = vadd.s32 %v1904, 1848
  %v2136 = vadd.s32 %v1904, 1856
  %v2137 = vadd.s32 %v1904, 1864
  %v2138 = vadd.s32 %v1904, 1872
  %v2139 = vadd.s32 %v1904, 1880
  %v2140 = vadd.s32 %v1904, 1888
  %v2141 = vadd.s32 %v1904, 1896
  %v2142 = vadd.s32 %v1904, 1904
  %v2143 = vadd.s32 %v1904, 1912
  %v2144 = vadd.s32 %v1904, 1920
  %v2145 = vadd.s32 %v1904, 1928
  %v2146 = vadd.s32 %v1904, 1936
  %v2147 = vadd.s32 %v1904, 1944
  %v2148 = vadd.s32 %v1904, 1952
  %v2149 = vadd.s32 %v1904, 1960
  %v2150 = vadd.s32 %v1904, 1968
  %v2151 = vadd.s32 %v1904, 1976
  %v2152 = vadd.s32 %v1904, 1984
  %v2153 = vadd.s32 %v1904, 1992
  %v2154 = vadd.s32 %v1904, 2000
  %v2155 = vadd.s32 %v1904, 2008
  %v2156 = vadd.s32 %v1904, 2016
  %v2157 = vadd.s32 %v1904, 2024
  %v2158 = vadd.s32 %v1904, 2032
  %v2159 = vadd.s32 %v1904, 2040
  %s2160 = smul.u32 0, 2048
  %v2161 = vstv %s2160
  %v2162 = vadd.s32 %v2161, %v1904
  %v2163 = vadd.s32 %v2161, %v1905
  %v2164 = vadd.s32 %v2161, %v1906
  %v2165 = vadd.s32 %v2161, %v1907
  %v2166 = vadd.s32 %v2161, %v1908
  %v2167 = vadd.s32 %v2161, %v1909
  %v2168 = vadd.s32 %v2161, %v1910
  %v2169 = vadd.s32 %v2161, %v1911
  %v2170 = vadd.s32 %v2161, %v1912
  %v2171 = vadd.s32 %v2161, %v1913
  %v2172 = vadd.s32 %v2161, %v1914
  %v2173 = vadd.s32 %v2161, %v1915
  %v2174 = vadd.s32 %v2161, %v1916
  %v2175 = vadd.s32 %v2161, %v1917
  %v2176 = vadd.s32 %v2161, %v1918
  %v2177 = vadd.s32 %v2161, %v1919
  %v2178 = vadd.s32 %v2161, %v1920
  %v2179 = vadd.s32 %v2161, %v1921
  %v2180 = vadd.s32 %v2161, %v1922
  %v2181 = vadd.s32 %v2161, %v1923
  %v2182 = vadd.s32 %v2161, %v1924
  %v2183 = vadd.s32 %v2161, %v1925
  %v2184 = vadd.s32 %v2161, %v1926
  %v2185 = vadd.s32 %v2161, %v1927
  %v2186 = vadd.s32 %v2161, %v1928
  %v2187 = vadd.s32 %v2161, %v1929
  %v2188 = vadd.s32 %v2161, %v1930
  %v2189 = vadd.s32 %v2161, %v1931
  %v2190 = vadd.s32 %v2161, %v1932
  %v2191 = vadd.s32 %v2161, %v1933
  %v2192 = vadd.s32 %v2161, %v1934
  %v2193 = vadd.s32 %v2161, %v1935
  %v2194 = vadd.s32 %v2161, %v1936
  %v2195 = vadd.s32 %v2161, %v1937
  %v2196 = vadd.s32 %v2161, %v1938
  %v2197 = vadd.s32 %v2161, %v1939
  %v2198 = vadd.s32 %v2161, %v1940
  %v2199 = vadd.s32 %v2161, %v1941
  %v2200 = vadd.s32 %v2161, %v1942
  %v2201 = vadd.s32 %v2161, %v1943
  %v2202 = vadd.s32 %v2161, %v1944
  %v2203 = vadd.s32 %v2161, %v1945
  %v2204 = vadd.s32 %v2161, %v1946
  %v2205 = vadd.s32 %v2161, %v1947
  %v2206 = vadd.s32 %v2161, %v1948
  %v2207 = vadd.s32 %v2161, %v1949
  %v2208 = vadd.s32 %v2161, %v1950
  %v2209 = vadd.s32 %v2161, %v1951
  %v2210 = vadd.s32 %v2161, %v1952
  %v2211 = vadd.s32 %v2161, %v1953
  %v2212 = vadd.s32 %v2161, %v1954
  %v2213 = vadd.s32 %v2161, %v1955
  %v2214 = vadd.s32 %v2161, %v1956
  %v2215 = vadd.s32 %v2161, %v1957
  %v2216 = vadd.s32 %v2161, %v1958
  %v2217 = vadd.s32 %v2161, %v1959
  %v2218 = vadd.s32 %v2161, %v1960
  %v2219 = vadd.s32 %v2161, %v1961
  %v2220 = vadd.s32 %v2161, %v1962
  %v2221 = vadd.s32 %v2161, %v1963
  %v2222 = vadd.s32 %v2161, %v1964
  %v2223 = vadd.s32 %v2161, %v1965
  %v2224 = vadd.s32 %v2161, %v1966
  %v2225 = vadd.s32 %v2161, %v1967
  %v2226 = vadd.s32 %v2161, %v1968
  %v2227 = vadd.s32 %v2161, %v1969
  %v2228 = vadd.s32 %v2161, %v1970
  %v2229 = vadd.s32 %v2161, %v1971
  %v2230 = vadd.s32 %v2161, %v1972
  %v2231 = vadd.s32 %v2161, %v1973
  %v2232 = vadd.s32 %v2161, %v1974
  %v2233 = vadd.s32 %v2161, %v1975
  %v2234 = vadd.s32 %v2161, %v1976
  %v2235 = vadd.s32 %v2161, %v1977
  %v2236 = vadd.s32 %v2161, %v1978
  %v2237 = vadd.s32 %v2161, %v1979
  %v2238 = vadd.s32 %v2161, %v1980
  %v2239 = vadd.s32 %v2161, %v1981
  %v2240 = vadd.s32 %v2161, %v1982
  %v2241 = vadd.s32 %v2161, %v1983
  %v2242 = vadd.s32 %v2161, %v1984
  %v2243 = vadd.s32 %v2161, %v1985
  %v2244 = vadd.s32 %v2161, %v1986
  %v2245 = vadd.s32 %v2161, %v1987
  %v2246 = vadd.s32 %v2161, %v1988
  %v2247 = vadd.s32 %v2161, %v1989
  %v2248 = vadd.s32 %v2161, %v1990
  %v2249 = vadd.s32 %v2161, %v1991
  %v2250 = vadd.s32 %v2161, %v1992
  %v2251 = vadd.s32 %v2161, %v1993
  %v2252 = vadd.s32 %v2161, %v1994
  %v2253 = vadd.s32 %v2161, %v1995
  %v2254 = vadd.s32 %v2161, %v1996
  %v2255 = vadd.s32 %v2161, %v1997
  %v2256 = vadd.s32 %v2161, %v1998
  %v2257 = vadd.s32 %v2161, %v1999
  %v2258 = vadd.s32 %v2161, %v2000
  %v2259 = vadd.s32 %v2161, %v2001
  %v2260 = vadd.s32 %v2161, %v2002
  %v2261 = vadd.s32 %v2161, %v2003
  %v2262 = vadd.s32 %v2161, %v2004
  %v2263 = vadd.s32 %v2161, %v2005
  %v2264 = vadd.s32 %v2161, %v2006
  %v2265 = vadd.s32 %v2161, %v2007
  %v2266 = vadd.s32 %v2161, %v2008
  %v2267 = vadd.s32 %v2161, %v2009
  %v2268 = vadd.s32 %v2161, %v2010
  %v2269 = vadd.s32 %v2161, %v2011
  %v2270 = vadd.s32 %v2161, %v2012
  %v2271 = vadd.s32 %v2161, %v2013
  %v2272 = vadd.s32 %v2161, %v2014
  %v2273 = vadd.s32 %v2161, %v2015
  %v2274 = vadd.s32 %v2161, %v2016
  %v2275 = vadd.s32 %v2161, %v2017
  %v2276 = vadd.s32 %v2161, %v2018
  %v2277 = vadd.s32 %v2161, %v2019
  %v2278 = vadd.s32 %v2161, %v2020
  %v2279 = vadd.s32 %v2161, %v2021
  %v2280 = vadd.s32 %v2161, %v2022
  %v2281 = vadd.s32 %v2161, %v2023
  %v2282 = vadd.s32 %v2161, %v2024
  %v2283 = vadd.s32 %v2161, %v2025
  %v2284 = vadd.s32 %v2161, %v2026
  %v2285 = vadd.s32 %v2161, %v2027
  %v2286 = vadd.s32 %v2161, %v2028
  %v2287 = vadd.s32 %v2161, %v2029
  %v2288 = vadd.s32 %v2161, %v2030
  %v2289 = vadd.s32 %v2161, %v2031
  %v2290 = vadd.s32 %v2161, %v2032
  %v2291 = vadd.s32 %v2161, %v2033
  %v2292 = vadd.s32 %v2161, %v2034
  %v2293 = vadd.s32 %v2161, %v2035
  %v2294 = vadd.s32 %v2161, %v2036
  %v2295 = vadd.s32 %v2161, %v2037
  %v2296 = vadd.s32 %v2161, %v2038
  %v2297 = vadd.s32 %v2161, %v2039
  %v2298 = vadd.s32 %v2161, %v2040
  %v2299 = vadd.s32 %v2161, %v2041
  %v2300 = vadd.s32 %v2161, %v2042
  %v2301 = vadd.s32 %v2161, %v2043
  %v2302 = vadd.s32 %v2161, %v2044
  %v2303 = vadd.s32 %v2161, %v2045
  %v2304 = vadd.s32 %v2161, %v2046
  %v2305 = vadd.s32 %v2161, %v2047
  %v2306 = vadd.s32 %v2161, %v2048
  %v2307 = vadd.s32 %v2161, %v2049
  %v2308 = vadd.s32 %v2161, %v2050
  %v2309 = vadd.s32 %v2161, %v2051
  %v2310 = vadd.s32 %v2161, %v2052
  %v2311 = vadd.s32 %v2161, %v2053
  %v2312 = vadd.s32 %v2161, %v2054
  %v2313 = vadd.s32 %v2161, %v2055
  %v2314 = vadd.s32 %v2161, %v2056
  %v2315 = vadd.s32 %v2161, %v2057
  %v2316 = vadd.s32 %v2161, %v2058
  %v2317 = vadd.s32 %v2161, %v2059
  %v2318 = vadd.s32 %v2161, %v2060
  %v2319 = vadd.s32 %v2161, %v2061
  %v2320 = vadd.s32 %v2161, %v2062
  %v2321 = vadd.s32 %v2161, %v2063
  %v2322 = vadd.s32 %v2161, %v2064
  %v2323 = vadd.s32 %v2161, %v2065
  %v2324 = vadd.s32 %v2161, %v2066
  %v2325 = vadd.s32 %v2161, %v2067
  %v2326 = vadd.s32 %v2161, %v2068
  %v2327 = vadd.s32 %v2161, %v2069
  %v2328 = vadd.s32 %v2161, %v2070
  %v2329 = vadd.s32 %v2161, %v2071
  %v2330 = vadd.s32 %v2161, %v2072
  %v2331 = vadd.s32 %v2161, %v2073
  %v2332 = vadd.s32 %v2161, %v2074
  %v2333 = vadd.s32 %v2161, %v2075
  %v2334 = vadd.s32 %v2161, %v2076
  %v2335 = vadd.s32 %v2161, %v2077
  %v2336 = vadd.s32 %v2161, %v2078
  %v2337 = vadd.s32 %v2161, %v2079
  %v2338 = vadd.s32 %v2161, %v2080
  %v2339 = vadd.s32 %v2161, %v2081
  %v2340 = vadd.s32 %v2161, %v2082
  %v2341 = vadd.s32 %v2161, %v2083
  %v2342 = vadd.s32 %v2161, %v2084
  %v2343 = vadd.s32 %v2161, %v2085
  %v2344 = vadd.s32 %v2161, %v2086
  %v2345 = vadd.s32 %v2161, %v2087
  %v2346 = vadd.s32 %v2161, %v2088
  %v2347 = vadd.s32 %v2161, %v2089
  %v2348 = vadd.s32 %v2161, %v2090
  %v2349 = vadd.s32 %v2161, %v2091
  %v2350 = vadd.s32 %v2161, %v2092
  %v2351 = vadd.s32 %v2161, %v2093
  %v2352 = vadd.s32 %v2161, %v2094
  %v2353 = vadd.s32 %v2161, %v2095
  %v2354 = vadd.s32 %v2161, %v2096
  %v2355 = vadd.s32 %v2161, %v2097
  %v2356 = vadd.s32 %v2161, %v2098
  %v2357 = vadd.s32 %v2161, %v2099
  %v2358 = vadd.s32 %v2161, %v2100
  %v2359 = vadd.s32 %v2161, %v2101
  %v2360 = vadd.s32 %v2161, %v2102
  %v2361 = vadd.s32 %v2161, %v2103
  %v2362 = vadd.s32 %v2161, %v2104
  %v2363 = vadd.s32 %v2161, %v2105
  %v2364 = vadd.s32 %v2161, %v2106
  %v2365 = vadd.s32 %v2161, %v2107
  %v2366 = vadd.s32 %v2161, %v2108
  %v2367 = vadd.s32 %v2161, %v2109
  %v2368 = vadd.s32 %v2161, %v2110
  %v2369 = vadd.s32 %v2161, %v2111
  %v2370 = vadd.s32 %v2161, %v2112
  %v2371 = vadd.s32 %v2161, %v2113
  %v2372 = vadd.s32 %v2161, %v2114
  %v2373 = vadd.s32 %v2161, %v2115
  %v2374 = vadd.s32 %v2161, %v2116
  %v2375 = vadd.s32 %v2161, %v2117
  %v2376 = vadd.s32 %v2161, %v2118
  %v2377 = vadd.s32 %v2161, %v2119
  %v2378 = vadd.s32 %v2161, %v2120
  %v2379 = vadd.s32 %v2161, %v2121
  %v2380 = vadd.s32 %v2161, %v2122
  %v2381 = vadd.s32 %v2161, %v2123
  %v2382 = vadd.s32 %v2161, %v2124
  %v2383 = vadd.s32 %v2161, %v2125
  %v2384 = vadd.s32 %v2161, %v2126
  %v2385 = vadd.s32 %v2161, %v2127
  %v2386 = vadd.s32 %v2161, %v2128
  %v2387 = vadd.s32 %v2161, %v2129
  %v2388 = vadd.s32 %v2161, %v2130
  %v2389 = vadd.s32 %v2161, %v2131
  %v2390 = vadd.s32 %v2161, %v2132
  %v2391 = vadd.s32 %v2161, %v2133
  %v2392 = vadd.s32 %v2161, %v2134
  %v2393 = vadd.s32 %v2161, %v2135
  %v2394 = vadd.s32 %v2161, %v2136
  %v2395 = vadd.s32 %v2161, %v2137
  %v2396 = vadd.s32 %v2161, %v2138
  %v2397 = vadd.s32 %v2161, %v2139
  %v2398 = vadd.s32 %v2161, %v2140
  %v2399 = vadd.s32 %v2161, %v2141
  %v2400 = vadd.s32 %v2161, %v2142
  %v2401 = vadd.s32 %v2161, %v2143
  %v2402 = vadd.s32 %v2161, %v2144
  %v2403 = vadd.s32 %v2161, %v2145
  %v2404 = vadd.s32 %v2161, %v2146
  %v2405 = vadd.s32 %v2161, %v2147
  %v2406 = vadd.s32 %v2161, %v2148
  %v2407 = vadd.s32 %v2161, %v2149
  %v2408 = vadd.s32 %v2161, %v2150
  %v2409 = vadd.s32 %v2161, %v2151
  %v2410 = vadd.s32 %v2161, %v2152
  %v2411 = vadd.s32 %v2161, %v2153
  %v2412 = vadd.s32 %v2161, %v2154
  %v2413 = vadd.s32 %v2161, %v2155
  %v2414 = vadd.s32 %v2161, %v2156
  %v2415 = vadd.s32 %v2161, %v2157
  %v2416 = vadd.s32 %v2161, %v2158
  %v2417 = vadd.s32 %v2161, %v2159
  %vm2418 = vcmp.lt.s32.totalorder %v2162, 512
  %vm2419 = vcmp.lt.s32.totalorder %v2163, 512
  %vm2420 = vcmp.lt.s32.totalorder %v2164, 512
  %vm2421 = vcmp.lt.s32.totalorder %v2165, 512
  %vm2422 = vcmp.lt.s32.totalorder %v2166, 512
  %vm2423 = vcmp.lt.s32.totalorder %v2167, 512
  %vm2424 = vcmp.lt.s32.totalorder %v2168, 512
  %vm2425 = vcmp.lt.s32.totalorder %v2169, 512
  %vm2426 = vcmp.lt.s32.totalorder %v2170, 512
  %vm2427 = vcmp.lt.s32.totalorder %v2171, 512
  %vm2428 = vcmp.lt.s32.totalorder %v2172, 512
  %vm2429 = vcmp.lt.s32.totalorder %v2173, 512
  %vm2430 = vcmp.lt.s32.totalorder %v2174, 512
  %vm2431 = vcmp.lt.s32.totalorder %v2175, 512
  %vm2432 = vcmp.lt.s32.totalorder %v2176, 512
  %vm2433 = vcmp.lt.s32.totalorder %v2177, 512
  %vm2434 = vcmp.lt.s32.totalorder %v2178, 512
  %vm2435 = vcmp.lt.s32.totalorder %v2179, 512
  %vm2436 = vcmp.lt.s32.totalorder %v2180, 512
  %vm2437 = vcmp.lt.s32.totalorder %v2181, 512
  %vm2438 = vcmp.lt.s32.totalorder %v2182, 512
  %vm2439 = vcmp.lt.s32.totalorder %v2183, 512
  %vm2440 = vcmp.lt.s32.totalorder %v2184, 512
  %vm2441 = vcmp.lt.s32.totalorder %v2185, 512
  %vm2442 = vcmp.lt.s32.totalorder %v2186, 512
  %vm2443 = vcmp.lt.s32.totalorder %v2187, 512
  %vm2444 = vcmp.lt.s32.totalorder %v2188, 512
  %vm2445 = vcmp.lt.s32.totalorder %v2189, 512
  %vm2446 = vcmp.lt.s32.totalorder %v2190, 512
  %vm2447 = vcmp.lt.s32.totalorder %v2191, 512
  %vm2448 = vcmp.lt.s32.totalorder %v2192, 512
  %vm2449 = vcmp.lt.s32.totalorder %v2193, 512
  %vm2450 = vcmp.lt.s32.totalorder %v2194, 512
  %vm2451 = vcmp.lt.s32.totalorder %v2195, 512
  %vm2452 = vcmp.lt.s32.totalorder %v2196, 512
  %vm2453 = vcmp.lt.s32.totalorder %v2197, 512
  %vm2454 = vcmp.lt.s32.totalorder %v2198, 512
  %vm2455 = vcmp.lt.s32.totalorder %v2199, 512
  %vm2456 = vcmp.lt.s32.totalorder %v2200, 512
  %vm2457 = vcmp.lt.s32.totalorder %v2201, 512
  %vm2458 = vcmp.lt.s32.totalorder %v2202, 512
  %vm2459 = vcmp.lt.s32.totalorder %v2203, 512
  %vm2460 = vcmp.lt.s32.totalorder %v2204, 512
  %vm2461 = vcmp.lt.s32.totalorder %v2205, 512
  %vm2462 = vcmp.lt.s32.totalorder %v2206, 512
  %vm2463 = vcmp.lt.s32.totalorder %v2207, 512
  %vm2464 = vcmp.lt.s32.totalorder %v2208, 512
  %vm2465 = vcmp.lt.s32.totalorder %v2209, 512
  %vm2466 = vcmp.lt.s32.totalorder %v2210, 512
  %vm2467 = vcmp.lt.s32.totalorder %v2211, 512
  %vm2468 = vcmp.lt.s32.totalorder %v2212, 512
  %vm2469 = vcmp.lt.s32.totalorder %v2213, 512
  %vm2470 = vcmp.lt.s32.totalorder %v2214, 512
  %vm2471 = vcmp.lt.s32.totalorder %v2215, 512
  %vm2472 = vcmp.lt.s32.totalorder %v2216, 512
  %vm2473 = vcmp.lt.s32.totalorder %v2217, 512
  %vm2474 = vcmp.lt.s32.totalorder %v2218, 512
  %vm2475 = vcmp.lt.s32.totalorder %v2219, 512
  %vm2476 = vcmp.lt.s32.totalorder %v2220, 512
  %vm2477 = vcmp.lt.s32.totalorder %v2221, 512
  %vm2478 = vcmp.lt.s32.totalorder %v2222, 512
  %vm2479 = vcmp.lt.s32.totalorder %v2223, 512
  %vm2480 = vcmp.lt.s32.totalorder %v2224, 512
  %vm2481 = vcmp.lt.s32.totalorder %v2225, 512
  %vm2482 = vcmp.lt.s32.totalorder %v2226, 512
  %vm2483 = vcmp.lt.s32.totalorder %v2227, 512
  %vm2484 = vcmp.lt.s32.totalorder %v2228, 512
  %vm2485 = vcmp.lt.s32.totalorder %v2229, 512
  %vm2486 = vcmp.lt.s32.totalorder %v2230, 512
  %vm2487 = vcmp.lt.s32.totalorder %v2231, 512
  %vm2488 = vcmp.lt.s32.totalorder %v2232, 512
  %vm2489 = vcmp.lt.s32.totalorder %v2233, 512
  %vm2490 = vcmp.lt.s32.totalorder %v2234, 512
  %vm2491 = vcmp.lt.s32.totalorder %v2235, 512
  %vm2492 = vcmp.lt.s32.totalorder %v2236, 512
  %vm2493 = vcmp.lt.s32.totalorder %v2237, 512
  %vm2494 = vcmp.lt.s32.totalorder %v2238, 512
  %vm2495 = vcmp.lt.s32.totalorder %v2239, 512
  %vm2496 = vcmp.lt.s32.totalorder %v2240, 512
  %vm2497 = vcmp.lt.s32.totalorder %v2241, 512
  %vm2498 = vcmp.lt.s32.totalorder %v2242, 512
  %vm2499 = vcmp.lt.s32.totalorder %v2243, 512
  %vm2500 = vcmp.lt.s32.totalorder %v2244, 512
  %vm2501 = vcmp.lt.s32.totalorder %v2245, 512
  %vm2502 = vcmp.lt.s32.totalorder %v2246, 512
  %vm2503 = vcmp.lt.s32.totalorder %v2247, 512
  %vm2504 = vcmp.lt.s32.totalorder %v2248, 512
  %vm2505 = vcmp.lt.s32.totalorder %v2249, 512
  %vm2506 = vcmp.lt.s32.totalorder %v2250, 512
  %vm2507 = vcmp.lt.s32.totalorder %v2251, 512
  %vm2508 = vcmp.lt.s32.totalorder %v2252, 512
  %vm2509 = vcmp.lt.s32.totalorder %v2253, 512
  %vm2510 = vcmp.lt.s32.totalorder %v2254, 512
  %vm2511 = vcmp.lt.s32.totalorder %v2255, 512
  %vm2512 = vcmp.lt.s32.totalorder %v2256, 512
  %vm2513 = vcmp.lt.s32.totalorder %v2257, 512
  %vm2514 = vcmp.lt.s32.totalorder %v2258, 512
  %vm2515 = vcmp.lt.s32.totalorder %v2259, 512
  %vm2516 = vcmp.lt.s32.totalorder %v2260, 512
  %vm2517 = vcmp.lt.s32.totalorder %v2261, 512
  %vm2518 = vcmp.lt.s32.totalorder %v2262, 512
  %vm2519 = vcmp.lt.s32.totalorder %v2263, 512
  %vm2520 = vcmp.lt.s32.totalorder %v2264, 512
  %vm2521 = vcmp.lt.s32.totalorder %v2265, 512
  %vm2522 = vcmp.lt.s32.totalorder %v2266, 512
  %vm2523 = vcmp.lt.s32.totalorder %v2267, 512
  %vm2524 = vcmp.lt.s32.totalorder %v2268, 512
  %vm2525 = vcmp.lt.s32.totalorder %v2269, 512
  %vm2526 = vcmp.lt.s32.totalorder %v2270, 512
  %vm2527 = vcmp.lt.s32.totalorder %v2271, 512
  %vm2528 = vcmp.lt.s32.totalorder %v2272, 512
  %vm2529 = vcmp.lt.s32.totalorder %v2273, 512
  %vm2530 = vcmp.lt.s32.totalorder %v2274, 512
  %vm2531 = vcmp.lt.s32.totalorder %v2275, 512
  %vm2532 = vcmp.lt.s32.totalorder %v2276, 512
  %vm2533 = vcmp.lt.s32.totalorder %v2277, 512
  %vm2534 = vcmp.lt.s32.totalorder %v2278, 512
  %vm2535 = vcmp.lt.s32.totalorder %v2279, 512
  %vm2536 = vcmp.lt.s32.totalorder %v2280, 512
  %vm2537 = vcmp.lt.s32.totalorder %v2281, 512
  %vm2538 = vcmp.lt.s32.totalorder %v2282, 512
  %vm2539 = vcmp.lt.s32.totalorder %v2283, 512
  %vm2540 = vcmp.lt.s32.totalorder %v2284, 512
  %vm2541 = vcmp.lt.s32.totalorder %v2285, 512
  %vm2542 = vcmp.lt.s32.totalorder %v2286, 512
  %vm2543 = vcmp.lt.s32.totalorder %v2287, 512
  %vm2544 = vcmp.lt.s32.totalorder %v2288, 512
  %vm2545 = vcmp.lt.s32.totalorder %v2289, 512
  %vm2546 = vcmp.lt.s32.totalorder %v2290, 512
  %vm2547 = vcmp.lt.s32.totalorder %v2291, 512
  %vm2548 = vcmp.lt.s32.totalorder %v2292, 512
  %vm2549 = vcmp.lt.s32.totalorder %v2293, 512
  %vm2550 = vcmp.lt.s32.totalorder %v2294, 512
  %vm2551 = vcmp.lt.s32.totalorder %v2295, 512
  %vm2552 = vcmp.lt.s32.totalorder %v2296, 512
  %vm2553 = vcmp.lt.s32.totalorder %v2297, 512
  %vm2554 = vcmp.lt.s32.totalorder %v2298, 512
  %vm2555 = vcmp.lt.s32.totalorder %v2299, 512
  %vm2556 = vcmp.lt.s32.totalorder %v2300, 512
  %vm2557 = vcmp.lt.s32.totalorder %v2301, 512
  %vm2558 = vcmp.lt.s32.totalorder %v2302, 512
  %vm2559 = vcmp.lt.s32.totalorder %v2303, 512
  %vm2560 = vcmp.lt.s32.totalorder %v2304, 512
  %vm2561 = vcmp.lt.s32.totalorder %v2305, 512
  %vm2562 = vcmp.lt.s32.totalorder %v2306, 512
  %vm2563 = vcmp.lt.s32.totalorder %v2307, 512
  %vm2564 = vcmp.lt.s32.totalorder %v2308, 512
  %vm2565 = vcmp.lt.s32.totalorder %v2309, 512
  %vm2566 = vcmp.lt.s32.totalorder %v2310, 512
  %vm2567 = vcmp.lt.s32.totalorder %v2311, 512
  %vm2568 = vcmp.lt.s32.totalorder %v2312, 512
  %vm2569 = vcmp.lt.s32.totalorder %v2313, 512
  %vm2570 = vcmp.lt.s32.totalorder %v2314, 512
  %vm2571 = vcmp.lt.s32.totalorder %v2315, 512
  %vm2572 = vcmp.lt.s32.totalorder %v2316, 512
  %vm2573 = vcmp.lt.s32.totalorder %v2317, 512
  %vm2574 = vcmp.lt.s32.totalorder %v2318, 512
  %vm2575 = vcmp.lt.s32.totalorder %v2319, 512
  %vm2576 = vcmp.lt.s32.totalorder %v2320, 512
  %vm2577 = vcmp.lt.s32.totalorder %v2321, 512
  %vm2578 = vcmp.lt.s32.totalorder %v2322, 512
  %vm2579 = vcmp.lt.s32.totalorder %v2323, 512
  %vm2580 = vcmp.lt.s32.totalorder %v2324, 512
  %vm2581 = vcmp.lt.s32.totalorder %v2325, 512
  %vm2582 = vcmp.lt.s32.totalorder %v2326, 512
  %vm2583 = vcmp.lt.s32.totalorder %v2327, 512
  %vm2584 = vcmp.lt.s32.totalorder %v2328, 512
  %vm2585 = vcmp.lt.s32.totalorder %v2329, 512
  %vm2586 = vcmp.lt.s32.totalorder %v2330, 512
  %vm2587 = vcmp.lt.s32.totalorder %v2331, 512
  %vm2588 = vcmp.lt.s32.totalorder %v2332, 512
  %vm2589 = vcmp.lt.s32.totalorder %v2333, 512
  %vm2590 = vcmp.lt.s32.totalorder %v2334, 512
  %vm2591 = vcmp.lt.s32.totalorder %v2335, 512
  %vm2592 = vcmp.lt.s32.totalorder %v2336, 512
  %vm2593 = vcmp.lt.s32.totalorder %v2337, 512
  %vm2594 = vcmp.lt.s32.totalorder %v2338, 512
  %vm2595 = vcmp.lt.s32.totalorder %v2339, 512
  %vm2596 = vcmp.lt.s32.totalorder %v2340, 512
  %vm2597 = vcmp.lt.s32.totalorder %v2341, 512
  %vm2598 = vcmp.lt.s32.totalorder %v2342, 512
  %vm2599 = vcmp.lt.s32.totalorder %v2343, 512
  %vm2600 = vcmp.lt.s32.totalorder %v2344, 512
  %vm2601 = vcmp.lt.s32.totalorder %v2345, 512
  %vm2602 = vcmp.lt.s32.totalorder %v2346, 512
  %vm2603 = vcmp.lt.s32.totalorder %v2347, 512
  %vm2604 = vcmp.lt.s32.totalorder %v2348, 512
  %vm2605 = vcmp.lt.s32.totalorder %v2349, 512
  %vm2606 = vcmp.lt.s32.totalorder %v2350, 512
  %vm2607 = vcmp.lt.s32.totalorder %v2351, 512
  %vm2608 = vcmp.lt.s32.totalorder %v2352, 512
  %vm2609 = vcmp.lt.s32.totalorder %v2353, 512
  %vm2610 = vcmp.lt.s32.totalorder %v2354, 512
  %vm2611 = vcmp.lt.s32.totalorder %v2355, 512
  %vm2612 = vcmp.lt.s32.totalorder %v2356, 512
  %vm2613 = vcmp.lt.s32.totalorder %v2357, 512
  %vm2614 = vcmp.lt.s32.totalorder %v2358, 512
  %vm2615 = vcmp.lt.s32.totalorder %v2359, 512
  %vm2616 = vcmp.lt.s32.totalorder %v2360, 512
  %vm2617 = vcmp.lt.s32.totalorder %v2361, 512
  %vm2618 = vcmp.lt.s32.totalorder %v2362, 512
  %vm2619 = vcmp.lt.s32.totalorder %v2363, 512
  %vm2620 = vcmp.lt.s32.totalorder %v2364, 512
  %vm2621 = vcmp.lt.s32.totalorder %v2365, 512
  %vm2622 = vcmp.lt.s32.totalorder %v2366, 512
  %vm2623 = vcmp.lt.s32.totalorder %v2367, 512
  %vm2624 = vcmp.lt.s32.totalorder %v2368, 512
  %vm2625 = vcmp.lt.s32.totalorder %v2369, 512
  %vm2626 = vcmp.lt.s32.totalorder %v2370, 512
  %vm2627 = vcmp.lt.s32.totalorder %v2371, 512
  %vm2628 = vcmp.lt.s32.totalorder %v2372, 512
  %vm2629 = vcmp.lt.s32.totalorder %v2373, 512
  %vm2630 = vcmp.lt.s32.totalorder %v2374, 512
  %vm2631 = vcmp.lt.s32.totalorder %v2375, 512
  %vm2632 = vcmp.lt.s32.totalorder %v2376, 512
  %vm2633 = vcmp.lt.s32.totalorder %v2377, 512
  %vm2634 = vcmp.lt.s32.totalorder %v2378, 512
  %vm2635 = vcmp.lt.s32.totalorder %v2379, 512
  %vm2636 = vcmp.lt.s32.totalorder %v2380, 512
  %vm2637 = vcmp.lt.s32.totalorder %v2381, 512
  %vm2638 = vcmp.lt.s32.totalorder %v2382, 512
  %vm2639 = vcmp.lt.s32.totalorder %v2383, 512
  %vm2640 = vcmp.lt.s32.totalorder %v2384, 512
  %vm2641 = vcmp.lt.s32.totalorder %v2385, 512
  %vm2642 = vcmp.lt.s32.totalorder %v2386, 512
  %vm2643 = vcmp.lt.s32.totalorder %v2387, 512
  %vm2644 = vcmp.lt.s32.totalorder %v2388, 512
  %vm2645 = vcmp.lt.s32.totalorder %v2389, 512
  %vm2646 = vcmp.lt.s32.totalorder %v2390, 512
  %vm2647 = vcmp.lt.s32.totalorder %v2391, 512
  %vm2648 = vcmp.lt.s32.totalorder %v2392, 512
  %vm2649 = vcmp.lt.s32.totalorder %v2393, 512
  %vm2650 = vcmp.lt.s32.totalorder %v2394, 512
  %vm2651 = vcmp.lt.s32.totalorder %v2395, 512
  %vm2652 = vcmp.lt.s32.totalorder %v2396, 512
  %vm2653 = vcmp.lt.s32.totalorder %v2397, 512
  %vm2654 = vcmp.lt.s32.totalorder %v2398, 512
  %vm2655 = vcmp.lt.s32.totalorder %v2399, 512
  %vm2656 = vcmp.lt.s32.totalorder %v2400, 512
  %vm2657 = vcmp.lt.s32.totalorder %v2401, 512
  %vm2658 = vcmp.lt.s32.totalorder %v2402, 512
  %vm2659 = vcmp.lt.s32.totalorder %v2403, 512
  %vm2660 = vcmp.lt.s32.totalorder %v2404, 512
  %vm2661 = vcmp.lt.s32.totalorder %v2405, 512
  %vm2662 = vcmp.lt.s32.totalorder %v2406, 512
  %vm2663 = vcmp.lt.s32.totalorder %v2407, 512
  %vm2664 = vcmp.lt.s32.totalorder %v2408, 512
  %vm2665 = vcmp.lt.s32.totalorder %v2409, 512
  %vm2666 = vcmp.lt.s32.totalorder %v2410, 512
  %vm2667 = vcmp.lt.s32.totalorder %v2411, 512
  %vm2668 = vcmp.lt.s32.totalorder %v2412, 512
  %vm2669 = vcmp.lt.s32.totalorder %v2413, 512
  %vm2670 = vcmp.lt.s32.totalorder %v2414, 512
  %vm2671 = vcmp.lt.s32.totalorder %v2415, 512
  %vm2672 = vcmp.lt.s32.totalorder %v2416, 512
  %vm2673 = vcmp.lt.s32.totalorder %v2417, 512
  %v2674 = vsel %vm2418, %v1647, inf
  %v2675 = vsel %vm2419, %v1648, inf
  %v2676 = vsel %vm2420, %v1649, inf
  %v2677 = vsel %vm2421, %v1650, inf
  %v2678 = vsel %vm2422, %v1651, inf
  %v2679 = vsel %vm2423, %v1652, inf
  %v2680 = vsel %vm2424, %v1653, inf
  %v2681 = vsel %vm2425, %v1654, inf
  %v2682 = vsel %vm2426, %v1655, inf
  %v2683 = vsel %vm2427, %v1656, inf
  %v2684 = vsel %vm2428, %v1657, inf
  %v2685 = vsel %vm2429, %v1658, inf
  %v2686 = vsel %vm2430, %v1659, inf
  %v2687 = vsel %vm2431, %v1660, inf
  %v2688 = vsel %vm2432, %v1661, inf
  %v2689 = vsel %vm2433, %v1662, inf
  %v2690 = vsel %vm2434, %v1663, inf
  %v2691 = vsel %vm2435, %v1664, inf
  %v2692 = vsel %vm2436, %v1665, inf
  %v2693 = vsel %vm2437, %v1666, inf
  %v2694 = vsel %vm2438, %v1667, inf
  %v2695 = vsel %vm2439, %v1668, inf
  %v2696 = vsel %vm2440, %v1669, inf
  %v2697 = vsel %vm2441, %v1670, inf
  %v2698 = vsel %vm2442, %v1671, inf
  %v2699 = vsel %vm2443, %v1672, inf
  %v2700 = vsel %vm2444, %v1673, inf
  %v2701 = vsel %vm2445, %v1674, inf
  %v2702 = vsel %vm2446, %v1675, inf
  %v2703 = vsel %vm2447, %v1676, inf
  %v2704 = vsel %vm2448, %v1677, inf
  %v2705 = vsel %vm2449, %v1678, inf
  %v2706 = vsel %vm2450, %v1679, inf
  %v2707 = vsel %vm2451, %v1680, inf
  %v2708 = vsel %vm2452, %v1681, inf
  %v2709 = vsel %vm2453, %v1682, inf
  %v2710 = vsel %vm2454, %v1683, inf
  %v2711 = vsel %vm2455, %v1684, inf
  %v2712 = vsel %vm2456, %v1685, inf
  %v2713 = vsel %vm2457, %v1686, inf
  %v2714 = vsel %vm2458, %v1687, inf
  %v2715 = vsel %vm2459, %v1688, inf
  %v2716 = vsel %vm2460, %v1689, inf
  %v2717 = vsel %vm2461, %v1690, inf
  %v2718 = vsel %vm2462, %v1691, inf
  %v2719 = vsel %vm2463, %v1692, inf
  %v2720 = vsel %vm2464, %v1693, inf
  %v2721 = vsel %vm2465, %v1694, inf
  %v2722 = vsel %vm2466, %v1695, inf
  %v2723 = vsel %vm2467, %v1696, inf
  %v2724 = vsel %vm2468, %v1697, inf
  %v2725 = vsel %vm2469, %v1698, inf
  %v2726 = vsel %vm2470, %v1699, inf
  %v2727 = vsel %vm2471, %v1700, inf
  %v2728 = vsel %vm2472, %v1701, inf
  %v2729 = vsel %vm2473, %v1702, inf
  %v2730 = vsel %vm2474, %v1703, inf
  %v2731 = vsel %vm2475, %v1704, inf
  %v2732 = vsel %vm2476, %v1705, inf
  %v2733 = vsel %vm2477, %v1706, inf
  %v2734 = vsel %vm2478, %v1707, inf
  %v2735 = vsel %vm2479, %v1708, inf
  %v2736 = vsel %vm2480, %v1709, inf
  %v2737 = vsel %vm2481, %v1710, inf
  %v2738 = vsel %vm2482, %v1711, inf
  %v2739 = vsel %vm2483, %v1712, inf
  %v2740 = vsel %vm2484, %v1713, inf
  %v2741 = vsel %vm2485, %v1714, inf
  %v2742 = vsel %vm2486, %v1715, inf
  %v2743 = vsel %vm2487, %v1716, inf
  %v2744 = vsel %vm2488, %v1717, inf
  %v2745 = vsel %vm2489, %v1718, inf
  %v2746 = vsel %vm2490, %v1719, inf
  %v2747 = vsel %vm2491, %v1720, inf
  %v2748 = vsel %vm2492, %v1721, inf
  %v2749 = vsel %vm2493, %v1722, inf
  %v2750 = vsel %vm2494, %v1723, inf
  %v2751 = vsel %vm2495, %v1724, inf
  %v2752 = vsel %vm2496, %v1725, inf
  %v2753 = vsel %vm2497, %v1726, inf
  %v2754 = vsel %vm2498, %v1727, inf
  %v2755 = vsel %vm2499, %v1728, inf
  %v2756 = vsel %vm2500, %v1729, inf
  %v2757 = vsel %vm2501, %v1730, inf
  %v2758 = vsel %vm2502, %v1731, inf
  %v2759 = vsel %vm2503, %v1732, inf
  %v2760 = vsel %vm2504, %v1733, inf
  %v2761 = vsel %vm2505, %v1734, inf
  %v2762 = vsel %vm2506, %v1735, inf
  %v2763 = vsel %vm2507, %v1736, inf
  %v2764 = vsel %vm2508, %v1737, inf
  %v2765 = vsel %vm2509, %v1738, inf
  %v2766 = vsel %vm2510, %v1739, inf
  %v2767 = vsel %vm2511, %v1740, inf
  %v2768 = vsel %vm2512, %v1741, inf
  %v2769 = vsel %vm2513, %v1742, inf
  %v2770 = vsel %vm2514, %v1743, inf
  %v2771 = vsel %vm2515, %v1744, inf
  %v2772 = vsel %vm2516, %v1745, inf
  %v2773 = vsel %vm2517, %v1746, inf
  %v2774 = vsel %vm2518, %v1747, inf
  %v2775 = vsel %vm2519, %v1748, inf
  %v2776 = vsel %vm2520, %v1749, inf
  %v2777 = vsel %vm2521, %v1750, inf
  %v2778 = vsel %vm2522, %v1751, inf
  %v2779 = vsel %vm2523, %v1752, inf
  %v2780 = vsel %vm2524, %v1753, inf
  %v2781 = vsel %vm2525, %v1754, inf
  %v2782 = vsel %vm2526, %v1755, inf
  %v2783 = vsel %vm2527, %v1756, inf
  %v2784 = vsel %vm2528, %v1757, inf
  %v2785 = vsel %vm2529, %v1758, inf
  %v2786 = vsel %vm2530, %v1759, inf
  %v2787 = vsel %vm2531, %v1760, inf
  %v2788 = vsel %vm2532, %v1761, inf
  %v2789 = vsel %vm2533, %v1762, inf
  %v2790 = vsel %vm2534, %v1763, inf
  %v2791 = vsel %vm2535, %v1764, inf
  %v2792 = vsel %vm2536, %v1765, inf
  %v2793 = vsel %vm2537, %v1766, inf
  %v2794 = vsel %vm2538, %v1767, inf
  %v2795 = vsel %vm2539, %v1768, inf
  %v2796 = vsel %vm2540, %v1769, inf
  %v2797 = vsel %vm2541, %v1770, inf
  %v2798 = vsel %vm2542, %v1771, inf
  %v2799 = vsel %vm2543, %v1772, inf
  %v2800 = vsel %vm2544, %v1773, inf
  %v2801 = vsel %vm2545, %v1774, inf
  %v2802 = vsel %vm2546, %v1775, inf
  %v2803 = vsel %vm2547, %v1776, inf
  %v2804 = vsel %vm2548, %v1777, inf
  %v2805 = vsel %vm2549, %v1778, inf
  %v2806 = vsel %vm2550, %v1779, inf
  %v2807 = vsel %vm2551, %v1780, inf
  %v2808 = vsel %vm2552, %v1781, inf
  %v2809 = vsel %vm2553, %v1782, inf
  %v2810 = vsel %vm2554, %v1783, inf
  %v2811 = vsel %vm2555, %v1784, inf
  %v2812 = vsel %vm2556, %v1785, inf
  %v2813 = vsel %vm2557, %v1786, inf
  %v2814 = vsel %vm2558, %v1787, inf
  %v2815 = vsel %vm2559, %v1788, inf
  %v2816 = vsel %vm2560, %v1789, inf
  %v2817 = vsel %vm2561, %v1790, inf
  %v2818 = vsel %vm2562, %v1791, inf
  %v2819 = vsel %vm2563, %v1792, inf
  %v2820 = vsel %vm2564, %v1793, inf
  %v2821 = vsel %vm2565, %v1794, inf
  %v2822 = vsel %vm2566, %v1795, inf
  %v2823 = vsel %vm2567, %v1796, inf
  %v2824 = vsel %vm2568, %v1797, inf
  %v2825 = vsel %vm2569, %v1798, inf
  %v2826 = vsel %vm2570, %v1799, inf
  %v2827 = vsel %vm2571, %v1800, inf
  %v2828 = vsel %vm2572, %v1801, inf
  %v2829 = vsel %vm2573, %v1802, inf
  %v2830 = vsel %vm2574, %v1803, inf
  %v2831 = vsel %vm2575, %v1804, inf
  %v2832 = vsel %vm2576, %v1805, inf
  %v2833 = vsel %vm2577, %v1806, inf
  %v2834 = vsel %vm2578, %v1807, inf
  %v2835 = vsel %vm2579, %v1808, inf
  %v2836 = vsel %vm2580, %v1809, inf
  %v2837 = vsel %vm2581, %v1810, inf
  %v2838 = vsel %vm2582, %v1811, inf
  %v2839 = vsel %vm2583, %v1812, inf
  %v2840 = vsel %vm2584, %v1813, inf
  %v2841 = vsel %vm2585, %v1814, inf
  %v2842 = vsel %vm2586, %v1815, inf
  %v2843 = vsel %vm2587, %v1816, inf
  %v2844 = vsel %vm2588, %v1817, inf
  %v2845 = vsel %vm2589, %v1818, inf
  %v2846 = vsel %vm2590, %v1819, inf
  %v2847 = vsel %vm2591, %v1820, inf
  %v2848 = vsel %vm2592, %v1821, inf
  %v2849 = vsel %vm2593, %v1822, inf
  %v2850 = vsel %vm2594, %v1823, inf
  %v2851 = vsel %vm2595, %v1824, inf
  %v2852 = vsel %vm2596, %v1825, inf
  %v2853 = vsel %vm2597, %v1826, inf
  %v2854 = vsel %vm2598, %v1827, inf
  %v2855 = vsel %vm2599, %v1828, inf
  %v2856 = vsel %vm2600, %v1829, inf
  %v2857 = vsel %vm2601, %v1830, inf
  %v2858 = vsel %vm2602, %v1831, inf
  %v2859 = vsel %vm2603, %v1832, inf
  %v2860 = vsel %vm2604, %v1833, inf
  %v2861 = vsel %vm2605, %v1834, inf
  %v2862 = vsel %vm2606, %v1835, inf
  %v2863 = vsel %vm2607, %v1836, inf
  %v2864 = vsel %vm2608, %v1837, inf
  %v2865 = vsel %vm2609, %v1838, inf
  %v2866 = vsel %vm2610, %v1839, inf
  %v2867 = vsel %vm2611, %v1840, inf
  %v2868 = vsel %vm2612, %v1841, inf
  %v2869 = vsel %vm2613, %v1842, inf
  %v2870 = vsel %vm2614, %v1843, inf
  %v2871 = vsel %vm2615, %v1844, inf
  %v2872 = vsel %vm2616, %v1845, inf
  %v2873 = vsel %vm2617, %v1846, inf
  %v2874 = vsel %vm2618, %v1847, inf
  %v2875 = vsel %vm2619, %v1848, inf
  %v2876 = vsel %vm2620, %v1849, inf
  %v2877 = vsel %vm2621, %v1850, inf
  %v2878 = vsel %vm2622, %v1851, inf
  %v2879 = vsel %vm2623, %v1852, inf
  %v2880 = vsel %vm2624, %v1853, inf
  %v2881 = vsel %vm2625, %v1854, inf
  %v2882 = vsel %vm2626, %v1855, inf
  %v2883 = vsel %vm2627, %v1856, inf
  %v2884 = vsel %vm2628, %v1857, inf
  %v2885 = vsel %vm2629, %v1858, inf
  %v2886 = vsel %vm2630, %v1859, inf
  %v2887 = vsel %vm2631, %v1860, inf
  %v2888 = vsel %vm2632, %v1861, inf
  %v2889 = vsel %vm2633, %v1862, inf
  %v2890 = vsel %vm2634, %v1863, inf
  %v2891 = vsel %vm2635, %v1864, inf
  %v2892 = vsel %vm2636, %v1865, inf
  %v2893 = vsel %vm2637, %v1866, inf
  %v2894 = vsel %vm2638, %v1867, inf
  %v2895 = vsel %vm2639, %v1868, inf
  %v2896 = vsel %vm2640, %v1869, inf
  %v2897 = vsel %vm2641, %v1870, inf
  %v2898 = vsel %vm2642, %v1871, inf
  %v2899 = vsel %vm2643, %v1872, inf
  %v2900 = vsel %vm2644, %v1873, inf
  %v2901 = vsel %vm2645, %v1874, inf
  %v2902 = vsel %vm2646, %v1875, inf
  %v2903 = vsel %vm2647, %v1876, inf
  %v2904 = vsel %vm2648, %v1877, inf
  %v2905 = vsel %vm2649, %v1878, inf
  %v2906 = vsel %vm2650, %v1879, inf
  %v2907 = vsel %vm2651, %v1880, inf
  %v2908 = vsel %vm2652, %v1881, inf
  %v2909 = vsel %vm2653, %v1882, inf
  %v2910 = vsel %vm2654, %v1883, inf
  %v2911 = vsel %vm2655, %v1884, inf
  %v2912 = vsel %vm2656, %v1885, inf
  %v2913 = vsel %vm2657, %v1886, inf
  %v2914 = vsel %vm2658, %v1887, inf
  %v2915 = vsel %vm2659, %v1888, inf
  %v2916 = vsel %vm2660, %v1889, inf
  %v2917 = vsel %vm2661, %v1890, inf
  %v2918 = vsel %vm2662, %v1891, inf
  %v2919 = vsel %vm2663, %v1892, inf
  %v2920 = vsel %vm2664, %v1893, inf
  %v2921 = vsel %vm2665, %v1894, inf
  %v2922 = vsel %vm2666, %v1895, inf
  %v2923 = vsel %vm2667, %v1896, inf
  %v2924 = vsel %vm2668, %v1897, inf
  %v2925 = vsel %vm2669, %v1898, inf
  %v2926 = vsel %vm2670, %v1899, inf
  %v2927 = vsel %vm2671, %v1900, inf
  %v2928 = vsel %vm2672, %v1901, inf
  %v2929 = vsel %vm2673, %v1902, inf
  %v2930 = vsel %vm2418, %v1647, -inf
  %v2931 = vsel %vm2419, %v1648, -inf
  %v2932 = vsel %vm2420, %v1649, -inf
  %v2933 = vsel %vm2421, %v1650, -inf
  %v2934 = vsel %vm2422, %v1651, -inf
  %v2935 = vsel %vm2423, %v1652, -inf
  %v2936 = vsel %vm2424, %v1653, -inf
  %v2937 = vsel %vm2425, %v1654, -inf
  %v2938 = vsel %vm2426, %v1655, -inf
  %v2939 = vsel %vm2427, %v1656, -inf
  %v2940 = vsel %vm2428, %v1657, -inf
  %v2941 = vsel %vm2429, %v1658, -inf
  %v2942 = vsel %vm2430, %v1659, -inf
  %v2943 = vsel %vm2431, %v1660, -inf
  %v2944 = vsel %vm2432, %v1661, -inf
  %v2945 = vsel %vm2433, %v1662, -inf
  %v2946 = vsel %vm2434, %v1663, -inf
  %v2947 = vsel %vm2435, %v1664, -inf
  %v2948 = vsel %vm2436, %v1665, -inf
  %v2949 = vsel %vm2437, %v1666, -inf
  %v2950 = vsel %vm2438, %v1667, -inf
  %v2951 = vsel %vm2439, %v1668, -inf
  %v2952 = vsel %vm2440, %v1669, -inf
  %v2953 = vsel %vm2441, %v1670, -inf
  %v2954 = vsel %vm2442, %v1671, -inf
  %v2955 = vsel %vm2443, %v1672, -inf
  %v2956 = vsel %vm2444, %v1673, -inf
  %v2957 = vsel %vm2445, %v1674, -inf
  %v2958 = vsel %vm2446, %v1675, -inf
  %v2959 = vsel %vm2447, %v1676, -inf
  %v2960 = vsel %vm2448, %v1677, -inf
  %v2961 = vsel %vm2449, %v1678, -inf
  %v2962 = vsel %vm2450, %v1679, -inf
  %v2963 = vsel %vm2451, %v1680, -inf
  %v2964 = vsel %vm2452, %v1681, -inf
  %v2965 = vsel %vm2453, %v1682, -inf
  %v2966 = vsel %vm2454, %v1683, -inf
  %v2967 = vsel %vm2455, %v1684, -inf
  %v2968 = vsel %vm2456, %v1685, -inf
  %v2969 = vsel %vm2457, %v1686, -inf
  %v2970 = vsel %vm2458, %v1687, -inf
  %v2971 = vsel %vm2459, %v1688, -inf
  %v2972 = vsel %vm2460, %v1689, -inf
  %v2973 = vsel %vm2461, %v1690, -inf
  %v2974 = vsel %vm2462, %v1691, -inf
  %v2975 = vsel %vm2463, %v1692, -inf
  %v2976 = vsel %vm2464, %v1693, -inf
  %v2977 = vsel %vm2465, %v1694, -inf
  %v2978 = vsel %vm2466, %v1695, -inf
  %v2979 = vsel %vm2467, %v1696, -inf
  %v2980 = vsel %vm2468, %v1697, -inf
  %v2981 = vsel %vm2469, %v1698, -inf
  %v2982 = vsel %vm2470, %v1699, -inf
  %v2983 = vsel %vm2471, %v1700, -inf
  %v2984 = vsel %vm2472, %v1701, -inf
  %v2985 = vsel %vm2473, %v1702, -inf
  %v2986 = vsel %vm2474, %v1703, -inf
  %v2987 = vsel %vm2475, %v1704, -inf
  %v2988 = vsel %vm2476, %v1705, -inf
  %v2989 = vsel %vm2477, %v1706, -inf
  %v2990 = vsel %vm2478, %v1707, -inf
  %v2991 = vsel %vm2479, %v1708, -inf
  %v2992 = vsel %vm2480, %v1709, -inf
  %v2993 = vsel %vm2481, %v1710, -inf
  %v2994 = vsel %vm2482, %v1711, -inf
  %v2995 = vsel %vm2483, %v1712, -inf
  %v2996 = vsel %vm2484, %v1713, -inf
  %v2997 = vsel %vm2485, %v1714, -inf
  %v2998 = vsel %vm2486, %v1715, -inf
  %v2999 = vsel %vm2487, %v1716, -inf
  %v3000 = vsel %vm2488, %v1717, -inf
  %v3001 = vsel %vm2489, %v1718, -inf
  %v3002 = vsel %vm2490, %v1719, -inf
  %v3003 = vsel %vm2491, %v1720, -inf
  %v3004 = vsel %vm2492, %v1721, -inf
  %v3005 = vsel %vm2493, %v1722, -inf
  %v3006 = vsel %vm2494, %v1723, -inf
  %v3007 = vsel %vm2495, %v1724, -inf
  %v3008 = vsel %vm2496, %v1725, -inf
  %v3009 = vsel %vm2497, %v1726, -inf
  %v3010 = vsel %vm2498, %v1727, -inf
  %v3011 = vsel %vm2499, %v1728, -inf
  %v3012 = vsel %vm2500, %v1729, -inf
  %v3013 = vsel %vm2501, %v1730, -inf
  %v3014 = vsel %vm2502, %v1731, -inf
  %v3015 = vsel %vm2503, %v1732, -inf
  %v3016 = vsel %vm2504, %v1733, -inf
  %v3017 = vsel %vm2505, %v1734, -inf
  %v3018 = vsel %vm2506, %v1735, -inf
  %v3019 = vsel %vm2507, %v1736, -inf
  %v3020 = vsel %vm2508, %v1737, -inf
  %v3021 = vsel %vm2509, %v1738, -inf
  %v3022 = vsel %vm2510, %v1739, -inf
  %v3023 = vsel %vm2511, %v1740, -inf
  %v3024 = vsel %vm2512, %v1741, -inf
  %v3025 = vsel %vm2513, %v1742, -inf
  %v3026 = vsel %vm2514, %v1743, -inf
  %v3027 = vsel %vm2515, %v1744, -inf
  %v3028 = vsel %vm2516, %v1745, -inf
  %v3029 = vsel %vm2517, %v1746, -inf
  %v3030 = vsel %vm2518, %v1747, -inf
  %v3031 = vsel %vm2519, %v1748, -inf
  %v3032 = vsel %vm2520, %v1749, -inf
  %v3033 = vsel %vm2521, %v1750, -inf
  %v3034 = vsel %vm2522, %v1751, -inf
  %v3035 = vsel %vm2523, %v1752, -inf
  %v3036 = vsel %vm2524, %v1753, -inf
  %v3037 = vsel %vm2525, %v1754, -inf
  %v3038 = vsel %vm2526, %v1755, -inf
  %v3039 = vsel %vm2527, %v1756, -inf
  %v3040 = vsel %vm2528, %v1757, -inf
  %v3041 = vsel %vm2529, %v1758, -inf
  %v3042 = vsel %vm2530, %v1759, -inf
  %v3043 = vsel %vm2531, %v1760, -inf
  %v3044 = vsel %vm2532, %v1761, -inf
  %v3045 = vsel %vm2533, %v1762, -inf
  %v3046 = vsel %vm2534, %v1763, -inf
  %v3047 = vsel %vm2535, %v1764, -inf
  %v3048 = vsel %vm2536, %v1765, -inf
  %v3049 = vsel %vm2537, %v1766, -inf
  %v3050 = vsel %vm2538, %v1767, -inf
  %v3051 = vsel %vm2539, %v1768, -inf
  %v3052 = vsel %vm2540, %v1769, -inf
  %v3053 = vsel %vm2541, %v1770, -inf
  %v3054 = vsel %vm2542, %v1771, -inf
  %v3055 = vsel %vm2543, %v1772, -inf
  %v3056 = vsel %vm2544, %v1773, -inf
  %v3057 = vsel %vm2545, %v1774, -inf
  %v3058 = vsel %vm2546, %v1775, -inf
  %v3059 = vsel %vm2547, %v1776, -inf
  %v3060 = vsel %vm2548, %v1777, -inf
  %v3061 = vsel %vm2549, %v1778, -inf
  %v3062 = vsel %vm2550, %v1779, -inf
  %v3063 = vsel %vm2551, %v1780, -inf
  %v3064 = vsel %vm2552, %v1781, -inf
  %v3065 = vsel %vm2553, %v1782, -inf
  %v3066 = vsel %vm2554, %v1783, -inf
  %v3067 = vsel %vm2555, %v1784, -inf
  %v3068 = vsel %vm2556, %v1785, -inf
  %v3069 = vsel %vm2557, %v1786, -inf
  %v3070 = vsel %vm2558, %v1787, -inf
  %v3071 = vsel %vm2559, %v1788, -inf
  %v3072 = vsel %vm2560, %v1789, -inf
  %v3073 = vsel %vm2561, %v1790, -inf
  %v3074 = vsel %vm2562, %v1791, -inf
  %v3075 = vsel %vm2563, %v1792, -inf
  %v3076 = vsel %vm2564, %v1793, -inf
  %v3077 = vsel %vm2565, %v1794, -inf
  %v3078 = vsel %vm2566, %v1795, -inf
  %v3079 = vsel %vm2567, %v1796, -inf
  %v3080 = vsel %vm2568, %v1797, -inf
  %v3081 = vsel %vm2569, %v1798, -inf
  %v3082 = vsel %vm2570, %v1799, -inf
  %v3083 = vsel %vm2571, %v1800, -inf
  %v3084 = vsel %vm2572, %v1801, -inf
  %v3085 = vsel %vm2573, %v1802, -inf
  %v3086 = vsel %vm2574, %v1803, -inf
  %v3087 = vsel %vm2575, %v1804, -inf
  %v3088 = vsel %vm2576, %v1805, -inf
  %v3089 = vsel %vm2577, %v1806, -inf
  %v3090 = vsel %vm2578, %v1807, -inf
  %v3091 = vsel %vm2579, %v1808, -inf
  %v3092 = vsel %vm2580, %v1809, -inf
  %v3093 = vsel %vm2581, %v1810, -inf
  %v3094 = vsel %vm2582, %v1811, -inf
  %v3095 = vsel %vm2583, %v1812, -inf
  %v3096 = vsel %vm2584, %v1813, -inf
  %v3097 = vsel %vm2585, %v1814, -inf
  %v3098 = vsel %vm2586, %v1815, -inf
  %v3099 = vsel %vm2587, %v1816, -inf
  %v3100 = vsel %vm2588, %v1817, -inf
  %v3101 = vsel %vm2589, %v1818, -inf
  %v3102 = vsel %vm2590, %v1819, -inf
  %v3103 = vsel %vm2591, %v1820, -inf
  %v3104 = vsel %vm2592, %v1821, -inf
  %v3105 = vsel %vm2593, %v1822, -inf
  %v3106 = vsel %vm2594, %v1823, -inf
  %v3107 = vsel %vm2595, %v1824, -inf
  %v3108 = vsel %vm2596, %v1825, -inf
  %v3109 = vsel %vm2597, %v1826, -inf
  %v3110 = vsel %vm2598, %v1827, -inf
  %v3111 = vsel %vm2599, %v1828, -inf
  %v3112 = vsel %vm2600, %v1829, -inf
  %v3113 = vsel %vm2601, %v1830, -inf
  %v3114 = vsel %vm2602, %v1831, -inf
  %v3115 = vsel %vm2603, %v1832, -inf
  %v3116 = vsel %vm2604, %v1833, -inf
  %v3117 = vsel %vm2605, %v1834, -inf
  %v3118 = vsel %vm2606, %v1835, -inf
  %v3119 = vsel %vm2607, %v1836, -inf
  %v3120 = vsel %vm2608, %v1837, -inf
  %v3121 = vsel %vm2609, %v1838, -inf
  %v3122 = vsel %vm2610, %v1839, -inf
  %v3123 = vsel %vm2611, %v1840, -inf
  %v3124 = vsel %vm2612, %v1841, -inf
  %v3125 = vsel %vm2613, %v1842, -inf
  %v3126 = vsel %vm2614, %v1843, -inf
  %v3127 = vsel %vm2615, %v1844, -inf
  %v3128 = vsel %vm2616, %v1845, -inf
  %v3129 = vsel %vm2617, %v1846, -inf
  %v3130 = vsel %vm2618, %v1847, -inf
  %v3131 = vsel %vm2619, %v1848, -inf
  %v3132 = vsel %vm2620, %v1849, -inf
  %v3133 = vsel %vm2621, %v1850, -inf
  %v3134 = vsel %vm2622, %v1851, -inf
  %v3135 = vsel %vm2623, %v1852, -inf
  %v3136 = vsel %vm2624, %v1853, -inf
  %v3137 = vsel %vm2625, %v1854, -inf
  %v3138 = vsel %vm2626, %v1855, -inf
  %v3139 = vsel %vm2627, %v1856, -inf
  %v3140 = vsel %vm2628, %v1857, -inf
  %v3141 = vsel %vm2629, %v1858, -inf
  %v3142 = vsel %vm2630, %v1859, -inf
  %v3143 = vsel %vm2631, %v1860, -inf
  %v3144 = vsel %vm2632, %v1861, -inf
  %v3145 = vsel %vm2633, %v1862, -inf
  %v3146 = vsel %vm2634, %v1863, -inf
  %v3147 = vsel %vm2635, %v1864, -inf
  %v3148 = vsel %vm2636, %v1865, -inf
  %v3149 = vsel %vm2637, %v1866, -inf
  %v3150 = vsel %vm2638, %v1867, -inf
  %v3151 = vsel %vm2639, %v1868, -inf
  %v3152 = vsel %vm2640, %v1869, -inf
  %v3153 = vsel %vm2641, %v1870, -inf
  %v3154 = vsel %vm2642, %v1871, -inf
  %v3155 = vsel %vm2643, %v1872, -inf
  %v3156 = vsel %vm2644, %v1873, -inf
  %v3157 = vsel %vm2645, %v1874, -inf
  %v3158 = vsel %vm2646, %v1875, -inf
  %v3159 = vsel %vm2647, %v1876, -inf
  %v3160 = vsel %vm2648, %v1877, -inf
  %v3161 = vsel %vm2649, %v1878, -inf
  %v3162 = vsel %vm2650, %v1879, -inf
  %v3163 = vsel %vm2651, %v1880, -inf
  %v3164 = vsel %vm2652, %v1881, -inf
  %v3165 = vsel %vm2653, %v1882, -inf
  %v3166 = vsel %vm2654, %v1883, -inf
  %v3167 = vsel %vm2655, %v1884, -inf
  %v3168 = vsel %vm2656, %v1885, -inf
  %v3169 = vsel %vm2657, %v1886, -inf
  %v3170 = vsel %vm2658, %v1887, -inf
  %v3171 = vsel %vm2659, %v1888, -inf
  %v3172 = vsel %vm2660, %v1889, -inf
  %v3173 = vsel %vm2661, %v1890, -inf
  %v3174 = vsel %vm2662, %v1891, -inf
  %v3175 = vsel %vm2663, %v1892, -inf
  %v3176 = vsel %vm2664, %v1893, -inf
  %v3177 = vsel %vm2665, %v1894, -inf
  %v3178 = vsel %vm2666, %v1895, -inf
  %v3179 = vsel %vm2667, %v1896, -inf
  %v3180 = vsel %vm2668, %v1897, -inf
  %v3181 = vsel %vm2669, %v1898, -inf
  %v3182 = vsel %vm2670, %v1899, -inf
  %v3183 = vsel %vm2671, %v1900, -inf
  %v3184 = vsel %vm2672, %v1901, -inf
  %v3185 = vsel %vm2673, %v1902, -inf
  %v3186 = vmin.f32 %v2674, %v2678
  %v3187 = vmin.f32 %v2675, %v2679
  %v3188 = vmin.f32 %v2676, %v2680
  %v3189 = vmin.f32 %v2677, %v2681
  %v3190 = vmin.f32 %v3186, %v2682
  %v3191 = vmin.f32 %v3187, %v2683
  %v3192 = vmin.f32 %v3188, %v2684
  %v3193 = vmin.f32 %v3189, %v2685
  %v3194 = vmin.f32 %v3190, %v2686
  %v3195 = vmin.f32 %v3191, %v2687
  %v3196 = vmin.f32 %v3192, %v2688
  %v3197 = vmin.f32 %v3193, %v2689
  %v3198 = vmin.f32 %v3194, %v2690
  %v3199 = vmin.f32 %v3195, %v2691
  %v3200 = vmin.f32 %v3196, %v2692
  %v3201 = vmin.f32 %v3197, %v2693
  %v3202 = vmin.f32 %v3198, %v2694
  %v3203 = vmin.f32 %v3199, %v2695
  %v3204 = vmin.f32 %v3200, %v2696
  %v3205 = vmin.f32 %v3201, %v2697
  %v3206 = vmin.f32 %v3202, %v2698
  %v3207 = vmin.f32 %v3203, %v2699
  %v3208 = vmin.f32 %v3204, %v2700
  %v3209 = vmin.f32 %v3205, %v2701
  %v3210 = vmin.f32 %v3206, %v2702
  %v3211 = vmin.f32 %v3207, %v2703
  %v3212 = vmin.f32 %v3208, %v2704
  %v3213 = vmin.f32 %v3209, %v2705
  %v3214 = vmin.f32 %v3210, %v2706
  %v3215 = vmin.f32 %v3211, %v2707
  %v3216 = vmin.f32 %v3212, %v2708
  %v3217 = vmin.f32 %v3213, %v2709
  %v3218 = vmin.f32 %v3214, %v2710
  %v3219 = vmin.f32 %v3215, %v2711
  %v3220 = vmin.f32 %v3216, %v2712
  %v3221 = vmin.f32 %v3217, %v2713
  %v3222 = vmin.f32 %v3218, %v2714
  %v3223 = vmin.f32 %v3219, %v2715
  %v3224 = vmin.f32 %v3220, %v2716
  %v3225 = vmin.f32 %v3221, %v2717
  %v3226 = vmin.f32 %v3222, %v2718
  %v3227 = vmin.f32 %v3223, %v2719
  %v3228 = vmin.f32 %v3224, %v2720
  %v3229 = vmin.f32 %v3225, %v2721
  %v3230 = vmin.f32 %v3226, %v2722
  %v3231 = vmin.f32 %v3227, %v2723
  %v3232 = vmin.f32 %v3228, %v2724
  %v3233 = vmin.f32 %v3229, %v2725
  %v3234 = vmin.f32 %v3230, %v2726
  %v3235 = vmin.f32 %v3231, %v2727
  %v3236 = vmin.f32 %v3232, %v2728
  %v3237 = vmin.f32 %v3233, %v2729
  %v3238 = vmin.f32 %v3234, %v2730
  %v3239 = vmin.f32 %v3235, %v2731
  %v3240 = vmin.f32 %v3236, %v2732
  %v3241 = vmin.f32 %v3237, %v2733
  %v3242 = vmin.f32 %v3238, %v2734
  %v3243 = vmin.f32 %v3239, %v2735
  %v3244 = vmin.f32 %v3240, %v2736
  %v3245 = vmin.f32 %v3241, %v2737
  %v3246 = vmin.f32 %v3242, %v2738
  %v3247 = vmin.f32 %v3243, %v2739
  %v3248 = vmin.f32 %v3244, %v2740
  %v3249 = vmin.f32 %v3245, %v2741
  %v3250 = vmin.f32 %v3246, %v2742
  %v3251 = vmin.f32 %v3247, %v2743
  %v3252 = vmin.f32 %v3248, %v2744
  %v3253 = vmin.f32 %v3249, %v2745
  %v3254 = vmin.f32 %v3250, %v2746
  %v3255 = vmin.f32 %v3251, %v2747
  %v3256 = vmin.f32 %v3252, %v2748
  %v3257 = vmin.f32 %v3253, %v2749
  %v3258 = vmin.f32 %v3254, %v2750
  %v3259 = vmin.f32 %v3255, %v2751
  %v3260 = vmin.f32 %v3256, %v2752
  %v3261 = vmin.f32 %v3257, %v2753
  %v3262 = vmin.f32 %v3258, %v2754
  %v3263 = vmin.f32 %v3259, %v2755
  %v3264 = vmin.f32 %v3260, %v2756
  %v3265 = vmin.f32 %v3261, %v2757
  %v3266 = vmin.f32 %v3262, %v2758
  %v3267 = vmin.f32 %v3263, %v2759
  %v3268 = vmin.f32 %v3264, %v2760
  %v3269 = vmin.f32 %v3265, %v2761
  %v3270 = vmin.f32 %v3266, %v2762
  %v3271 = vmin.f32 %v3267, %v2763
  %v3272 = vmin.f32 %v3268, %v2764
  %v3273 = vmin.f32 %v3269, %v2765
  %v3274 = vmin.f32 %v3270, %v2766
  %v3275 = vmin.f32 %v3271, %v2767
  %v3276 = vmin.f32 %v3272, %v2768
  %v3277 = vmin.f32 %v3273, %v2769
  %v3278 = vmin.f32 %v3274, %v2770
  %v3279 = vmin.f32 %v3275, %v2771
  %v3280 = vmin.f32 %v3276, %v2772
  %v3281 = vmin.f32 %v3277, %v2773
  %v3282 = vmin.f32 %v3278, %v2774
  %v3283 = vmin.f32 %v3279, %v2775
  %v3284 = vmin.f32 %v3280, %v2776
  %v3285 = vmin.f32 %v3281, %v2777
  %v3286 = vmin.f32 %v3282, %v2778
  %v3287 = vmin.f32 %v3283, %v2779
  %v3288 = vmin.f32 %v3284, %v2780
  %v3289 = vmin.f32 %v3285, %v2781
  %v3290 = vmin.f32 %v3286, %v2782
  %v3291 = vmin.f32 %v3287, %v2783
  %v3292 = vmin.f32 %v3288, %v2784
  %v3293 = vmin.f32 %v3289, %v2785
  %v3294 = vmin.f32 %v3290, %v2786
  %v3295 = vmin.f32 %v3291, %v2787
  %v3296 = vmin.f32 %v3292, %v2788
  %v3297 = vmin.f32 %v3293, %v2789
  %v3298 = vmin.f32 %v3294, %v2790
  %v3299 = vmin.f32 %v3295, %v2791
  %v3300 = vmin.f32 %v3296, %v2792
  %v3301 = vmin.f32 %v3297, %v2793
  %v3302 = vmin.f32 %v3298, %v2794
  %v3303 = vmin.f32 %v3299, %v2795
  %v3304 = vmin.f32 %v3300, %v2796
  %v3305 = vmin.f32 %v3301, %v2797
  %v3306 = vmin.f32 %v3302, %v2798
  %v3307 = vmin.f32 %v3303, %v2799
  %v3308 = vmin.f32 %v3304, %v2800
  %v3309 = vmin.f32 %v3305, %v2801
  %v3310 = vmin.f32 %v3306, %v2802
  %v3311 = vmin.f32 %v3307, %v2803
  %v3312 = vmin.f32 %v3308, %v2804
  %v3313 = vmin.f32 %v3309, %v2805
  %v3314 = vmin.f32 %v3310, %v2806
  %v3315 = vmin.f32 %v3311, %v2807
  %v3316 = vmin.f32 %v3312, %v2808
  %v3317 = vmin.f32 %v3313, %v2809
  %v3318 = vmin.f32 %v3314, %v2810
  %v3319 = vmin.f32 %v3315, %v2811
  %v3320 = vmin.f32 %v3316, %v2812
  %v3321 = vmin.f32 %v3317, %v2813
  %v3322 = vmin.f32 %v3318, %v2814
  %v3323 = vmin.f32 %v3319, %v2815
  %v3324 = vmin.f32 %v3320, %v2816
  %v3325 = vmin.f32 %v3321, %v2817
  %v3326 = vmin.f32 %v3322, %v2818
  %v3327 = vmin.f32 %v3323, %v2819
  %v3328 = vmin.f32 %v3324, %v2820
  %v3329 = vmin.f32 %v3325, %v2821
  %v3330 = vmin.f32 %v3326, %v2822
  %v3331 = vmin.f32 %v3327, %v2823
  %v3332 = vmin.f32 %v3328, %v2824
  %v3333 = vmin.f32 %v3329, %v2825
  %v3334 = vmin.f32 %v3330, %v2826
  %v3335 = vmin.f32 %v3331, %v2827
  %v3336 = vmin.f32 %v3332, %v2828
  %v3337 = vmin.f32 %v3333, %v2829
  %v3338 = vmin.f32 %v3334, %v2830
  %v3339 = vmin.f32 %v3335, %v2831
  %v3340 = vmin.f32 %v3336, %v2832
  %v3341 = vmin.f32 %v3337, %v2833
  %v3342 = vmin.f32 %v3338, %v2834
  %v3343 = vmin.f32 %v3339, %v2835
  %v3344 = vmin.f32 %v3340, %v2836
  %v3345 = vmin.f32 %v3341, %v2837
  %v3346 = vmin.f32 %v3342, %v2838
  %v3347 = vmin.f32 %v3343, %v2839
  %v3348 = vmin.f32 %v3344, %v2840
  %v3349 = vmin.f32 %v3345, %v2841
  %v3350 = vmin.f32 %v3346, %v2842
  %v3351 = vmin.f32 %v3347, %v2843
  %v3352 = vmin.f32 %v3348, %v2844
  %v3353 = vmin.f32 %v3349, %v2845
  %v3354 = vmin.f32 %v3350, %v2846
  %v3355 = vmin.f32 %v3351, %v2847
  %v3356 = vmin.f32 %v3352, %v2848
  %v3357 = vmin.f32 %v3353, %v2849
  %v3358 = vmin.f32 %v3354, %v2850
  %v3359 = vmin.f32 %v3355, %v2851
  %v3360 = vmin.f32 %v3356, %v2852
  %v3361 = vmin.f32 %v3357, %v2853
  %v3362 = vmin.f32 %v3358, %v2854
  %v3363 = vmin.f32 %v3359, %v2855
  %v3364 = vmin.f32 %v3360, %v2856
  %v3365 = vmin.f32 %v3361, %v2857
  %v3366 = vmin.f32 %v3362, %v2858
  %v3367 = vmin.f32 %v3363, %v2859
  %v3368 = vmin.f32 %v3364, %v2860
  %v3369 = vmin.f32 %v3365, %v2861
  %v3370 = vmin.f32 %v3366, %v2862
  %v3371 = vmin.f32 %v3367, %v2863
  %v3372 = vmin.f32 %v3368, %v2864
  %v3373 = vmin.f32 %v3369, %v2865
  %v3374 = vmin.f32 %v3370, %v2866
  %v3375 = vmin.f32 %v3371, %v2867
  %v3376 = vmin.f32 %v3372, %v2868
  %v3377 = vmin.f32 %v3373, %v2869
  %v3378 = vmin.f32 %v3374, %v2870
  %v3379 = vmin.f32 %v3375, %v2871
  %v3380 = vmin.f32 %v3376, %v2872
  %v3381 = vmin.f32 %v3377, %v2873
  %v3382 = vmin.f32 %v3378, %v2874
  %v3383 = vmin.f32 %v3379, %v2875
  %v3384 = vmin.f32 %v3380, %v2876
  %v3385 = vmin.f32 %v3381, %v2877
  %v3386 = vmin.f32 %v3382, %v2878
  %v3387 = vmin.f32 %v3383, %v2879
  %v3388 = vmin.f32 %v3384, %v2880
  %v3389 = vmin.f32 %v3385, %v2881
  %v3390 = vmin.f32 %v3386, %v2882
  %v3391 = vmin.f32 %v3387, %v2883
  %v3392 = vmin.f32 %v3388, %v2884
  %v3393 = vmin.f32 %v3389, %v2885
  %v3394 = vmin.f32 %v3390, %v2886
  %v3395 = vmin.f32 %v3391, %v2887
  %v3396 = vmin.f32 %v3392, %v2888
  %v3397 = vmin.f32 %v3393, %v2889
  %v3398 = vmin.f32 %v3394, %v2890
  %v3399 = vmin.f32 %v3395, %v2891
  %v3400 = vmin.f32 %v3396, %v2892
  %v3401 = vmin.f32 %v3397, %v2893
  %v3402 = vmin.f32 %v3398, %v2894
  %v3403 = vmin.f32 %v3399, %v2895
  %v3404 = vmin.f32 %v3400, %v2896
  %v3405 = vmin.f32 %v3401, %v2897
  %v3406 = vmin.f32 %v3402, %v2898
  %v3407 = vmin.f32 %v3403, %v2899
  %v3408 = vmin.f32 %v3404, %v2900
  %v3409 = vmin.f32 %v3405, %v2901
  %v3410 = vmin.f32 %v3406, %v2902
  %v3411 = vmin.f32 %v3407, %v2903
  %v3412 = vmin.f32 %v3408, %v2904
  %v3413 = vmin.f32 %v3409, %v2905
  %v3414 = vmin.f32 %v3410, %v2906
  %v3415 = vmin.f32 %v3411, %v2907
  %v3416 = vmin.f32 %v3412, %v2908
  %v3417 = vmin.f32 %v3413, %v2909
  %v3418 = vmin.f32 %v3414, %v2910
  %v3419 = vmin.f32 %v3415, %v2911
  %v3420 = vmin.f32 %v3416, %v2912
  %v3421 = vmin.f32 %v3417, %v2913
  %v3422 = vmin.f32 %v3418, %v2914
  %v3423 = vmin.f32 %v3419, %v2915
  %v3424 = vmin.f32 %v3420, %v2916
  %v3425 = vmin.f32 %v3421, %v2917
  %v3426 = vmin.f32 %v3422, %v2918
  %v3427 = vmin.f32 %v3423, %v2919
  %v3428 = vmin.f32 %v3424, %v2920
  %v3429 = vmin.f32 %v3425, %v2921
  %v3430 = vmin.f32 %v3426, %v2922
  %v3431 = vmin.f32 %v3427, %v2923
  %v3432 = vmin.f32 %v3428, %v2924
  %v3433 = vmin.f32 %v3429, %v2925
  %v3434 = vmin.f32 %v3430, %v2926
  %v3435 = vmin.f32 %v3431, %v2927
  %v3436 = vmin.f32 %v3432, %v2928
  %v3437 = vmin.f32 %v3433, %v2929
  %v3438 = vmin.f32 %v3434, %v3435
  %v3439 = vmin.f32 %v3436, %v3437
  %v3440 = vmin.f32 %v3438, %v3439
  %v3441 = vrot.slane %v3440, 4
  %v3442 = vmin.f32 %v3440, %v3441
  %v3443 = vrot.slane %v3442, 2
  %v3444 = vmin.f32 %v3442, %v3443
  %v3445 = vrot.slane %v3444, 1
  %v3446 = vmin.f32 %v3444, %v3445
  %3447 = vst [vmem:[%s6] sm:$0xff] %v3446
  %v3448 = vmax.f32 %v2930, %v2934
  %v3449 = vmax.f32 %v2931, %v2935
  %v3450 = vmax.f32 %v2932, %v2936
  %v3451 = vmax.f32 %v2933, %v2937
  %v3452 = vmax.f32 %v3448, %v2938
  %v3453 = vmax.f32 %v3449, %v2939
  %v3454 = vmax.f32 %v3450, %v2940
  %v3455 = vmax.f32 %v3451, %v2941
  %v3456 = vmax.f32 %v3452, %v2942
  %v3457 = vmax.f32 %v3453, %v2943
  %v3458 = vmax.f32 %v3454, %v2944
  %v3459 = vmax.f32 %v3455, %v2945
  %v3460 = vmax.f32 %v3456, %v2946
  %v3461 = vmax.f32 %v3457, %v2947
  %v3462 = vmax.f32 %v3458, %v2948
  %v3463 = vmax.f32 %v3459, %v2949
  %v3464 = vmax.f32 %v3460, %v2950
  %v3465 = vmax.f32 %v3461, %v2951
  %v3466 = vmax.f32 %v3462, %v2952
  %v3467 = vmax.f32 %v3463, %v2953
  %v3468 = vmax.f32 %v3464, %v2954
  %v3469 = vmax.f32 %v3465, %v2955
  %v3470 = vmax.f32 %v3466, %v2956
  %v3471 = vmax.f32 %v3467, %v2957
  %v3472 = vmax.f32 %v3468, %v2958
  %v3473 = vmax.f32 %v3469, %v2959
  %v3474 = vmax.f32 %v3470, %v2960
  %v3475 = vmax.f32 %v3471, %v2961
  %v3476 = vmax.f32 %v3472, %v2962
  %v3477 = vmax.f32 %v3473, %v2963
  %v3478 = vmax.f32 %v3474, %v2964
  %v3479 = vmax.f32 %v3475, %v2965
  %v3480 = vmax.f32 %v3476, %v2966
  %v3481 = vmax.f32 %v3477, %v2967
  %v3482 = vmax.f32 %v3478, %v2968
  %v3483 = vmax.f32 %v3479, %v2969
  %v3484 = vmax.f32 %v3480, %v2970
  %v3485 = vmax.f32 %v3481, %v2971
  %v3486 = vmax.f32 %v3482, %v2972
  %v3487 = vmax.f32 %v3483, %v2973
  %v3488 = vmax.f32 %v3484, %v2974
  %v3489 = vmax.f32 %v3485, %v2975
  %v3490 = vmax.f32 %v3486, %v2976
  %v3491 = vmax.f32 %v3487, %v2977
  %v3492 = vmax.f32 %v3488, %v2978
  %v3493 = vmax.f32 %v3489, %v2979
  %v3494 = vmax.f32 %v3490, %v2980
  %v3495 = vmax.f32 %v3491, %v2981
  %v3496 = vmax.f32 %v3492, %v2982
  %v3497 = vmax.f32 %v3493, %v2983
  %v3498 = vmax.f32 %v3494, %v2984
  %v3499 = vmax.f32 %v3495, %v2985
  %v3500 = vmax.f32 %v3496, %v2986
  %v3501 = vmax.f32 %v3497, %v2987
  %v3502 = vmax.f32 %v3498, %v2988
  %v3503 = vmax.f32 %v3499, %v2989
  %v3504 = vmax.f32 %v3500, %v2990
  %v3505 = vmax.f32 %v3501, %v2991
  %v3506 = vmax.f32 %v3502, %v2992
  %v3507 = vmax.f32 %v3503, %v2993
  %v3508 = vmax.f32 %v3504, %v2994
  %v3509 = vmax.f32 %v3505, %v2995
  %v3510 = vmax.f32 %v3506, %v2996
  %v3511 = vmax.f32 %v3507, %v2997
  %v3512 = vmax.f32 %v3508, %v2998
  %v3513 = vmax.f32 %v3509, %v2999
  %v3514 = vmax.f32 %v3510, %v3000
  %v3515 = vmax.f32 %v3511, %v3001
  %v3516 = vmax.f32 %v3512, %v3002
  %v3517 = vmax.f32 %v3513, %v3003
  %v3518 = vmax.f32 %v3514, %v3004
  %v3519 = vmax.f32 %v3515, %v3005
  %v3520 = vmax.f32 %v3516, %v3006
  %v3521 = vmax.f32 %v3517, %v3007
  %v3522 = vmax.f32 %v3518, %v3008
  %v3523 = vmax.f32 %v3519, %v3009
  %v3524 = vmax.f32 %v3520, %v3010
  %v3525 = vmax.f32 %v3521, %v3011
  %v3526 = vmax.f32 %v3522, %v3012
  %v3527 = vmax.f32 %v3523, %v3013
  %v3528 = vmax.f32 %v3524, %v3014
  %v3529 = vmax.f32 %v3525, %v3015
  %v3530 = vmax.f32 %v3526, %v3016
  %v3531 = vmax.f32 %v3527, %v3017
  %v3532 = vmax.f32 %v3528, %v3018
  %v3533 = vmax.f32 %v3529, %v3019
  %v3534 = vmax.f32 %v3530, %v3020
  %v3535 = vmax.f32 %v3531, %v3021
  %v3536 = vmax.f32 %v3532, %v3022
  %v3537 = vmax.f32 %v3533, %v3023
  %v3538 = vmax.f32 %v3534, %v3024
  %v3539 = vmax.f32 %v3535, %v3025
  %v3540 = vmax.f32 %v3536, %v3026
  %v3541 = vmax.f32 %v3537, %v3027
  %v3542 = vmax.f32 %v3538, %v3028
  %v3543 = vmax.f32 %v3539, %v3029
  %v3544 = vmax.f32 %v3540, %v3030
  %v3545 = vmax.f32 %v3541, %v3031
  %v3546 = vmax.f32 %v3542, %v3032
  %v3547 = vmax.f32 %v3543, %v3033
  %v3548 = vmax.f32 %v3544, %v3034
  %v3549 = vmax.f32 %v3545, %v3035
  %v3550 = vmax.f32 %v3546, %v3036
  %v3551 = vmax.f32 %v3547, %v3037
  %v3552 = vmax.f32 %v3548, %v3038
  %v3553 = vmax.f32 %v3549, %v3039
  %v3554 = vmax.f32 %v3550, %v3040
  %v3555 = vmax.f32 %v3551, %v3041
  %v3556 = vmax.f32 %v3552, %v3042
  %v3557 = vmax.f32 %v3553, %v3043
  %v3558 = vmax.f32 %v3554, %v3044
  %v3559 = vmax.f32 %v3555, %v3045
  %v3560 = vmax.f32 %v3556, %v3046
  %v3561 = vmax.f32 %v3557, %v3047
  %v3562 = vmax.f32 %v3558, %v3048
  %v3563 = vmax.f32 %v3559, %v3049
  %v3564 = vmax.f32 %v3560, %v3050
  %v3565 = vmax.f32 %v3561, %v3051
  %v3566 = vmax.f32 %v3562, %v3052
  %v3567 = vmax.f32 %v3563, %v3053
  %v3568 = vmax.f32 %v3564, %v3054
  %v3569 = vmax.f32 %v3565, %v3055
  %v3570 = vmax.f32 %v3566, %v3056
  %v3571 = vmax.f32 %v3567, %v3057
  %v3572 = vmax.f32 %v3568, %v3058
  %v3573 = vmax.f32 %v3569, %v3059
  %v3574 = vmax.f32 %v3570, %v3060
  %v3575 = vmax.f32 %v3571, %v3061
  %v3576 = vmax.f32 %v3572, %v3062
  %v3577 = vmax.f32 %v3573, %v3063
  %v3578 = vmax.f32 %v3574, %v3064
  %v3579 = vmax.f32 %v3575, %v3065
  %v3580 = vmax.f32 %v3576, %v3066
  %v3581 = vmax.f32 %v3577, %v3067
  %v3582 = vmax.f32 %v3578, %v3068
  %v3583 = vmax.f32 %v3579, %v3069
  %v3584 = vmax.f32 %v3580, %v3070
  %v3585 = vmax.f32 %v3581, %v3071
  %v3586 = vmax.f32 %v3582, %v3072
  %v3587 = vmax.f32 %v3583, %v3073
  %v3588 = vmax.f32 %v3584, %v3074
  %v3589 = vmax.f32 %v3585, %v3075
  %v3590 = vmax.f32 %v3586, %v3076
  %v3591 = vmax.f32 %v3587, %v3077
  %v3592 = vmax.f32 %v3588, %v3078
  %v3593 = vmax.f32 %v3589, %v3079
  %v3594 = vmax.f32 %v3590, %v3080
  %v3595 = vmax.f32 %v3591, %v3081
  %v3596 = vmax.f32 %v3592, %v3082
  %v3597 = vmax.f32 %v3593, %v3083
  %v3598 = vmax.f32 %v3594, %v3084
  %v3599 = vmax.f32 %v3595, %v3085
  %v3600 = vmax.f32 %v3596, %v3086
  %v3601 = vmax.f32 %v3597, %v3087
  %v3602 = vmax.f32 %v3598, %v3088
  %v3603 = vmax.f32 %v3599, %v3089
  %v3604 = vmax.f32 %v3600, %v3090
  %v3605 = vmax.f32 %v3601, %v3091
  %v3606 = vmax.f32 %v3602, %v3092
  %v3607 = vmax.f32 %v3603, %v3093
  %v3608 = vmax.f32 %v3604, %v3094
  %v3609 = vmax.f32 %v3605, %v3095
  %v3610 = vmax.f32 %v3606, %v3096
  %v3611 = vmax.f32 %v3607, %v3097
  %v3612 = vmax.f32 %v3608, %v3098
  %v3613 = vmax.f32 %v3609, %v3099
  %v3614 = vmax.f32 %v3610, %v3100
  %v3615 = vmax.f32 %v3611, %v3101
  %v3616 = vmax.f32 %v3612, %v3102
  %v3617 = vmax.f32 %v3613, %v3103
  %v3618 = vmax.f32 %v3614, %v3104
  %v3619 = vmax.f32 %v3615, %v3105
  %v3620 = vmax.f32 %v3616, %v3106
  %v3621 = vmax.f32 %v3617, %v3107
  %v3622 = vmax.f32 %v3618, %v3108
  %v3623 = vmax.f32 %v3619, %v3109
  %v3624 = vmax.f32 %v3620, %v3110
  %v3625 = vmax.f32 %v3621, %v3111
  %v3626 = vmax.f32 %v3622, %v3112
  %v3627 = vmax.f32 %v3623, %v3113
  %v3628 = vmax.f32 %v3624, %v3114
  %v3629 = vmax.f32 %v3625, %v3115
  %v3630 = vmax.f32 %v3626, %v3116
  %v3631 = vmax.f32 %v3627, %v3117
  %v3632 = vmax.f32 %v3628, %v3118
  %v3633 = vmax.f32 %v3629, %v3119
  %v3634 = vmax.f32 %v3630, %v3120
  %v3635 = vmax.f32 %v3631, %v3121
  %v3636 = vmax.f32 %v3632, %v3122
  %v3637 = vmax.f32 %v3633, %v3123
  %v3638 = vmax.f32 %v3634, %v3124
  %v3639 = vmax.f32 %v3635, %v3125
  %v3640 = vmax.f32 %v3636, %v3126
  %v3641 = vmax.f32 %v3637, %v3127
  %v3642 = vmax.f32 %v3638, %v3128
  %v3643 = vmax.f32 %v3639, %v3129
  %v3644 = vmax.f32 %v3640, %v3130
  %v3645 = vmax.f32 %v3641, %v3131
  %v3646 = vmax.f32 %v3642, %v3132
  %v3647 = vmax.f32 %v3643, %v3133
  %v3648 = vmax.f32 %v3644, %v3134
  %v3649 = vmax.f32 %v3645, %v3135
  %v3650 = vmax.f32 %v3646, %v3136
  %v3651 = vmax.f32 %v3647, %v3137
  %v3652 = vmax.f32 %v3648, %v3138
  %v3653 = vmax.f32 %v3649, %v3139
  %v3654 = vmax.f32 %v3650, %v3140
  %v3655 = vmax.f32 %v3651, %v3141
  %v3656 = vmax.f32 %v3652, %v3142
  %v3657 = vmax.f32 %v3653, %v3143
  %v3658 = vmax.f32 %v3654, %v3144
  %v3659 = vmax.f32 %v3655, %v3145
  %v3660 = vmax.f32 %v3656, %v3146
  %v3661 = vmax.f32 %v3657, %v3147
  %v3662 = vmax.f32 %v3658, %v3148
  %v3663 = vmax.f32 %v3659, %v3149
  %v3664 = vmax.f32 %v3660, %v3150
  %v3665 = vmax.f32 %v3661, %v3151
  %v3666 = vmax.f32 %v3662, %v3152
  %v3667 = vmax.f32 %v3663, %v3153
  %v3668 = vmax.f32 %v3664, %v3154
  %v3669 = vmax.f32 %v3665, %v3155
  %v3670 = vmax.f32 %v3666, %v3156
  %v3671 = vmax.f32 %v3667, %v3157
  %v3672 = vmax.f32 %v3668, %v3158
  %v3673 = vmax.f32 %v3669, %v3159
  %v3674 = vmax.f32 %v3670, %v3160
  %v3675 = vmax.f32 %v3671, %v3161
  %v3676 = vmax.f32 %v3672, %v3162
  %v3677 = vmax.f32 %v3673, %v3163
  %v3678 = vmax.f32 %v3674, %v3164
  %v3679 = vmax.f32 %v3675, %v3165
  %v3680 = vmax.f32 %v3676, %v3166
  %v3681 = vmax.f32 %v3677, %v3167
  %v3682 = vmax.f32 %v3678, %v3168
  %v3683 = vmax.f32 %v3679, %v3169
  %v3684 = vmax.f32 %v3680, %v3170
  %v3685 = vmax.f32 %v3681, %v3171
  %v3686 = vmax.f32 %v3682, %v3172
  %v3687 = vmax.f32 %v3683, %v3173
  %v3688 = vmax.f32 %v3684, %v3174
  %v3689 = vmax.f32 %v3685, %v3175
  %v3690 = vmax.f32 %v3686, %v3176
  %v3691 = vmax.f32 %v3687, %v3177
  %v3692 = vmax.f32 %v3688, %v3178
  %v3693 = vmax.f32 %v3689, %v3179
  %v3694 = vmax.f32 %v3690, %v3180
  %v3695 = vmax.f32 %v3691, %v3181
  %v3696 = vmax.f32 %v3692, %v3182
  %v3697 = vmax.f32 %v3693, %v3183
  %v3698 = vmax.f32 %v3694, %v3184
  %v3699 = vmax.f32 %v3695, %v3185
  %v3700 = vmax.f32 %v3696, %v3697
  %v3701 = vmax.f32 %v3698, %v3699
  %v3702 = vmax.f32 %v3700, %v3701
  %v3703 = vrot.slane %v3702, 4
  %v3704 = vmax.f32 %v3702, %v3703
  %v3705 = vrot.slane %v3704, 2
  %v3706 = vmax.f32 %v3704, %v3705
  %v3707 = vrot.slane %v3706, 1
  %v3708 = vmax.f32 %v3706, %v3707
  %3709 = vst [vmem:[%s7] sm:$0xff] %v3708
  %v3710 = vlaneseq
  %v3711 = vand.u32 %v3710, 127
  %v3712 = vadd.s32 %v3711, 128
  %v3713 = vadd.s32 %v3711, 256
  %v3714 = vadd.s32 %v3711, 384
  %v3715 = vadd.s32 %v3711, 512
  %v3716 = vadd.s32 %v3711, 640
  %v3717 = vadd.s32 %v3711, 768
  %v3718 = vadd.s32 %v3711, 896
  %v3719 = vadd.s32 %v3711, 1024
  %v3720 = vadd.s32 %v3711, 1152
  %v3721 = vadd.s32 %v3711, 1280
  %v3722 = vadd.s32 %v3711, 1408
  %v3723 = vadd.s32 %v3711, 1536
  %v3724 = vadd.s32 %v3711, 1664
  %v3725 = vadd.s32 %v3711, 1792
  %v3726 = vadd.s32 %v3711, 1920
  %v3727 = vmul.u32 %v1904, 256
  %vm3728 = vcmp.ge.s32.totalorder %v3711, %v3727
  %vm3729 = vcmp.ge.s32.totalorder %v3712, %v3727
  %vm3730 = vcmp.ge.s32.totalorder %v3713, %v3727
  %vm3731 = vcmp.ge.s32.totalorder %v3714, %v3727
  %vm3732 = vcmp.ge.s32.totalorder %v3715, %v3727
  %vm3733 = vcmp.ge.s32.totalorder %v3716, %v3727
  %vm3734 = vcmp.ge.s32.totalorder %v3717, %v3727
  %vm3735 = vcmp.ge.s32.totalorder %v3718, %v3727
  %vm3736 = vcmp.ge.s32.totalorder %v3719, %v3727
  %vm3737 = vcmp.ge.s32.totalorder %v3720, %v3727
  %vm3738 = vcmp.ge.s32.totalorder %v3721, %v3727
  %vm3739 = vcmp.ge.s32.totalorder %v3722, %v3727
  %vm3740 = vcmp.ge.s32.totalorder %v3723, %v3727
  %vm3741 = vcmp.ge.s32.totalorder %v3724, %v3727
  %vm3742 = vcmp.ge.s32.totalorder %v3725, %v3727
  %vm3743 = vcmp.ge.s32.totalorder %v3726, %v3727
  %v3744 = vadd.s32 %v1904, 1
  %v3745 = vmul.u32 %v3744, 256
  %vm3746 = vcmp.lt.s32.totalorder %v3711, %v3745
  %vm3747 = vcmp.lt.s32.totalorder %v3712, %v3745
  %vm3748 = vcmp.lt.s32.totalorder %v3713, %v3745
  %vm3749 = vcmp.lt.s32.totalorder %v3714, %v3745
  %vm3750 = vcmp.lt.s32.totalorder %v3715, %v3745
  %vm3751 = vcmp.lt.s32.totalorder %v3716, %v3745
  %vm3752 = vcmp.lt.s32.totalorder %v3717, %v3745
  %vm3753 = vcmp.lt.s32.totalorder %v3718, %v3745
  %vm3754 = vcmp.lt.s32.totalorder %v3719, %v3745
  %vm3755 = vcmp.lt.s32.totalorder %v3720, %v3745
  %vm3756 = vcmp.lt.s32.totalorder %v3721, %v3745
  %vm3757 = vcmp.lt.s32.totalorder %v3722, %v3745
  %vm3758 = vcmp.lt.s32.totalorder %v3723, %v3745
  %vm3759 = vcmp.lt.s32.totalorder %v3724, %v3745
  %vm3760 = vcmp.lt.s32.totalorder %v3725, %v3745
  %vm3761 = vcmp.lt.s32.totalorder %v3726, %v3745
  %vm3762 = vmand %vm3728, %vm3746
  %vm3763 = vmand %vm3729, %vm3747
  %vm3764 = vmand %vm3730, %vm3748
  %vm3765 = vmand %vm3731, %vm3749
  %vm3766 = vmand %vm3732, %vm3750
  %vm3767 = vmand %vm3733, %vm3751
  %vm3768 = vmand %vm3734, %vm3752
  %vm3769 = vmand %vm3735, %vm3753
  %vm3770 = vmand %vm3736, %vm3754
  %vm3771 = vmand %vm3737, %vm3755
  %vm3772 = vmand %vm3738, %vm3756
  %vm3773 = vmand %vm3739, %vm3757
  %vm3774 = vmand %vm3740, %vm3758
  %vm3775 = vmand %vm3741, %vm3759
  %vm3776 = vmand %vm3742, %vm3760
  %vm3777 = vmand %vm3743, %vm3761
  %v3778 = vsel %vm3762, 0.00390625, 0.0
  %v3779 = vsel %vm3763, 0.00390625, 0.0
  %v3780 = vsel %vm3764, 0.00390625, 0.0
  %v3781 = vsel %vm3765, 0.00390625, 0.0
  %v3782 = vsel %vm3766, 0.00390625, 0.0
  %v3783 = vsel %vm3767, 0.00390625, 0.0
  %v3784 = vsel %vm3768, 0.00390625, 0.0
  %v3785 = vsel %vm3769, 0.00390625, 0.0
  %v3786 = vsel %vm3770, 0.00390625, 0.0
  %v3787 = vsel %vm3771, 0.00390625, 0.0
  %v3788 = vsel %vm3772, 0.00390625, 0.0
  %v3789 = vsel %vm3773, 0.00390625, 0.0
  %v3790 = vsel %vm3774, 0.00390625, 0.0
  %v3791 = vsel %vm3775, 0.00390625, 0.0
  %v3792 = vsel %vm3776, 0.00390625, 0.0
  %v3793 = vsel %vm3777, 0.00390625, 0.0
  %3794 = vmatprep.subr.mxu0 0.0
  %3795 = vmatpush1.msra.mxu0 %v1647
  %3796 = vmatprep.subr.mxu0 0.0
  %3797 = vmatpush1.msra.mxu0 %v1648
  %3798 = vmatprep.subr.mxu0 0.0
  %3799 = vmatpush1.msra.mxu0 %v1649
  %3800 = vmatprep.subr.mxu0 0.0
  %3801 = vmatpush1.msra.mxu0 %v1650
  %3802 = vmatprep.subr.mxu0 0.0
  %3803 = vmatpush1.msra.mxu0 %v1651
  %3804 = vmatprep.subr.mxu0 0.0
  %3805 = vmatpush1.msra.mxu0 %v1652
  %3806 = vmatprep.subr.mxu0 0.0
  %3807 = vmatpush1.msra.mxu0 %v1653
  %3808 = vmatprep.subr.mxu0 0.0
  %3809 = vmatpush1.msra.mxu0 %v1654
  %3810 = vmatprep.subr.mxu0 0.0
  %3811 = vmatpush1.msra.mxu0 %v1655
  %3812 = vmatprep.subr.mxu0 0.0
  %3813 = vmatpush1.msra.mxu0 %v1656
  %3814 = vmatprep.subr.mxu0 0.0
  %3815 = vmatpush1.msra.mxu0 %v1657
  %3816 = vmatprep.subr.mxu0 0.0
  %3817 = vmatpush1.msra.mxu0 %v1658
  %3818 = vmatprep.subr.mxu0 0.0
  %3819 = vmatpush1.msra.mxu0 %v1659
  %3820 = vmatprep.subr.mxu0 0.0
  %3821 = vmatpush1.msra.mxu0 %v1660
  %3822 = vmatprep.subr.mxu0 0.0
  %3823 = vmatpush1.msra.mxu0 %v1661
  %3824 = vmatprep.subr.mxu0 0.0
  %3825 = vmatpush1.msra.mxu0 %v1662
  %3826 = vmatprep.subr.mxu0 0.0
  %3827 = vmatpush1.msra.mxu0 %v1663
  %3828 = vmatprep.subr.mxu0 0.0
  %3829 = vmatpush1.msra.mxu0 %v1664
  %3830 = vmatprep.subr.mxu0 0.0
  %3831 = vmatpush1.msra.mxu0 %v1665
  %3832 = vmatprep.subr.mxu0 0.0
  %3833 = vmatpush1.msra.mxu0 %v1666
  %3834 = vmatprep.subr.mxu0 0.0
  %3835 = vmatpush1.msra.mxu0 %v1667
  %3836 = vmatprep.subr.mxu0 0.0
  %3837 = vmatpush1.msra.mxu0 %v1668
  %3838 = vmatprep.subr.mxu0 0.0
  %3839 = vmatpush1.msra.mxu0 %v1669
  %3840 = vmatprep.subr.mxu0 0.0
  %3841 = vmatpush1.msra.mxu0 %v1670
  %3842 = vmatprep.subr.mxu0 0.0
  %3843 = vmatpush1.msra.mxu0 %v1671
  %3844 = vmatprep.subr.mxu0 0.0
  %3845 = vmatpush1.msra.mxu0 %v1672
  %3846 = vmatprep.subr.mxu0 0.0
  %3847 = vmatpush1.msra.mxu0 %v1673
  %3848 = vmatprep.subr.mxu0 0.0
  %3849 = vmatpush1.msra.mxu0 %v1674
  %3850 = vmatprep.subr.mxu0 0.0
  %3851 = vmatpush1.msra.mxu0 %v1675
  %3852 = vmatprep.subr.mxu0 0.0
  %3853 = vmatpush1.msra.mxu0 %v1676
  %3854 = vmatprep.subr.mxu0 0.0
  %3855 = vmatpush1.msra.mxu0 %v1677
  %3856 = vmatprep.subr.mxu0 0.0
  %3857 = vmatpush1.msra.mxu0 %v1678
  %3858 = vmatprep.mubr.f32.mxu0 %v3779
  %3859 = vmatmul.mubr.f32.gmra.mrb[0].mxu0 %v3778
  %v3860 = vpop.f32.mrb[0].mxu0
  %v3861 = vadd.f32 0.0, %v3860
  %v3862 = vpop.f32.mrb[0].mxu0
  %3863 = vdwg.mxu0
  %3864 = vmatprep.subr.mxu0 0.0
  %3865 = vmatpush1.msra.mxu0 %v1679
  %3866 = vmatprep.subr.mxu0 0.0
  %3867 = vmatpush1.msra.mxu0 %v1680
  %3868 = vmatprep.subr.mxu0 0.0
  %3869 = vmatpush1.msra.mxu0 %v1681
  %3870 = vmatprep.subr.mxu0 0.0
  %3871 = vmatpush1.msra.mxu0 %v1682
  %3872 = vmatprep.subr.mxu0 0.0
  %3873 = vmatpush1.msra.mxu0 %v1683
  %3874 = vmatprep.subr.mxu0 0.0
  %3875 = vmatpush1.msra.mxu0 %v1684
  %3876 = vmatprep.subr.mxu0 0.0
  %3877 = vmatpush1.msra.mxu0 %v1685
  %3878 = vmatprep.subr.mxu0 0.0
  %3879 = vmatpush1.msra.mxu0 %v1686
  %3880 = vmatprep.subr.mxu0 0.0
  %3881 = vmatpush1.msra.mxu0 %v1687
  %3882 = vmatprep.subr.mxu0 0.0
  %3883 = vmatpush1.msra.mxu0 %v1688
  %3884 = vmatprep.subr.mxu0 0.0
  %3885 = vmatpush1.msra.mxu0 %v1689
  %3886 = vmatprep.subr.mxu0 0.0
  %3887 = vmatpush1.msra.mxu0 %v1690
  %3888 = vmatprep.subr.mxu0 0.0
  %3889 = vmatpush1.msra.mxu0 %v1691
  %3890 = vmatprep.subr.mxu0 0.0
  %3891 = vmatpush1.msra.mxu0 %v1692
  %3892 = vmatprep.subr.mxu0 0.0
  %3893 = vmatpush1.msra.mxu0 %v1693
  %3894 = vmatprep.subr.mxu0 0.0
  %3895 = vmatpush1.msra.mxu0 %v1694
  %3896 = vmatprep.subr.mxu0 0.0
  %3897 = vmatpush1.msra.mxu0 %v1695
  %3898 = vmatprep.subr.mxu0 0.0
  %3899 = vmatpush1.msra.mxu0 %v1696
  %3900 = vmatprep.subr.mxu0 0.0
  %3901 = vmatpush1.msra.mxu0 %v1697
  %3902 = vmatprep.subr.mxu0 0.0
  %3903 = vmatpush1.msra.mxu0 %v1698
  %3904 = vmatprep.subr.mxu0 0.0
  %3905 = vmatpush1.msra.mxu0 %v1699
  %3906 = vmatprep.subr.mxu0 0.0
  %3907 = vmatpush1.msra.mxu0 %v1700
  %3908 = vmatprep.subr.mxu0 0.0
  %3909 = vmatpush1.msra.mxu0 %v1701
  %3910 = vmatprep.subr.mxu0 0.0
  %3911 = vmatpush1.msra.mxu0 %v1702
  %3912 = vmatprep.subr.mxu0 0.0
  %3913 = vmatpush1.msra.mxu0 %v1703
  %3914 = vmatprep.subr.mxu0 0.0
  %3915 = vmatpush1.msra.mxu0 %v1704
  %3916 = vmatprep.subr.mxu0 0.0
  %3917 = vmatpush1.msra.mxu0 %v1705
  %3918 = vmatprep.subr.mxu0 0.0
  %3919 = vmatpush1.msra.mxu0 %v1706
  %3920 = vmatprep.subr.mxu0 0.0
  %3921 = vmatpush1.msra.mxu0 %v1707
  %3922 = vmatprep.subr.mxu0 0.0
  %3923 = vmatpush1.msra.mxu0 %v1708
  %3924 = vmatprep.subr.mxu0 0.0
  %3925 = vmatpush1.msra.mxu0 %v1709
  %3926 = vmatprep.subr.mxu0 0.0
  %3927 = vmatpush1.msra.mxu0 %v1710
  %3928 = vmatprep.mubr.f32.mxu0 %v3781
  %3929 = vmatmul.mubr.f32.gmra.mrb[0].mxu0 %v3780
  %v3930 = vpop.f32.mrb[0].mxu0
  %v3931 = vadd.f32 %v3861, %v3930
  %v3932 = vpop.f32.mrb[0].mxu0
  %3933 = vdwg.mxu0
  %3934 = vmatprep.subr.mxu0 0.0
  %3935 = vmatpush1.msra.mxu0 %v1711
  %3936 = vmatprep.subr.mxu0 0.0
  %3937 = vmatpush1.msra.mxu0 %v1712
  %3938 = vmatprep.subr.mxu0 0.0
  %3939 = vmatpush1.msra.mxu0 %v1713
  %3940 = vmatprep.subr.mxu0 0.0
  %3941 = vmatpush1.msra.mxu0 %v1714
  %3942 = vmatprep.subr.mxu0 0.0
  %3943 = vmatpush1.msra.mxu0 %v1715
  %3944 = vmatprep.subr.mxu0 0.0
  %3945 = vmatpush1.msra.mxu0 %v1716
  %3946 = vmatprep.subr.mxu0 0.0
  %3947 = vmatpush1.msra.mxu0 %v1717
  %3948 = vmatprep.subr.mxu0 0.0
  %3949 = vmatpush1.msra.mxu0 %v1718
  %3950 = vmatprep.subr.mxu0 0.0
  %3951 = vmatpush1.msra.mxu0 %v1719
  %3952 = vmatprep.subr.mxu0 0.0
  %3953 = vmatpush1.msra.mxu0 %v1720
  %3954 = vmatprep.subr.mxu0 0.0
  %3955 = vmatpush1.msra.mxu0 %v1721
  %3956 = vmatprep.subr.mxu0 0.0
  %3957 = vmatpush1.msra.mxu0 %v1722
  %3958 = vmatprep.subr.mxu0 0.0
  %3959 = vmatpush1.msra.mxu0 %v1723
  %3960 = vmatprep.subr.mxu0 0.0
  %3961 = vmatpush1.msra.mxu0 %v1724
  %3962 = vmatprep.subr.mxu0 0.0
  %3963 = vmatpush1.msra.mxu0 %v1725
  %3964 = vmatprep.subr.mxu0 0.0
  %3965 = vmatpush1.msra.mxu0 %v1726
  %3966 = vmatprep.subr.mxu0 0.0
  %3967 = vmatpush1.msra.mxu0 %v1727
  %3968 = vmatprep.subr.mxu0 0.0
  %3969 = vmatpush1.msra.mxu0 %v1728
  %3970 = vmatprep.subr.mxu0 0.0
  %3971 = vmatpush1.msra.mxu0 %v1729
  %3972 = vmatprep.subr.mxu0 0.0
  %3973 = vmatpush1.msra.mxu0 %v1730
  %3974 = vmatprep.subr.mxu0 0.0
  %3975 = vmatpush1.msra.mxu0 %v1731
  %3976 = vmatprep.subr.mxu0 0.0
  %3977 = vmatpush1.msra.mxu0 %v1732
  %3978 = vmatprep.subr.mxu0 0.0
  %3979 = vmatpush1.msra.mxu0 %v1733
  %3980 = vmatprep.subr.mxu0 0.0
  %3981 = vmatpush1.msra.mxu0 %v1734
  %3982 = vmatprep.subr.mxu0 0.0
  %3983 = vmatpush1.msra.mxu0 %v1735
  %3984 = vmatprep.subr.mxu0 0.0
  %3985 = vmatpush1.msra.mxu0 %v1736
  %3986 = vmatprep.subr.mxu0 0.0
  %3987 = vmatpush1.msra.mxu0 %v1737
  %3988 = vmatprep.subr.mxu0 0.0
  %3989 = vmatpush1.msra.mxu0 %v1738
  %3990 = vmatprep.subr.mxu0 0.0
  %3991 = vmatpush1.msra.mxu0 %v1739
  %3992 = vmatprep.subr.mxu0 0.0
  %3993 = vmatpush1.msra.mxu0 %v1740
  %3994 = vmatprep.subr.mxu0 0.0
  %3995 = vmatpush1.msra.mxu0 %v1741
  %3996 = vmatprep.subr.mxu0 0.0
  %3997 = vmatpush1.msra.mxu0 %v1742
  %3998 = vmatprep.mubr.f32.mxu0 %v3783
  %3999 = vmatmul.mubr.f32.gmra.mrb[0].mxu0 %v3782
  %v4000 = vpop.f32.mrb[0].mxu0
  %v4001 = vadd.f32 %v3931, %v4000
  %v4002 = vpop.f32.mrb[0].mxu0
  %4003 = vdwg.mxu0
  %4004 = vmatprep.subr.mxu0 0.0
  %4005 = vmatpush1.msra.mxu0 %v1743
  %4006 = vmatprep.subr.mxu0 0.0
  %4007 = vmatpush1.msra.mxu0 %v1744
  %4008 = vmatprep.subr.mxu0 0.0
  %4009 = vmatpush1.msra.mxu0 %v1745
  %4010 = vmatprep.subr.mxu0 0.0
  %4011 = vmatpush1.msra.mxu0 %v1746
  %4012 = vmatprep.subr.mxu0 0.0
  %4013 = vmatpush1.msra.mxu0 %v1747
  %4014 = vmatprep.subr.mxu0 0.0
  %4015 = vmatpush1.msra.mxu0 %v1748
  %4016 = vmatprep.subr.mxu0 0.0
  %4017 = vmatpush1.msra.mxu0 %v1749
  %4018 = vmatprep.subr.mxu0 0.0
  %4019 = vmatpush1.msra.mxu0 %v1750
  %4020 = vmatprep.subr.mxu0 0.0
  %4021 = vmatpush1.msra.mxu0 %v1751
  %4022 = vmatprep.subr.mxu0 0.0
  %4023 = vmatpush1.msra.mxu0 %v1752
  %4024 = vmatprep.subr.mxu0 0.0
  %4025 = vmatpush1.msra.mxu0 %v1753
  %4026 = vmatprep.subr.mxu0 0.0
  %4027 = vmatpush1.msra.mxu0 %v1754
  %4028 = vmatprep.subr.mxu0 0.0
  %4029 = vmatpush1.msra.mxu0 %v1755
  %4030 = vmatprep.subr.mxu0 0.0
  %4031 = vmatpush1.msra.mxu0 %v1756
  %4032 = vmatprep.subr.mxu0 0.0
  %4033 = vmatpush1.msra.mxu0 %v1757
  %4034 = vmatprep.subr.mxu0 0.0
  %4035 = vmatpush1.msra.mxu0 %v1758
  %4036 = vmatprep.subr.mxu0 0.0
  %4037 = vmatpush1.msra.mxu0 %v1759
  %4038 = vmatprep.subr.mxu0 0.0
  %4039 = vmatpush1.msra.mxu0 %v1760
  %4040 = vmatprep.subr.mxu0 0.0
  %4041 = vmatpush1.msra.mxu0 %v1761
  %4042 = vmatprep.subr.mxu0 0.0
  %4043 = vmatpush1.msra.mxu0 %v1762
  %4044 = vmatprep.subr.mxu0 0.0
  %4045 = vmatpush1.msra.mxu0 %v1763
  %4046 = vmatprep.subr.mxu0 0.0
  %4047 = vmatpush1.msra.mxu0 %v1764
  %4048 = vmatprep.subr.mxu0 0.0
  %4049 = vmatpush1.msra.mxu0 %v1765
  %4050 = vmatprep.subr.mxu0 0.0
  %4051 = vmatpush1.msra.mxu0 %v1766
  %4052 = vmatprep.subr.mxu0 0.0
  %4053 = vmatpush1.msra.mxu0 %v1767
  %4054 = vmatprep.subr.mxu0 0.0
  %4055 = vmatpush1.msra.mxu0 %v1768
  %4056 = vmatprep.subr.mxu0 0.0
  %4057 = vmatpush1.msra.mxu0 %v1769
  %4058 = vmatprep.subr.mxu0 0.0
  %4059 = vmatpush1.msra.mxu0 %v1770
  %4060 = vmatprep.subr.mxu0 0.0
  %4061 = vmatpush1.msra.mxu0 %v1771
  %4062 = vmatprep.subr.mxu0 0.0
  %4063 = vmatpush1.msra.mxu0 %v1772
  %4064 = vmatprep.subr.mxu0 0.0
  %4065 = vmatpush1.msra.mxu0 %v1773
  %4066 = vmatprep.subr.mxu0 0.0
  %4067 = vmatpush1.msra.mxu0 %v1774
  %4068 = vmatprep.mubr.f32.mxu0 %v3785
  %4069 = vmatmul.mubr.f32.gmra.mrb[0].mxu0 %v3784
  %v4070 = vpop.f32.mrb[0].mxu0
  %v4071 = vadd.f32 %v4001, %v4070
  %v4072 = vpop.f32.mrb[0].mxu0
  %4073 = vdwg.mxu0
  %4074 = vmatprep.subr.mxu0 0.0
  %4075 = vmatpush1.msra.mxu0 %v1775
  %4076 = vmatprep.subr.mxu0 0.0
  %4077 = vmatpush1.msra.mxu0 %v1776
  %4078 = vmatprep.subr.mxu0 0.0
  %4079 = vmatpush1.msra.mxu0 %v1777
  %4080 = vmatprep.subr.mxu0 0.0
  %4081 = vmatpush1.msra.mxu0 %v1778
  %4082 = vmatprep.subr.mxu0 0.0
  %4083 = vmatpush1.msra.mxu0 %v1779
  %4084 = vmatprep.subr.mxu0 0.0
  %4085 = vmatpush1.msra.mxu0 %v1780
  %4086 = vmatprep.subr.mxu0 0.0
  %4087 = vmatpush1.msra.mxu0 %v1781
  %4088 = vmatprep.subr.mxu0 0.0
  %4089 = vmatpush1.msra.mxu0 %v1782
  %4090 = vmatprep.subr.mxu0 0.0
  %4091 = vmatpush1.msra.mxu0 %v1783
  %4092 = vmatprep.subr.mxu0 0.0
  %4093 = vmatpush1.msra.mxu0 %v1784
  %4094 = vmatprep.subr.mxu0 0.0
  %4095 = vmatpush1.msra.mxu0 %v1785
  %4096 = vmatprep.subr.mxu0 0.0
  %4097 = vmatpush1.msra.mxu0 %v1786
  %4098 = vmatprep.subr.mxu0 0.0
  %4099 = vmatpush1.msra.mxu0 %v1787
  %4100 = vmatprep.subr.mxu0 0.0
  %4101 = vmatpush1.msra.mxu0 %v1788
  %4102 = vmatprep.subr.mxu0 0.0
  %4103 = vmatpush1.msra.mxu0 %v1789
  %4104 = vmatprep.subr.mxu0 0.0
  %4105 = vmatpush1.msra.mxu0 %v1790
  %4106 = vmatprep.subr.mxu0 0.0
  %4107 = vmatpush1.msra.mxu0 %v1791
  %4108 = vmatprep.subr.mxu0 0.0
  %4109 = vmatpush1.msra.mxu0 %v1792
  %4110 = vmatprep.subr.mxu0 0.0
  %4111 = vmatpush1.msra.mxu0 %v1793
  %4112 = vmatprep.subr.mxu0 0.0
  %4113 = vmatpush1.msra.mxu0 %v1794
  %4114 = vmatprep.subr.mxu0 0.0
  %4115 = vmatpush1.msra.mxu0 %v1795
  %4116 = vmatprep.subr.mxu0 0.0
  %4117 = vmatpush1.msra.mxu0 %v1796
  %4118 = vmatprep.subr.mxu0 0.0
  %4119 = vmatpush1.msra.mxu0 %v1797
  %4120 = vmatprep.subr.mxu0 0.0
  %4121 = vmatpush1.msra.mxu0 %v1798
  %4122 = vmatprep.subr.mxu0 0.0
  %4123 = vmatpush1.msra.mxu0 %v1799
  %4124 = vmatprep.subr.mxu0 0.0
  %4125 = vmatpush1.msra.mxu0 %v1800
  %4126 = vmatprep.subr.mxu0 0.0
  %4127 = vmatpush1.msra.mxu0 %v1801
  %4128 = vmatprep.subr.mxu0 0.0
  %4129 = vmatpush1.msra.mxu0 %v1802
  %4130 = vmatprep.subr.mxu0 0.0
  %4131 = vmatpush1.msra.mxu0 %v1803
  %4132 = vmatprep.subr.mxu0 0.0
  %4133 = vmatpush1.msra.mxu0 %v1804
  %4134 = vmatprep.subr.mxu0 0.0
  %4135 = vmatpush1.msra.mxu0 %v1805
  %4136 = vmatprep.subr.mxu0 0.0
  %4137 = vmatpush1.msra.mxu0 %v1806
  %4138 = vmatprep.mubr.f32.mxu0 %v3787
  %4139 = vmatmul.mubr.f32.gmra.mrb[0].mxu0 %v3786
  %v4140 = vpop.f32.mrb[0].mxu0
  %v4141 = vadd.f32 %v4071, %v4140
  %v4142 = vpop.f32.mrb[0].mxu0
  %4143 = vdwg.mxu0
  %4144 = vmatprep.subr.mxu0 0.0
  %4145 = vmatpush1.msra.mxu0 %v1807
  %4146 = vmatprep.subr.mxu0 0.0
  %4147 = vmatpush1.msra.mxu0 %v1808
  %4148 = vmatprep.subr.mxu0 0.0
  %4149 = vmatpush1.msra.mxu0 %v1809
  %4150 = vmatprep.subr.mxu0 0.0
  %4151 = vmatpush1.msra.mxu0 %v1810
  %4152 = vmatprep.subr.mxu0 0.0
  %4153 = vmatpush1.msra.mxu0 %v1811
  %4154 = vmatprep.subr.mxu0 0.0
  %4155 = vmatpush1.msra.mxu0 %v1812
  %4156 = vmatprep.subr.mxu0 0.0
  %4157 = vmatpush1.msra.mxu0 %v1813
  %4158 = vmatprep.subr.mxu0 0.0
  %4159 = vmatpush1.msra.mxu0 %v1814
  %4160 = vmatprep.subr.mxu0 0.0
  %4161 = vmatpush1.msra.mxu0 %v1815
  %4162 = vmatprep.subr.mxu0 0.0
  %4163 = vmatpush1.msra.mxu0 %v1816
  %4164 = vmatprep.subr.mxu0 0.0
  %4165 = vmatpush1.msra.mxu0 %v1817
  %4166 = vmatprep.subr.mxu0 0.0
  %4167 = vmatpush1.msra.mxu0 %v1818
  %4168 = vmatprep.subr.mxu0 0.0
  %4169 = vmatpush1.msra.mxu0 %v1819
  %4170 = vmatprep.subr.mxu0 0.0
  %4171 = vmatpush1.msra.mxu0 %v1820
  %4172 = vmatprep.subr.mxu0 0.0
  %4173 = vmatpush1.msra.mxu0 %v1821
  %4174 = vmatprep.subr.mxu0 0.0
  %4175 = vmatpush1.msra.mxu0 %v1822
  %4176 = vmatprep.subr.mxu0 0.0
  %4177 = vmatpush1.msra.mxu0 %v1823
  %4178 = vmatprep.subr.mxu0 0.0
  %4179 = vmatpush1.msra.mxu0 %v1824
  %4180 = vmatprep.subr.mxu0 0.0
  %4181 = vmatpush1.msra.mxu0 %v1825
  %4182 = vmatprep.subr.mxu0 0.0
  %4183 = vmatpush1.msra.mxu0 %v1826
  %4184 = vmatprep.subr.mxu0 0.0
  %4185 = vmatpush1.msra.mxu0 %v1827
  %4186 = vmatprep.subr.mxu0 0.0
  %4187 = vmatpush1.msra.mxu0 %v1828
  %4188 = vmatprep.subr.mxu0 0.0
  %4189 = vmatpush1.msra.mxu0 %v1829
  %4190 = vmatprep.subr.mxu0 0.0
  %4191 = vmatpush1.msra.mxu0 %v1830
  %4192 = vmatprep.subr.mxu0 0.0
  %4193 = vmatpush1.msra.mxu0 %v1831
  %4194 = vmatprep.subr.mxu0 0.0
  %4195 = vmatpush1.msra.mxu0 %v1832
  %4196 = vmatprep.subr.mxu0 0.0
  %4197 = vmatpush1.msra.mxu0 %v1833
  %4198 = vmatprep.subr.mxu0 0.0
  %4199 = vmatpush1.msra.mxu0 %v1834
  %4200 = vmatprep.subr.mxu0 0.0
  %4201 = vmatpush1.msra.mxu0 %v1835
  %4202 = vmatprep.subr.mxu0 0.0
  %4203 = vmatpush1.msra.mxu0 %v1836
  %4204 = vmatprep.subr.mxu0 0.0
  %4205 = vmatpush1.msra.mxu0 %v1837
  %4206 = vmatprep.subr.mxu0 0.0
  %4207 = vmatpush1.msra.mxu0 %v1838
  %4208 = vmatprep.mubr.f32.mxu0 %v3789
  %4209 = vmatmul.mubr.f32.gmra.mrb[0].mxu0 %v3788
  %v4210 = vpop.f32.mrb[0].mxu0
  %v4211 = vadd.f32 %v4141, %v4210
  %v4212 = vpop.f32.mrb[0].mxu0
  %4213 = vdwg.mxu0
  %4214 = vmatprep.subr.mxu0 0.0
  %4215 = vmatpush1.msra.mxu0 %v1839
  %4216 = vmatprep.subr.mxu0 0.0
  %4217 = vmatpush1.msra.mxu0 %v1840
  %4218 = vmatprep.subr.mxu0 0.0
  %4219 = vmatpush1.msra.mxu0 %v1841
  %4220 = vmatprep.subr.mxu0 0.0
  %4221 = vmatpush1.msra.mxu0 %v1842
  %4222 = vmatprep.subr.mxu0 0.0
  %4223 = vmatpush1.msra.mxu0 %v1843
  %4224 = vmatprep.subr.mxu0 0.0
  %4225 = vmatpush1.msra.mxu0 %v1844
  %4226 = vmatprep.subr.mxu0 0.0
  %4227 = vmatpush1.msra.mxu0 %v1845
  %4228 = vmatprep.subr.mxu0 0.0
  %4229 = vmatpush1.msra.mxu0 %v1846
  %4230 = vmatprep.subr.mxu0 0.0
  %4231 = vmatpush1.msra.mxu0 %v1847
  %4232 = vmatprep.subr.mxu0 0.0
  %4233 = vmatpush1.msra.mxu0 %v1848
  %4234 = vmatprep.subr.mxu0 0.0
  %4235 = vmatpush1.msra.mxu0 %v1849
  %4236 = vmatprep.subr.mxu0 0.0
  %4237 = vmatpush1.msra.mxu0 %v1850
  %4238 = vmatprep.subr.mxu0 0.0
  %4239 = vmatpush1.msra.mxu0 %v1851
  %4240 = vmatprep.subr.mxu0 0.0
  %4241 = vmatpush1.msra.mxu0 %v1852
  %4242 = vmatprep.subr.mxu0 0.0
  %4243 = vmatpush1.msra.mxu0 %v1853
  %4244 = vmatprep.subr.mxu0 0.0
  %4245 = vmatpush1.msra.mxu0 %v1854
  %4246 = vmatprep.subr.mxu0 0.0
  %4247 = vmatpush1.msra.mxu0 %v1855
  %4248 = vmatprep.subr.mxu0 0.0
  %4249 = vmatpush1.msra.mxu0 %v1856
  %4250 = vmatprep.subr.mxu0 0.0
  %4251 = vmatpush1.msra.mxu0 %v1857
  %4252 = vmatprep.subr.mxu0 0.0
  %4253 = vmatpush1.msra.mxu0 %v1858
  %4254 = vmatprep.subr.mxu0 0.0
  %4255 = vmatpush1.msra.mxu0 %v1859
  %4256 = vmatprep.subr.mxu0 0.0
  %4257 = vmatpush1.msra.mxu0 %v1860
  %4258 = vmatprep.subr.mxu0 0.0
  %4259 = vmatpush1.msra.mxu0 %v1861
  %4260 = vmatprep.subr.mxu0 0.0
  %4261 = vmatpush1.msra.mxu0 %v1862
  %4262 = vmatprep.subr.mxu0 0.0
  %4263 = vmatpush1.msra.mxu0 %v1863
  %4264 = vmatprep.subr.mxu0 0.0
  %4265 = vmatpush1.msra.mxu0 %v1864
  %4266 = vmatprep.subr.mxu0 0.0
  %4267 = vmatpush1.msra.mxu0 %v1865
  %4268 = vmatprep.subr.mxu0 0.0
  %4269 = vmatpush1.msra.mxu0 %v1866
  %4270 = vmatprep.subr.mxu0 0.0
  %4271 = vmatpush1.msra.mxu0 %v1867
  %4272 = vmatprep.subr.mxu0 0.0
  %4273 = vmatpush1.msra.mxu0 %v1868
  %4274 = vmatprep.subr.mxu0 0.0
  %4275 = vmatpush1.msra.mxu0 %v1869
  %4276 = vmatprep.subr.mxu0 0.0
  %4277 = vmatpush1.msra.mxu0 %v1870
  %4278 = vmatprep.mubr.f32.mxu0 %v3791
  %4279 = vmatmul.mubr.f32.gmra.mrb[0].mxu0 %v3790
  %v4280 = vpop.f32.mrb[0].mxu0
  %v4281 = vadd.f32 %v4211, %v4280
  %v4282 = vpop.f32.mrb[0].mxu0
  %4283 = vdwg.mxu0
  %4284 = vmatprep.subr.mxu0 0.0
  %4285 = vmatpush1.msra.mxu0 %v1871
  %4286 = vmatprep.subr.mxu0 0.0
  %4287 = vmatpush1.msra.mxu0 %v1872
  %4288 = vmatprep.subr.mxu0 0.0
  %4289 = vmatpush1.msra.mxu0 %v1873
  %4290 = vmatprep.subr.mxu0 0.0
  %4291 = vmatpush1.msra.mxu0 %v1874
  %4292 = vmatprep.subr.mxu0 0.0
  %4293 = vmatpush1.msra.mxu0 %v1875
  %4294 = vmatprep.subr.mxu0 0.0
  %4295 = vmatpush1.msra.mxu0 %v1876
  %4296 = vmatprep.subr.mxu0 0.0
  %4297 = vmatpush1.msra.mxu0 %v1877
  %4298 = vmatprep.subr.mxu0 0.0
  %4299 = vmatpush1.msra.mxu0 %v1878
  %4300 = vmatprep.subr.mxu0 0.0
  %4301 = vmatpush1.msra.mxu0 %v1879
  %4302 = vmatprep.subr.mxu0 0.0
  %4303 = vmatpush1.msra.mxu0 %v1880
  %4304 = vmatprep.subr.mxu0 0.0
  %4305 = vmatpush1.msra.mxu0 %v1881
  %4306 = vmatprep.subr.mxu0 0.0
  %4307 = vmatpush1.msra.mxu0 %v1882
  %4308 = vmatprep.subr.mxu0 0.0
  %4309 = vmatpush1.msra.mxu0 %v1883
  %4310 = vmatprep.subr.mxu0 0.0
  %4311 = vmatpush1.msra.mxu0 %v1884
  %4312 = vmatprep.subr.mxu0 0.0
  %4313 = vmatpush1.msra.mxu0 %v1885
  %4314 = vmatprep.subr.mxu0 0.0
  %4315 = vmatpush1.msra.mxu0 %v1886
  %4316 = vmatprep.subr.mxu0 0.0
  %4317 = vmatpush1.msra.mxu0 %v1887
  %4318 = vmatprep.subr.mxu0 0.0
  %4319 = vmatpush1.msra.mxu0 %v1888
  %4320 = vmatprep.subr.mxu0 0.0
  %4321 = vmatpush1.msra.mxu0 %v1889
  %4322 = vmatprep.subr.mxu0 0.0
  %4323 = vmatpush1.msra.mxu0 %v1890
  %4324 = vmatprep.subr.mxu0 0.0
  %4325 = vmatpush1.msra.mxu0 %v1891
  %4326 = vmatprep.subr.mxu0 0.0
  %4327 = vmatpush1.msra.mxu0 %v1892
  %4328 = vmatprep.subr.mxu0 0.0
  %4329 = vmatpush1.msra.mxu0 %v1893
  %4330 = vmatprep.subr.mxu0 0.0
  %4331 = vmatpush1.msra.mxu0 %v1894
  %4332 = vmatprep.subr.mxu0 0.0
  %4333 = vmatpush1.msra.mxu0 %v1895
  %4334 = vmatprep.subr.mxu0 0.0
  %4335 = vmatpush1.msra.mxu0 %v1896
  %4336 = vmatprep.subr.mxu0 0.0
  %4337 = vmatpush1.msra.mxu0 %v1897
  %4338 = vmatprep.subr.mxu0 0.0
  %4339 = vmatpush1.msra.mxu0 %v1898
  %4340 = vmatprep.subr.mxu0 0.0
  %4341 = vmatpush1.msra.mxu0 %v1899
  %4342 = vmatprep.subr.mxu0 0.0
  %4343 = vmatpush1.msra.mxu0 %v1900
  %4344 = vmatprep.subr.mxu0 0.0
  %4345 = vmatpush1.msra.mxu0 %v1901
  %4346 = vmatprep.subr.mxu0 0.0
  %4347 = vmatpush1.msra.mxu0 %v1902
  %4348 = vmatprep.mubr.f32.mxu0 %v3793
  %4349 = vmatmul.mubr.f32.gmra.mrb[0].mxu0 %v3792
  %v4350 = vpop.f32.mrb[0].mxu0
  %v4351 = vadd.f32 %v4281, %v4350
  %v4352 = vpop.f32.mrb[0].mxu0
  %4353 = vdwg.mxu0
  %v4354 = vld [vmem:[%s3] sm:$0xff]
  %v4355 = vld [vmem:[%s3 + $0x8] sm:$0xff]
  %v4356 = vld [vmem:[%s3 + $0x10] sm:$0xff]
  %v4357 = vld [vmem:[%s3 + $0x18] sm:$0xff]
  %v4358 = vld [vmem:[%s3 + $0x20] sm:$0xff]
  %v4359 = vld [vmem:[%s3 + $0x28] sm:$0xff]
  %v4360 = vld [vmem:[%s3 + $0x30] sm:$0xff]
  %v4361 = vld [vmem:[%s3 + $0x38] sm:$0xff]
  %v4362 = vld [vmem:[%s3 + $0x40] sm:$0xff]
  %v4363 = vld [vmem:[%s3 + $0x48] sm:$0xff]
  %v4364 = vld [vmem:[%s3 + $0x50] sm:$0xff]
  %v4365 = vld [vmem:[%s3 + $0x58] sm:$0xff]
  %v4366 = vld [vmem:[%s3 + $0x60] sm:$0xff]
  %v4367 = vld [vmem:[%s3 + $0x68] sm:$0xff]
  %v4368 = vld [vmem:[%s3 + $0x70] sm:$0xff]
  %v4369 = vld [vmem:[%s3 + $0x78] sm:$0xff]
  %v4370 = vld [vmem:[%s4] sm:$0x1]
  %v4372 = vlaneseq
  %v4373 = vshrl.u32 %v4372, 7
  %v4374 = vsub.s32 0, %v4373
  %v4375 = vrot.slane %v4370, %v4374
  %4377 = vmatprep.subr.mxu0 0.0
  %4378 = vmatpush1.msra.mxu0 %v4354
  %4379 = vmatprep.subr.mxu0 0.0
  %4380 = vmatpush1.msra.mxu0 %v4355
  %4381 = vmatprep.subr.mxu0 0.0
  %4382 = vmatpush1.msra.mxu0 %v4356
  %4383 = vmatprep.subr.mxu0 0.0
  %4384 = vmatpush1.msra.mxu0 %v4357
  %4385 = vmatprep.subr.mxu0 0.0
  %4386 = vmatpush1.msra.mxu0 %v4358
  %4387 = vmatprep.subr.mxu0 0.0
  %4388 = vmatpush1.msra.mxu0 %v4359
  %4389 = vmatprep.subr.mxu0 0.0
  %4390 = vmatpush1.msra.mxu0 %v4360
  %4391 = vmatprep.subr.mxu0 0.0
  %4392 = vmatpush1.msra.mxu0 %v4361
  %4393 = vmatprep.subr.mxu0 0.0
  %4394 = vmatpush1.msra.mxu0 %v4362
  %4395 = vmatprep.subr.mxu0 0.0
  %4396 = vmatpush1.msra.mxu0 %v4363
  %4397 = vmatprep.subr.mxu0 0.0
  %4398 = vmatpush1.msra.mxu0 %v4364
  %4399 = vmatprep.subr.mxu0 0.0
  %4400 = vmatpush1.msra.mxu0 %v4365
  %4401 = vmatprep.subr.mxu0 0.0
  %4402 = vmatpush1.msra.mxu0 %v4366
  %4403 = vmatprep.subr.mxu0 0.0
  %4404 = vmatpush1.msra.mxu0 %v4367
  %4405 = vmatprep.subr.mxu0 0.0
  %4406 = vmatpush1.msra.mxu0 %v4368
  %4407 = vmatprep.subr.mxu0 0.0
  %4408 = vmatpush1.msra.mxu0 %v4369
  %4409 = vmatprep.subr.mxu0 0.0
  %4410 = vmatpush1.msra.mxu0 0.0
  %4411 = vmatprep.subr.mxu0 0.0
  %4412 = vmatpush1.msra.mxu0 0.0
  %4413 = vmatprep.subr.mxu0 0.0
  %4414 = vmatpush1.msra.mxu0 0.0
  %4415 = vmatprep.subr.mxu0 0.0
  %4416 = vmatpush1.msra.mxu0 0.0
  %4417 = vmatprep.subr.mxu0 0.0
  %4418 = vmatpush1.msra.mxu0 0.0
  %4419 = vmatprep.subr.mxu0 0.0
  %4420 = vmatpush1.msra.mxu0 0.0
  %4421 = vmatprep.subr.mxu0 0.0
  %4422 = vmatpush1.msra.mxu0 0.0
  %4423 = vmatprep.subr.mxu0 0.0
  %4424 = vmatpush1.msra.mxu0 0.0
  %4425 = vmatprep.subr.mxu0 0.0
  %4426 = vmatpush1.msra.mxu0 0.0
  %4427 = vmatprep.subr.mxu0 0.0
  %4428 = vmatpush1.msra.mxu0 0.0
  %4429 = vmatprep.subr.mxu0 0.0
  %4430 = vmatpush1.msra.mxu0 0.0
  %4431 = vmatprep.subr.mxu0 0.0
  %4432 = vmatpush1.msra.mxu0 0.0
  %4433 = vmatprep.subr.mxu0 0.0
  %4434 = vmatpush1.msra.mxu0 0.0
  %4435 = vmatprep.subr.mxu0 0.0
  %4436 = vmatpush1.msra.mxu0 0.0
  %4437 = vmatprep.subr.mxu0 0.0
  %4438 = vmatpush1.msra.mxu0 0.0
  %4439 = vmatprep.subr.mxu0 0.0
  %4440 = vmatpush1.msra.mxu0 0.0
  %4441 = vmatprep.mubr.f32.mxu0 0.0
  %4442 = vmatmul.mubr.f32.gmra.mrb[0].mxu0 %v4351
  %v4443 = vpop.f32.mrb[0].mxu0
  %v4444 = vadd.f32 %v4375, %v4443
  %v4445 = vpop.f32.mrb[0].mxu0
  %4446 = vdwg.mxu0
  %4447 = vst [vmem:[%s5] sm:$0xff] %v4444
  // Predicated region
  $region22: #{fwd.1} parent=0 // pred_check
    _
  $region23: #{fwd.1} parent=0 // pred_check_branch
    %4449 = sbr.rel (0) target = $region25
  $region24: #{fwd.1} parent=0 // pred_region
    _
  $region25: #{fwd.1} parent=0 // pred_fallthru
    _
  // Predicated region
  $region26: #{fwd.1} parent=0 // pred_check
    _
  $region27: #{fwd.1} parent=0 // pred_check_branch
    %4451 = sbr.rel (0) target = $region29
  $region28: #{fwd.1} parent=0 // pred_region
    _
  $region29: #{fwd.1} parent=0 // pred_fallthru
    _
  // Predicated region
  $region30: #{fwd.1} parent=0 // pred_check
    _
  $region31: #{fwd.1} parent=0 // pred_check_branch
    %4453 = sbr.rel (0) target = $region33
  $region32: #{fwd.1} parent=0 // pred_region
    _
  $region33: #{fwd.1} parent=0 // pred_fallthru
    _
  // Predicated region
  $region34: #{fwd.1} parent=0 // pred_check
    _
  $region35: #{fwd.1} parent=0 // pred_check_branch
    %4455 = sbr.rel (0) target = $region37
  $region36: #{fwd.1} parent=0 // pred_region
    _
  $region37: #{fwd.1} parent=0 // pred_fallthru
    _
  // Predicated region
  $region38: #{fwd.1} parent=0 // pred_check
    _
  $region39: #{fwd.1} parent=0 // pred_check_branch
    %4457 = sbr.rel (0) target = $region41
  $region40: #{fwd.1} parent=0 // pred_region
    _
  $region41: #{fwd.1} parent=0 // pred_fallthru
    _
  // Predicated region
  $region42: #{fwd.1} parent=0 // pred_check
    _
  $region43: #{fwd.1} parent=0 // pred_check_branch
    %4459 = sbr.rel (0) target = $region45
  $region44: #{fwd.1} parent=0 // pred_region
    _
  $region45: #{fwd.1} parent=0 // pred_fallthru
    _

</llo_original>
